<compile_context>
chip_gen: v5e
topology: v5e:2x2
jax: 0.10.0
libtpu: 0.0.40
codegen_flags: <defaults>
</compile_context>

<pallas_src>
import functools

import jax
import jax.numpy as jnp
from jax import lax
from jax.experimental import pallas as pl
from jax.experimental.pallas import tpu as pltpu


# --------------------------------------------------------------------------
# tiling helpers
# --------------------------------------------------------------------------
def _round_up(x, m):
    return ((x + m - 1) // m) * m


def _choose_rows_tile(rows):
    """(rows_tile, rows_padded): multiple-of-8 tile, grid >= 2 when rows >= 16."""
    rows_pad = _round_up(rows, 8)
    if rows_pad < 16:
        return rows_pad, rows_pad
    cap = max(8, min(512, (rows_pad // 2) // 8 * 8))
    for cand in range(cap, 7, -8):
        if rows_pad % cand == 0:
            return cand, rows_pad
    return cap, _round_up(rows_pad, cap)


def _pick_batch_tile(B, cap=64):
    if B <= 8:
        return B, B
    b_pad = _round_up(B, 8)
    b_blk = min(cap, max(8, (b_pad // 2) // 8 * 8))
    return b_blk, _round_up(b_pad, b_blk)


def _pick_time_tile(T, cap=64):
    if T <= cap:
        return T, T
    return cap, _round_up(T, cap)


# --------------------------------------------------------------------------
# Kernel A: pixels -> layer-1 LSTM input gates in ONE K=P*patch_dim GEMM
# --------------------------------------------------------------------------
def _make_fused_gates_kernel(num_classes):
    def kernel(xp_ref, lab_ref, m2_ref, wlab_ref, bias_ref, o_ref):
        # xp_ref  : (rows_t, P*patch_dim) bf16   flattened patchified pixels
        # lab_ref : (rows_t, 1)           int32  class index (-1 => no label)
        # m2_ref  : (P*patch_dim, 4H)     bf16   embed (x) conv (x) W_ih folded
        # wlab_ref: (ncls, 4H)            f32    label rows of W_ih
        # bias_ref: (1, 4H)               f32    all biases folded
        # o_ref   : (rows_t, 4H)          f32    layer-1 input gates
        acc = jnp.dot(xp_ref[...], m2_ref[...],
                      preferred_element_type=jnp.float32)
        acc = acc + bias_ref[...]
        labs = lab_ref[...]
        for c in range(num_classes):          # tiny static unroll: VPU selects
            mask = jnp.where(labs == c, 1.0, 0.0)           # (rows_t, 1)
            acc = acc + mask * wlab_ref[c:c + 1, :]         # (rows_t, 4H)
        o_ref[...] = acc
    return kernel


def fused_input_gates(xp_flat, lab_idx, m2, w_lab, bias_total, num_classes):
    rows, kdim = xp_flat.shape
    g4 = m2.shape[-1]
    rows_t, rows_pad = _choose_rows_tile(rows)
    if rows_pad != rows:
        xp_flat = jnp.pad(xp_flat, ((0, rows_pad - rows), (0, 0)))
        lab_idx = jnp.pad(lab_idx, ((0, rows_pad - rows), (0, 0)),
                          constant_values=-1)
    out = pl.pallas_call(
        _make_fused_gates_kernel(num_classes),
        out_shape=jax.ShapeDtypeStruct((rows_pad, g4), jnp.float32),
        grid=(rows_pad // rows_t,),
        in_specs=[
            pl.BlockSpec((rows_t, kdim), lambda i: (i, 0)),
            pl.BlockSpec((rows_t, 1), lambda i: (i, 0)),
            pl.BlockSpec((kdim, g4), lambda i: (0, 0)),          # resident
            pl.BlockSpec((num_classes, g4), lambda i: (0, 0)),   # resident
            pl.BlockSpec((1, g4), lambda i: (0, 0)),             # resident
        ],
        out_specs=pl.BlockSpec((rows_t, g4), lambda i: (i, 0)),
        compiler_params=pltpu.CompilerParams(
            dimension_semantics=("parallel",),
            vmem_limit_bytes=32 * 1024 * 1024),
    )(xp_flat, lab_idx, m2, w_lab, bias_total)
    return out[:rows]


# --------------------------------------------------------------------------
# Kernel B: fused 2-layer LSTM recurrence (PyTorch gate order i, f, g, o)
# --------------------------------------------------------------------------
def _lstm_cell(gates, c_prev, h_size):
    i = jax.nn.sigmoid(gates[:, 0:h_size])
    f = jax.nn.sigmoid(gates[:, h_size:2 * h_size])
    g = jnp.tanh(gates[:, 2 * h_size:3 * h_size])
    o = jax.nn.sigmoid(gates[:, 3 * h_size:4 * h_size])
    c = f * c_prev + i * g
    h = o * jnp.tanh(c)
    return h, c


def _make_lstm_stack_kernel(t_blk, b_blk, H1, H2):
    unroll = True if t_blk <= 32 else 8

    def kernel(gx_ref, whh1_ref, wcat2_ref, b2_ref, o_ref,
               h1_ref, c1_ref, h2_ref, c2_ref):
        # gx_ref   : (t_blk, b_blk, 4H1) f32    precomputed input gates
        # whh1_ref : (H1, 4H1)           bf16
        # wcat2_ref: (H1+H2, 4H2)        bf16   [W_ih2; W_hh2] fused
        # b2_ref   : (1, 4H2)            f32
        # o_ref    : (t_blk, b_blk, H2)  f32
        @pl.when(pl.program_id(1) == 0)           # start of this batch-block's sweep
        def _():
            h1_ref[...] = jnp.zeros_like(h1_ref)
            c1_ref[...] = jnp.zeros_like(c1_ref)
            h2_ref[...] = jnp.zeros_like(h2_ref)
            c2_ref[...] = jnp.zeros_like(c2_ref)

        whh1 = whh1_ref[...]
        wcat2 = wcat2_ref[...]
        b2 = jnp.broadcast_to(b2_ref[...], (b_blk, 4 * H2))   # hoisted

        def step(t, carry):
            h1, c1, h2, c2 = carry
            g1 = gx_ref[t] + jnp.dot(h1.astype(jnp.bfloat16), whh1,
                                     preferred_element_type=jnp.float32)
            h1, c1 = _lstm_cell(g1, c1, H1)
            hcat = jnp.concatenate([h1, h2], axis=-1).astype(jnp.bfloat16)
            g2 = jnp.dot(hcat, wcat2, preferred_element_type=jnp.float32) + b2
            h2, c2 = _lstm_cell(g2, c2, H2)
            o_ref[t] = h2
            return (h1, c1, h2, c2)

        carry = (h1_ref[...], c1_ref[...], h2_ref[...], c2_ref[...])
        h1, c1, h2, c2 = lax.fori_loop(0, t_blk, step, carry, unroll=unroll)
        h1_ref[...] = h1
        c1_ref[...] = c1
        h2_ref[...] = h2
        c2_ref[...] = c2
    return kernel


def lstm_stack(gx1, whh1, wcat2, b2, hidden_dim, num_classes):
    T, B, G1 = gx1.shape
    b_blk, b_pad = _pick_batch_tile(B)
    t_blk, t_pad = _pick_time_tile(T)
    if (t_pad, b_pad) != (T, B):
        gx1 = jnp.pad(gx1, ((0, t_pad - T), (0, b_pad - B), (0, 0)))
    grid = (b_pad // b_blk, t_pad // t_blk)
    out = pl.pallas_call(
        _make_lstm_stack_kernel(t_blk, b_blk, hidden_dim, num_classes),
        out_shape=jax.ShapeDtypeStruct((t_pad, b_pad, num_classes),
                                       jnp.float32),
        grid=grid,
        in_specs=[
            pl.BlockSpec((t_blk, b_blk, G1), lambda b, t: (t, b, 0)),
            pl.BlockSpec(whh1.shape, lambda b, t: (0, 0)),
            pl.BlockSpec(wcat2.shape, lambda b, t: (0, 0)),
            pl.BlockSpec(b2.shape, lambda b, t: (0, 0)),
        ],
        out_specs=pl.BlockSpec((t_blk, b_blk, num_classes),
                               lambda b, t: (t, b, 0)),
        scratch_shapes=[pltpu.VMEM((b_blk, hidden_dim), jnp.float32),
                        pltpu.VMEM((b_blk, hidden_dim), jnp.float32),
                        pltpu.VMEM((b_blk, num_classes), jnp.float32),
                        pltpu.VMEM((b_blk, num_classes), jnp.float32)],
        compiler_params=pltpu.CompilerParams(
            dimension_semantics=("parallel", "arbitrary"),
            vmem_limit_bytes=32 * 1024 * 1024),
    )(gx1, whh1, wcat2, b2)
    return out[:T, :B]


# --------------------------------------------------------------------------
# Full forward (weight folding / layout plumbing in plain JAX)
# --------------------------------------------------------------------------
def vit_masked_encoder_with_meta_head_forward(params, input_images,
                                              input_labels, cfg):
    B, Kp1, N = input_images.shape[:3]
    C, D, W, H = input_images.shape[3:]
    pD, pW, pH = cfg["patch"]
    P = (D // pD) * (W // pW) * (H // pH)
    patch_dim = C * pD * pW * pH
    dim = cfg["dim"]
    ncls = cfg["num_classes"]
    hdim = cfg["hidden_dim"]
    cout, ksz = cfg["channels_out"], cfg["kernel_size"]
    L = dim - (ksz - 1)
    T = Kp1 * N
    rows = T * B
    g1w = 4 * hdim

    # --- time-major tubelet patchify: row index = (k*N + n)*B + b, so the
    #     gates come straight out as (T, B, 4H) with no big transpose later.
    x = jnp.transpose(input_images, (1, 2, 0, 3, 4, 5, 6))   # (K+1, N, B, ...)
    x = x.reshape(rows, C, D // pD, pD, W // pW, pW, H // pH, pH)
    x = jnp.transpose(x, (0, 2, 4, 6, 1, 3, 5, 7))
    xp_flat = x.reshape(rows, P * patch_dim).astype(jnp.bfloat16)

    # --- fold patch-embed + reducedim Conv1d + latent half of layer1.W_ih into
    #     one matrix M2 (exact: all linear).  Fold in f32, cast only at the end.
    w_ih1 = params["l1_w_ih"]                                # (4H, cout*L+ncls)
    w_lat = jnp.transpose(w_ih1[:, :cout * L])               # (cout*L, 4H)
    w_lab = jnp.transpose(w_ih1[:, cout * L:])               # (ncls, 4H)
    w_lat3 = w_lat.reshape(cout, L, g1w)
    conv_w, conv_b = params["conv_w"], params["conv_b"]      # (cout,P,k),(cout,)
    m = jnp.zeros((P, dim, g1w), jnp.float32)
    for k in range(ksz):
        m = m.at[:, k:k + L, :].add(
            jnp.einsum("oc,olg->clg", conv_w[:, :, k], w_lat3))
    m2 = jnp.einsum("ed,pdg->peg", params["embed_w"], m)     # (P,patch_dim,4H)
    m2 = m2.reshape(P * patch_dim, g1w).astype(jnp.bfloat16)
    bias_total = (params["embed_b"].reshape(-1) @ m.sum(axis=0)   # embed bias
                  + jnp.einsum("o,olg->g", conv_b, w_lat3)        # conv bias
                  + params["l1_b_ih"] + params["l1_b_hh"]         # LSTM biases
                  ).reshape(1, g1w)

    # --- labels as raw int32 indices (4 B/row instead of 2 KiB f32 gate rows);
    #     the query slot (last K+1) gets -1 => zero label contribution.
    lab = input_labels.astype(jnp.int32).at[:, -1].set(-1)
    lab_idx = jnp.transpose(lab, (1, 2, 0)).reshape(rows, 1)

    # Kernel A: pixels -> layer-1 LSTM input gates, one K=P*patch_dim GEMM.
    gates1 = fused_input_gates(xp_flat, lab_idx, m2, w_lab, bias_total, ncls)

    # Kernel B: fused two-layer LSTM recurrence (already time-major).
    gx1 = gates1.reshape(T, B, g1w)
    whh1 = jnp.transpose(params["l1_w_hh"]).astype(jnp.bfloat16)   # (H1, 4H1)
    wih2 = jnp.transpose(params["l2_w_ih"])                        # (H1, 4H2)
    whh2 = jnp.transpose(params["l2_w_hh"])                        # (H2, 4H2)
    wcat2 = jnp.concatenate([wih2, whh2], axis=0).astype(jnp.bfloat16)
    b2 = (params["l2_b_ih"] + params["l2_b_hh"]).reshape(1, 4 * ncls)
    h2 = lstm_stack(gx1, whh1, wcat2, b2, hdim, ncls)              # (T, B, ncls)

    return jnp.transpose(h2, (1, 0, 2)).reshape(B, Kp1, N, ncls)


# --------------------------------------------------------------------------
# Deterministic parameter initialization (shapes from the module __init__)
# --------------------------------------------------------------------------
def init_params(key, cfg):
    dim = cfg["dim"]
    patch_dim = cfg["patch_dim"]
    P = cfg["num_patches"]
    ncls = cfg["num_classes"]
    hdim = cfg["hidden_dim"]
    cout, ksz = cfg["channels_out"], cfg["kernel_size"]
    L = dim - (ksz - 1)
    in1 = cout * L + ncls

    ks = jax.random.split(key, 8)

    def xavier(k, shape):  # torch-style (out, in)
        limit = (6.0 / (shape[0] + shape[1])) ** 0.5
        return jax.random.uniform(k, shape, jnp.float32, -limit, limit)

    orth = jax.nn.initializers.orthogonal()
    fan = (P * ksz) ** 0.5

    return {
        # stand-in tubelet patch embedding of the external video autoencoder
        "embed_w": xavier(ks[0], (patch_dim, dim)),
        "embed_b": jnp.zeros((1, dim), jnp.float32),
        # reducedim = Conv1d(num_patches, channels_out, kernel_size)
        "conv_w": jax.random.normal(ks[1], (cout, P, ksz), jnp.float32) / fan,
        "conv_b": jax.random.normal(ks[2], (cout,), jnp.float32) / fan,
        # layer1 = LSTM(cout*L + ncls, hidden_dim): xavier W_ih, orth W_hh, 0 bias
        "l1_w_ih": xavier(ks[3], (4 * hdim, in1)),
        "l1_w_hh": orth(ks[4], (4 * hdim, hdim), jnp.float32),
        "l1_b_ih": jnp.zeros((4 * hdim,), jnp.float32),
        "l1_b_hh": jnp.zeros((4 * hdim,), jnp.float32),
        # layer2 = LSTM(hidden_dim, num_classes)
        "l2_w_ih": xavier(ks[5], (4 * ncls, hdim)),
        "l2_w_hh": orth(ks[6], (4 * ncls, ncls), jnp.float32),
        "l2_b_ih": jnp.zeros((4 * ncls,), jnp.float32),
        "l2_b_hh": jnp.zeros((4 * ncls,), jnp.float32),
    }


if __name__ == "__main__":
    # input_images: [B, K+1, N, C, D, W, H], input_labels: [B, K+1, N]
    B, Kp1, N = 2, 3, 4
    C, D, W, H = 2, 2, 8, 8
    cfg = dict(
        num_classes=N,            # == autoencoder.num_classes == N-way
        hidden_dim=128,           # module hard-codes self.hidden_dim = 128
        dim=16,                   # autoencoder latent dim per patch
        patch=(1, 4, 4),          # tubelet size (pD, pW, pH)
        channels_out=50,
        kernel_size=3,
    )
    cfg["num_patches"] = ((D // cfg["patch"][0]) * (W // cfg["patch"][1])
                          * (H // cfg["patch"][2]))          # 8
    cfg["patch_dim"] = (C * cfg["patch"][0] * cfg["patch"][1]
                        * cfg["patch"][2])                   # 32

    key = jax.random.PRNGKey(0)
    k_img, k_lbl, k_par = jax.random.split(key, 3)
    input_images = jax.random.normal(k_img, (B, Kp1, N, C, D, W, H),
                                     dtype=jnp.float32)
    input_labels = jax.random.randint(k_lbl, (B, Kp1, N), 0, N,
                                      dtype=jnp.int32)
    params = init_params(k_par, cfg)

    fwd = jax.jit(functools.partial(vit_masked_encoder_with_meta_head_forward,
                                    cfg=cfg))
    out = jax.block_until_ready(fwd(params, input_images, input_labels))

    assert out.shape == (B, Kp1, N, N), out.shape
    assert out.dtype == jnp.float32
    assert bool(jnp.all(jnp.isfinite(out)))
    print("KERNEL_OK")
</pallas_src>

<mosaic_0001>
module attributes {stable_mosaic.version = 11 : i64} {
  func.func @kernel(%arg0: i32, %arg1: memref<8x256xbf16, #tpu.memory_space<vmem>>, %arg2: memref<8x1xi32, #tpu.memory_space<vmem>>, %arg3: memref<256x512xbf16, #tpu.memory_space<vmem>>, %arg4: memref<4x512xf32, #tpu.memory_space<vmem>>, %arg5: memref<1x512xf32, #tpu.memory_space<vmem>>, %arg6: memref<8x512xf32, #tpu.memory_space<vmem>>) attributes {dimension_semantics = [#tpu.dimension_semantics<parallel>], iteration_bounds = array<i64: 3>, scalar_prefetch = 0 : i64, scratch_operands = 0 : i64, tpu.core_type = #tpu.core_type<tc>, window_params = [{transform_indices = @transform_0, window_bounds = array<i64: 8, 256>}, {transform_indices = @transform_1, window_bounds = array<i64: 8, 1>}, {pipeline_mode = #tpu.pipeline_mode<synchronous>, transform_indices = @transform_2, window_bounds = array<i64: 256, 512>}, {pipeline_mode = #tpu.pipeline_mode<synchronous>, transform_indices = @transform_3, window_bounds = array<i64: 4, 512>}, {pipeline_mode = #tpu.pipeline_mode<synchronous>, transform_indices = @transform_4, window_bounds = array<i64: 1, 512>}, {transform_indices = @transform_5, window_bounds = array<i64: 8, 512>}]} {
    %c0 = arith.constant 0 : index
    %c0_0 = arith.constant 0 : index
    %0 = vector.load %arg1[%c0, %c0_0] : memref<8x256xbf16, #tpu.memory_space<vmem>>, vector<8x256xbf16>
    %c0_1 = arith.constant 0 : index
    %c0_2 = arith.constant 0 : index
    %1 = vector.load %arg3[%c0_1, %c0_2] : memref<256x512xbf16, #tpu.memory_space<vmem>>, vector<256x512xbf16>
    %cst = arith.constant dense<0.000000e+00> : vector<8x512xf32>
    %2 = tpu.matmul %0, %1, %cst {dimension_numbers = #tpu.dot_dimension_numbers<[1], [0], [0], [1], [0, 0, 1, 1], [], []>} : vector<8x256xbf16>, vector<256x512xbf16>, vector<8x512xf32> -> vector<8x512xf32>
    %c0_3 = arith.constant 0 : index
    %c0_4 = arith.constant 0 : index
    %3 = vector.load %arg5[%c0_3, %c0_4] : memref<1x512xf32, #tpu.memory_space<vmem>>, vector<1x512xf32>
    %4 = vector.broadcast %3 : vector<1x512xf32> to vector<8x512xf32>
    %5 = arith.addf %2, %4 : vector<8x512xf32>
    %c0_5 = arith.constant 0 : index
    %c0_6 = arith.constant 0 : index
    %6 = vector.load %arg2[%c0_5, %c0_6] : memref<8x1xi32, #tpu.memory_space<vmem>>, vector<8x1xi32>
    %c0_i32 = arith.constant 0 : i32
    %7 = vector.broadcast %c0_i32 : i32 to vector<8x1xi32>
    %8 = arith.cmpi eq, %6, %7 : vector<8x1xi32>
    %cst_7 = arith.constant 1.000000e+00 : f32
    %cst_8 = arith.constant 0.000000e+00 : f32
    %9 = vector.broadcast %cst_7 : f32 to vector<8x1xf32>
    %10 = vector.broadcast %cst_8 : f32 to vector<8x1xf32>
    %11 = arith.select %8, %9, %10 : vector<8x1xi1>, vector<8x1xf32>
    %c0_9 = arith.constant 0 : index
    %c0_10 = arith.constant 0 : index
    %12 = vector.load %arg4[%c0_9, %c0_10] : memref<4x512xf32, #tpu.memory_space<vmem>>, vector<1x512xf32>
    %13 = vector.broadcast %11 : vector<8x1xf32> to vector<8x512xf32>
    %14 = vector.broadcast %12 : vector<1x512xf32> to vector<8x512xf32>
    %15 = arith.mulf %13, %14 : vector<8x512xf32>
    %16 = arith.addf %5, %15 : vector<8x512xf32>
    %c1_i32 = arith.constant 1 : i32
    %17 = vector.broadcast %c1_i32 : i32 to vector<8x1xi32>
    %18 = arith.cmpi eq, %6, %17 : vector<8x1xi32>
    %cst_11 = arith.constant 1.000000e+00 : f32
    %cst_12 = arith.constant 0.000000e+00 : f32
    %19 = vector.broadcast %cst_11 : f32 to vector<8x1xf32>
    %20 = vector.broadcast %cst_12 : f32 to vector<8x1xf32>
    %21 = arith.select %18, %19, %20 : vector<8x1xi1>, vector<8x1xf32>
    %c1 = arith.constant 1 : index
    %c0_13 = arith.constant 0 : index
    %22 = vector.load %arg4[%c1, %c0_13] : memref<4x512xf32, #tpu.memory_space<vmem>>, vector<1x512xf32>
    %23 = vector.broadcast %21 : vector<8x1xf32> to vector<8x512xf32>
    %24 = vector.broadcast %22 : vector<1x512xf32> to vector<8x512xf32>
    %25 = arith.mulf %23, %24 : vector<8x512xf32>
    %26 = arith.addf %16, %25 : vector<8x512xf32>
    %c2_i32 = arith.constant 2 : i32
    %27 = vector.broadcast %c2_i32 : i32 to vector<8x1xi32>
    %28 = arith.cmpi eq, %6, %27 : vector<8x1xi32>
    %cst_14 = arith.constant 1.000000e+00 : f32
    %cst_15 = arith.constant 0.000000e+00 : f32
    %29 = vector.broadcast %cst_14 : f32 to vector<8x1xf32>
    %30 = vector.broadcast %cst_15 : f32 to vector<8x1xf32>
    %31 = arith.select %28, %29, %30 : vector<8x1xi1>, vector<8x1xf32>
    %c2 = arith.constant 2 : index
    %c0_16 = arith.constant 0 : index
    %32 = vector.load %arg4[%c2, %c0_16] : memref<4x512xf32, #tpu.memory_space<vmem>>, vector<1x512xf32>
    %33 = vector.broadcast %31 : vector<8x1xf32> to vector<8x512xf32>
    %34 = vector.broadcast %32 : vector<1x512xf32> to vector<8x512xf32>
    %35 = arith.mulf %33, %34 : vector<8x512xf32>
    %36 = arith.addf %26, %35 : vector<8x512xf32>
    %c3_i32 = arith.constant 3 : i32
    %37 = vector.broadcast %c3_i32 : i32 to vector<8x1xi32>
    %38 = arith.cmpi eq, %6, %37 : vector<8x1xi32>
    %cst_17 = arith.constant 1.000000e+00 : f32
    %cst_18 = arith.constant 0.000000e+00 : f32
    %39 = vector.broadcast %cst_17 : f32 to vector<8x1xf32>
    %40 = vector.broadcast %cst_18 : f32 to vector<8x1xf32>
    %41 = arith.select %38, %39, %40 : vector<8x1xi1>, vector<8x1xf32>
    %c3 = arith.constant 3 : index
    %c0_19 = arith.constant 0 : index
    %42 = vector.load %arg4[%c3, %c0_19] : memref<4x512xf32, #tpu.memory_space<vmem>>, vector<1x512xf32>
    %43 = vector.broadcast %41 : vector<8x1xf32> to vector<8x512xf32>
    %44 = vector.broadcast %42 : vector<1x512xf32> to vector<8x512xf32>
    %45 = arith.mulf %43, %44 : vector<8x512xf32>
    %46 = arith.addf %36, %45 : vector<8x512xf32>
    %c0_20 = arith.constant 0 : index
    %c0_21 = arith.constant 0 : index
    %47 = vector.load %arg6[%c0_20, %c0_21] : memref<8x512xf32, #tpu.memory_space<vmem>>, vector<8x512xf32>
    tpu.vector_store %arg6[%c0_20, %c0_21], %46 {strides = array<i32>} : memref<8x512xf32, #tpu.memory_space<vmem>>, vector<8x512xf32>,
    return
  }
  func.func @transform_0(%arg0: i32) -> (i32, i32) {
    %c0_i32 = arith.constant 0 : i32
    %c0_i32_0 = arith.constant 0 : i32
    return %arg0, %c0_i32 : i32, i32
  }
  func.func @transform_1(%arg0: i32) -> (i32, i32) {
    %c0_i32 = arith.constant 0 : i32
    %c0_i32_0 = arith.constant 0 : i32
    return %arg0, %c0_i32 : i32, i32
  }
  func.func @transform_2(%arg0: i32) -> (i32, i32) {
    %c0_i32 = arith.constant 0 : i32
    %c0_i32_0 = arith.constant 0 : i32
    %c0_i32_1 = arith.constant 0 : i32
    return %c0_i32, %c0_i32_0 : i32, i32
  }
  func.func @transform_3(%arg0: i32) -> (i32, i32) {
    %c0_i32 = arith.constant 0 : i32
    %c0_i32_0 = arith.constant 0 : i32
    %c0_i32_1 = arith.constant 0 : i32
    return %c0_i32, %c0_i32_0 : i32, i32
  }
  func.func @transform_4(%arg0: i32) -> (i32, i32) {
    %c0_i32 = arith.constant 0 : i32
    %c0_i32_0 = arith.constant 0 : i32
    %c0_i32_1 = arith.constant 0 : i32
    return %c0_i32, %c0_i32_0 : i32, i32
  }
  func.func @transform_5(%arg0: i32) -> (i32, i32) {
    %c0_i32 = arith.constant 0 : i32
    %c0_i32_0 = arith.constant 0 : i32
    return %arg0, %c0_i32 : i32, i32
  }
}

module attributes {stable_mosaic.version = 11 : i64} {
  func.func @kernel(%arg0: i32, %arg1: i32, %arg2: memref<12x2x512xf32, #tpu.memory_space<vmem>>, %arg3: memref<128x512xbf16, #tpu.memory_space<vmem>>, %arg4: memref<132x16xbf16, #tpu.memory_space<vmem>>, %arg5: memref<1x16xf32, #tpu.memory_space<vmem>>, %arg6: memref<12x2x4xf32, #tpu.memory_space<vmem>>, %arg7: memref<2x128xf32, #tpu.memory_space<vmem>>, %arg8: memref<2x128xf32, #tpu.memory_space<vmem>>, %arg9: memref<2x4xf32, #tpu.memory_space<vmem>>, %arg10: memref<2x4xf32, #tpu.memory_space<vmem>>) attributes {dimension_semantics = [#tpu.dimension_semantics<parallel>, #tpu.dimension_semantics<arbitrary>], iteration_bounds = array<i64: 1, 1>, scalar_prefetch = 0 : i64, scratch_operands = 4 : i64, tpu.core_type = #tpu.core_type<tc>, window_params = [{transform_indices = @transform_0, window_bounds = array<i64: 12, 2, 512>}, {pipeline_mode = #tpu.pipeline_mode<synchronous>, transform_indices = @transform_1, window_bounds = array<i64: 128, 512>}, {pipeline_mode = #tpu.pipeline_mode<synchronous>, transform_indices = @transform_2, window_bounds = array<i64: 132, 16>}, {pipeline_mode = #tpu.pipeline_mode<synchronous>, transform_indices = @transform_3, window_bounds = array<i64: 1, 16>}, {transform_indices = @transform_4, window_bounds = array<i64: 12, 2, 4>}]} {
    %c0_i32 = arith.constant 0 : i32
    %0 = arith.cmpi eq, %arg1, %c0_i32 : i32
    %1 = arith.extui %0 : i1 to i32
    %c0_i32_0 = arith.constant 0 : i32
    %2 = arith.cmpi ne, %1, %c0_i32_0 : i32
    scf.if %2 {
      %cst_166 = arith.constant 0.000000e+00 : f32
      %784 = vector.broadcast %cst_166 : f32 to vector<2x128xf32>
      %c0_167 = arith.constant 0 : index
      %c0_168 = arith.constant 0 : index
      %785 = vector.load %arg7[%c0_167, %c0_168] : memref<2x128xf32, #tpu.memory_space<vmem>>, vector<2x128xf32>
      tpu.vector_store %arg7[%c0_167, %c0_168], %784 {strides = array<i32>} : memref<2x128xf32, #tpu.memory_space<vmem>>, vector<2x128xf32>,
      %cst_169 = arith.constant 0.000000e+00 : f32
      %786 = vector.broadcast %cst_169 : f32 to vector<2x128xf32>
      %c0_170 = arith.constant 0 : index
      %c0_171 = arith.constant 0 : index
      %787 = vector.load %arg8[%c0_170, %c0_171] : memref<2x128xf32, #tpu.memory_space<vmem>>, vector<2x128xf32>
      tpu.vector_store %arg8[%c0_170, %c0_171], %786 {strides = array<i32>} : memref<2x128xf32, #tpu.memory_space<vmem>>, vector<2x128xf32>,
      %cst_172 = arith.constant 0.000000e+00 : f32
      %788 = vector.broadcast %cst_172 : f32 to vector<2x4xf32>
      %c0_173 = arith.constant 0 : index
      %c0_174 = arith.constant 0 : index
      %789 = vector.load %arg9[%c0_173, %c0_174] : memref<2x4xf32, #tpu.memory_space<vmem>>, vector<2x4xf32>
      tpu.vector_store %arg9[%c0_173, %c0_174], %788 {strides = array<i32>} : memref<2x4xf32, #tpu.memory_space<vmem>>, vector<2x4xf32>,
      %cst_175 = arith.constant 0.000000e+00 : f32
      %790 = vector.broadcast %cst_175 : f32 to vector<2x4xf32>
      %c0_176 = arith.constant 0 : index
      %c0_177 = arith.constant 0 : index
      %791 = vector.load %arg10[%c0_176, %c0_177] : memref<2x4xf32, #tpu.memory_space<vmem>>, vector<2x4xf32>
      tpu.vector_store %arg10[%c0_176, %c0_177], %790 {strides = array<i32>} : memref<2x4xf32, #tpu.memory_space<vmem>>, vector<2x4xf32>,
    } else {
    }
    %c0 = arith.constant 0 : index
    %c0_1 = arith.constant 0 : index
    %3 = vector.load %arg3[%c0, %c0_1] : memref<128x512xbf16, #tpu.memory_space<vmem>>, vector<128x512xbf16>
    %c0_2 = arith.constant 0 : index
    %c0_3 = arith.constant 0 : index
    %4 = vector.load %arg4[%c0_2, %c0_3] : memref<132x16xbf16, #tpu.memory_space<vmem>>, vector<132x16xbf16>
    %c0_4 = arith.constant 0 : index
    %c0_5 = arith.constant 0 : index
    %5 = vector.load %arg5[%c0_4, %c0_5] : memref<1x16xf32, #tpu.memory_space<vmem>>, vector<1x16xf32>
    %6 = vector.shape_cast %5 : vector<1x16xf32> to vector<1x16xf32>
    %7 = vector.broadcast %6 : vector<1x16xf32> to vector<2x16xf32>
    %c0_6 = arith.constant 0 : index
    %c0_7 = arith.constant 0 : index
    %8 = vector.load %arg7[%c0_6, %c0_7] : memref<2x128xf32, #tpu.memory_space<vmem>>, vector<2x128xf32>
    %c0_8 = arith.constant 0 : index
    %c0_9 = arith.constant 0 : index
    %9 = vector.load %arg8[%c0_8, %c0_9] : memref<2x128xf32, #tpu.memory_space<vmem>>, vector<2x128xf32>
    %c0_10 = arith.constant 0 : index
    %c0_11 = arith.constant 0 : index
    %10 = vector.load %arg9[%c0_10, %c0_11] : memref<2x4xf32, #tpu.memory_space<vmem>>, vector<2x4xf32>
    %c0_12 = arith.constant 0 : index
    %c0_13 = arith.constant 0 : index
    %11 = vector.load %arg10[%c0_12, %c0_13] : memref<2x4xf32, #tpu.memory_space<vmem>>, vector<2x4xf32>
    %c0_i32_14 = arith.constant 0 : i32
    %12 = arith.index_cast %c0_i32_14 : i32 to index
    %c0_15 = arith.constant 0 : index
    %c0_16 = arith.constant 0 : index
    %13 = vector.load %arg2[%12, %c0_15, %c0_16] : memref<12x2x512xf32, #tpu.memory_space<vmem>>, vector<1x2x512xf32>
    %14 = vector.shape_cast %13 : vector<1x2x512xf32> to vector<2x512xf32>
    %15 = arith.truncf %8 : vector<2x128xf32> to vector<2x128xbf16>
    %cst = arith.constant dense<0.000000e+00> : vector<2x512xf32>
    %16 = tpu.matmul %15, %3, %cst {dimension_numbers = #tpu.dot_dimension_numbers<[1], [0], [0], [1], [0, 0, 1, 1], [], []>} : vector<2x128xbf16>, vector<128x512xbf16>, vector<2x512xf32> -> vector<2x512xf32>
    %17 = arith.addf %14, %16 : vector<2x512xf32>
    %18 = vector.extract_strided_slice %17 {offsets = [0, 0], sizes = [2, 128], strides = [1, 1]} : vector<2x512xf32> to vector<2x128xf32>
    %19 = arith.negf %18 : vector<2x128xf32>
    %20 = math.exp %19 : vector<2x128xf32>
    %cst_17 = arith.constant 1.000000e+00 : f32
    %21 = vector.broadcast %cst_17 : f32 to vector<2x128xf32>
    %22 = arith.addf %21, %20 : vector<2x128xf32>
    %23 = arith.divf %21, %22 : vector<2x128xf32>
    %24 = vector.extract_strided_slice %17 {offsets = [0, 128], sizes = [2, 128], strides = [1, 1]} : vector<2x512xf32> to vector<2x128xf32>
    %25 = arith.negf %24 : vector<2x128xf32>
    %26 = math.exp %25 : vector<2x128xf32>
    %cst_18 = arith.constant 1.000000e+00 : f32
    %27 = vector.broadcast %cst_18 : f32 to vector<2x128xf32>
    %28 = arith.addf %27, %26 : vector<2x128xf32>
    %29 = arith.divf %27, %28 : vector<2x128xf32>
    %30 = vector.extract_strided_slice %17 {offsets = [0, 256], sizes = [2, 128], strides = [1, 1]} : vector<2x512xf32> to vector<2x128xf32>
    %31 = math.tanh %30 : vector<2x128xf32>
    %32 = vector.extract_strided_slice %17 {offsets = [0, 384], sizes = [2, 128], strides = [1, 1]} : vector<2x512xf32> to vector<2x128xf32>
    %33 = arith.negf %32 : vector<2x128xf32>
    %34 = math.exp %33 : vector<2x128xf32>
    %cst_19 = arith.constant 1.000000e+00 : f32
    %35 = vector.broadcast %cst_19 : f32 to vector<2x128xf32>
    %36 = arith.addf %35, %34 : vector<2x128xf32>
    %37 = arith.divf %35, %36 : vector<2x128xf32>
    %38 = arith.mulf %29, %9 : vector<2x128xf32>
    %39 = arith.mulf %23, %31 : vector<2x128xf32>
    %40 = arith.addf %38, %39 : vector<2x128xf32>
    %41 = math.tanh %40 : vector<2x128xf32>
    %42 = arith.mulf %37, %41 : vector<2x128xf32>
    %43 = tpu.concatenate %42, %10 in 1 : vector<2x128xf32>, vector<2x4xf32> -> vector<2x132xf32>
    %44 = arith.truncf %43 : vector<2x132xf32> to vector<2x132xbf16>
    %cst_20 = arith.constant dense<0.000000e+00> : vector<2x16xf32>
    %45 = tpu.matmul %44, %4, %cst_20 {dimension_numbers = #tpu.dot_dimension_numbers<[1], [0], [0], [1], [0, 0, 1, 1], [], []>} : vector<2x132xbf16>, vector<132x16xbf16>, vector<2x16xf32> -> vector<2x16xf32>
    %46 = arith.addf %45, %7 : vector<2x16xf32>
    %47 = vector.extract_strided_slice %46 {offsets = [0, 0], sizes = [2, 4], strides = [1, 1]} : vector<2x16xf32> to vector<2x4xf32>
    %48 = arith.negf %47 : vector<2x4xf32>
    %49 = math.exp %48 : vector<2x4xf32>
    %cst_21 = arith.constant 1.000000e+00 : f32
    %50 = vector.broadcast %cst_21 : f32 to vector<2x4xf32>
    %51 = arith.addf %50, %49 : vector<2x4xf32>
    %52 = arith.divf %50, %51 : vector<2x4xf32>
    %53 = vector.extract_strided_slice %46 {offsets = [0, 4], sizes = [2, 4], strides = [1, 1]} : vector<2x16xf32> to vector<2x4xf32>
    %54 = arith.negf %53 : vector<2x4xf32>
    %55 = math.exp %54 : vector<2x4xf32>
    %cst_22 = arith.constant 1.000000e+00 : f32
    %56 = vector.broadcast %cst_22 : f32 to vector<2x4xf32>
    %57 = arith.addf %56, %55 : vector<2x4xf32>
    %58 = arith.divf %56, %57 : vector<2x4xf32>
    %59 = vector.extract_strided_slice %46 {offsets = [0, 8], sizes = [2, 4], strides = [1, 1]} : vector<2x16xf32> to vector<2x4xf32>
    %60 = math.tanh %59 : vector<2x4xf32>
    %61 = vector.extract_strided_slice %46 {offsets = [0, 12], sizes = [2, 4], strides = [1, 1]} : vector<2x16xf32> to vector<2x4xf32>
    %62 = arith.negf %61 : vector<2x4xf32>
    %63 = math.exp %62 : vector<2x4xf32>
    %cst_23 = arith.constant 1.000000e+00 : f32
    %64 = vector.broadcast %cst_23 : f32 to vector<2x4xf32>
    %65 = arith.addf %64, %63 : vector<2x4xf32>
    %66 = arith.divf %64, %65 : vector<2x4xf32>
    %67 = arith.mulf %58, %11 : vector<2x4xf32>
    %68 = arith.mulf %52, %60 : vector<2x4xf32>
    %69 = arith.addf %67, %68 : vector<2x4xf32>
    %70 = math.tanh %69 : vector<2x4xf32>
    %71 = arith.mulf %66, %70 : vector<2x4xf32>
    %72 = arith.index_cast %c0_i32_14 : i32 to index
    %c0_24 = arith.constant 0 : index
    %c0_25 = arith.constant 0 : index
    %73 = vector.load %arg6[%72, %c0_24, %c0_25] : memref<12x2x4xf32, #tpu.memory_space<vmem>>, vector<1x2x4xf32>
    %74 = vector.shape_cast %73 : vector<1x2x4xf32> to vector<2x4xf32>
    %75 = vector.shape_cast %71 : vector<2x4xf32> to vector<1x2x4xf32>
    tpu.vector_store %arg6[%72, %c0_24, %c0_25], %75 {strides = array<i32>} : memref<12x2x4xf32, #tpu.memory_space<vmem>>, vector<1x2x4xf32>,
    %c1_i32 = arith.constant 1 : i32
    %76 = arith.index_cast %c1_i32 : i32 to index
    %c0_26 = arith.constant 0 : index
    %c0_27 = arith.constant 0 : index
    %77 = vector.load %arg2[%76, %c0_26, %c0_27] : memref<12x2x512xf32, #tpu.memory_space<vmem>>, vector<1x2x512xf32>
    %78 = vector.shape_cast %77 : vector<1x2x512xf32> to vector<2x512xf32>
    %79 = arith.truncf %42 : vector<2x128xf32> to vector<2x128xbf16>
    %cst_28 = arith.constant dense<0.000000e+00> : vector<2x512xf32>
    %80 = tpu.matmul %79, %3, %cst_28 {dimension_numbers = #tpu.dot_dimension_numbers<[1], [0], [0], [1], [0, 0, 1, 1], [], []>} : vector<2x128xbf16>, vector<128x512xbf16>, vector<2x512xf32> -> vector<2x512xf32>
    %81 = arith.addf %78, %80 : vector<2x512xf32>
    %82 = vector.extract_strided_slice %81 {offsets = [0, 0], sizes = [2, 128], strides = [1, 1]} : vector<2x512xf32> to vector<2x128xf32>
    %83 = arith.negf %82 : vector<2x128xf32>
    %84 = math.exp %83 : vector<2x128xf32>
    %cst_29 = arith.constant 1.000000e+00 : f32
    %85 = vector.broadcast %cst_29 : f32 to vector<2x128xf32>
    %86 = arith.addf %85, %84 : vector<2x128xf32>
    %87 = arith.divf %85, %86 : vector<2x128xf32>
    %88 = vector.extract_strided_slice %81 {offsets = [0, 128], sizes = [2, 128], strides = [1, 1]} : vector<2x512xf32> to vector<2x128xf32>
    %89 = arith.negf %88 : vector<2x128xf32>
    %90 = math.exp %89 : vector<2x128xf32>
    %cst_30 = arith.constant 1.000000e+00 : f32
    %91 = vector.broadcast %cst_30 : f32 to vector<2x128xf32>
    %92 = arith.addf %91, %90 : vector<2x128xf32>
    %93 = arith.divf %91, %92 : vector<2x128xf32>
    %94 = vector.extract_strided_slice %81 {offsets = [0, 256], sizes = [2, 128], strides = [1, 1]} : vector<2x512xf32> to vector<2x128xf32>
    %95 = math.tanh %94 : vector<2x128xf32>
    %96 = vector.extract_strided_slice %81 {offsets = [0, 384], sizes = [2, 128], strides = [1, 1]} : vector<2x512xf32> to vector<2x128xf32>
    %97 = arith.negf %96 : vector<2x128xf32>
    %98 = math.exp %97 : vector<2x128xf32>
    %cst_31 = arith.constant 1.000000e+00 : f32
    %99 = vector.broadcast %cst_31 : f32 to vector<2x128xf32>
    %100 = arith.addf %99, %98 : vector<2x128xf32>
    %101 = arith.divf %99, %100 : vector<2x128xf32>
    %102 = arith.mulf %93, %40 : vector<2x128xf32>
    %103 = arith.mulf %87, %95 : vector<2x128xf32>
    %104 = arith.addf %102, %103 : vector<2x128xf32>
    %105 = math.tanh %104 : vector<2x128xf32>
    %106 = arith.mulf %101, %105 : vector<2x128xf32>
    %107 = tpu.concatenate %106, %71 in 1 : vector<2x128xf32>, vector<2x4xf32> -> vector<2x132xf32>
    %108 = arith.truncf %107 : vector<2x132xf32> to vector<2x132xbf16>
    %cst_32 = arith.constant dense<0.000000e+00> : vector<2x16xf32>
    %109 = tpu.matmul %108, %4, %cst_32 {dimension_numbers = #tpu.dot_dimension_numbers<[1], [0], [0], [1], [0, 0, 1, 1], [], []>} : vector<2x132xbf16>, vector<132x16xbf16>, vector<2x16xf32> -> vector<2x16xf32>
    %110 = arith.addf %109, %7 : vector<2x16xf32>
    %111 = vector.extract_strided_slice %110 {offsets = [0, 0], sizes = [2, 4], strides = [1, 1]} : vector<2x16xf32> to vector<2x4xf32>
    %112 = arith.negf %111 : vector<2x4xf32>
    %113 = math.exp %112 : vector<2x4xf32>
    %cst_33 = arith.constant 1.000000e+00 : f32
    %114 = vector.broadcast %cst_33 : f32 to vector<2x4xf32>
    %115 = arith.addf %114, %113 : vector<2x4xf32>
    %116 = arith.divf %114, %115 : vector<2x4xf32>
    %117 = vector.extract_strided_slice %110 {offsets = [0, 4], sizes = [2, 4], strides = [1, 1]} : vector<2x16xf32> to vector<2x4xf32>
    %118 = arith.negf %117 : vector<2x4xf32>
    %119 = math.exp %118 : vector<2x4xf32>
    %cst_34 = arith.constant 1.000000e+00 : f32
    %120 = vector.broadcast %cst_34 : f32 to vector<2x4xf32>
    %121 = arith.addf %120, %119 : vector<2x4xf32>
    %122 = arith.divf %120, %121 : vector<2x4xf32>
    %123 = vector.extract_strided_slice %110 {offsets = [0, 8], sizes = [2, 4], strides = [1, 1]} : vector<2x16xf32> to vector<2x4xf32>
    %124 = math.tanh %123 : vector<2x4xf32>
    %125 = vector.extract_strided_slice %110 {offsets = [0, 12], sizes = [2, 4], strides = [1, 1]} : vector<2x16xf32> to vector<2x4xf32>
    %126 = arith.negf %125 : vector<2x4xf32>
    %127 = math.exp %126 : vector<2x4xf32>
    %cst_35 = arith.constant 1.000000e+00 : f32
    %128 = vector.broadcast %cst_35 : f32 to vector<2x4xf32>
    %129 = arith.addf %128, %127 : vector<2x4xf32>
    %130 = arith.divf %128, %129 : vector<2x4xf32>
    %131 = arith.mulf %122, %69 : vector<2x4xf32>
    %132 = arith.mulf %116, %124 : vector<2x4xf32>
    %133 = arith.addf %131, %132 : vector<2x4xf32>
    %134 = math.tanh %133 : vector<2x4xf32>
    %135 = arith.mulf %130, %134 : vector<2x4xf32>
    %136 = arith.index_cast %c1_i32 : i32 to index
    %c0_36 = arith.constant 0 : index
    %c0_37 = arith.constant 0 : index
    %137 = vector.load %arg6[%136, %c0_36, %c0_37] : memref<12x2x4xf32, #tpu.memory_space<vmem>>, vector<1x2x4xf32>
    %138 = vector.shape_cast %137 : vector<1x2x4xf32> to vector<2x4xf32>
    %139 = vector.shape_cast %135 : vector<2x4xf32> to vector<1x2x4xf32>
    tpu.vector_store %arg6[%136, %c0_36, %c0_37], %139 {strides = array<i32>} : memref<12x2x4xf32, #tpu.memory_space<vmem>>, vector<1x2x4xf32>,
    %c2_i32 = arith.constant 2 : i32
    %140 = arith.index_cast %c2_i32 : i32 to index
    %c0_38 = arith.constant 0 : index
    %c0_39 = arith.constant 0 : index
    %141 = vector.load %arg2[%140, %c0_38, %c0_39] : memref<12x2x512xf32, #tpu.memory_space<vmem>>, vector<1x2x512xf32>
    %142 = vector.shape_cast %141 : vector<1x2x512xf32> to vector<2x512xf32>
    %143 = arith.truncf %106 : vector<2x128xf32> to vector<2x128xbf16>
    %cst_40 = arith.constant dense<0.000000e+00> : vector<2x512xf32>
    %144 = tpu.matmul %143, %3, %cst_40 {dimension_numbers = #tpu.dot_dimension_numbers<[1], [0], [0], [1], [0, 0, 1, 1], [], []>} : vector<2x128xbf16>, vector<128x512xbf16>, vector<2x512xf32> -> vector<2x512xf32>
    %145 = arith.addf %142, %144 : vector<2x512xf32>
    %146 = vector.extract_strided_slice %145 {offsets = [0, 0], sizes = [2, 128], strides = [1, 1]} : vector<2x512xf32> to vector<2x128xf32>
    %147 = arith.negf %146 : vector<2x128xf32>
    %148 = math.exp %147 : vector<2x128xf32>
    %cst_41 = arith.constant 1.000000e+00 : f32
    %149 = vector.broadcast %cst_41 : f32 to vector<2x128xf32>
    %150 = arith.addf %149, %148 : vector<2x128xf32>
    %151 = arith.divf %149, %150 : vector<2x128xf32>
    %152 = vector.extract_strided_slice %145 {offsets = [0, 128], sizes = [2, 128], strides = [1, 1]} : vector<2x512xf32> to vector<2x128xf32>
    %153 = arith.negf %152 : vector<2x128xf32>
    %154 = math.exp %153 : vector<2x128xf32>
    %cst_42 = arith.constant 1.000000e+00 : f32
    %155 = vector.broadcast %cst_42 : f32 to vector<2x128xf32>
    %156 = arith.addf %155, %154 : vector<2x128xf32>
    %157 = arith.divf %155, %156 : vector<2x128xf32>
    %158 = vector.extract_strided_slice %145 {offsets = [0, 256], sizes = [2, 128], strides = [1, 1]} : vector<2x512xf32> to vector<2x128xf32>
    %159 = math.tanh %158 : vector<2x128xf32>
    %160 = vector.extract_strided_slice %145 {offsets = [0, 384], sizes = [2, 128], strides = [1, 1]} : vector<2x512xf32> to vector<2x128xf32>
    %161 = arith.negf %160 : vector<2x128xf32>
    %162 = math.exp %161 : vector<2x128xf32>
    %cst_43 = arith.constant 1.000000e+00 : f32
    %163 = vector.broadcast %cst_43 : f32 to vector<2x128xf32>
    %164 = arith.addf %163, %162 : vector<2x128xf32>
    %165 = arith.divf %163, %164 : vector<2x128xf32>
    %166 = arith.mulf %157, %104 : vector<2x128xf32>
    %167 = arith.mulf %151, %159 : vector<2x128xf32>
    %168 = arith.addf %166, %167 : vector<2x128xf32>
    %169 = math.tanh %168 : vector<2x128xf32>
    %170 = arith.mulf %165, %169 : vector<2x128xf32>
    %171 = tpu.concatenate %170, %135 in 1 : vector<2x128xf32>, vector<2x4xf32> -> vector<2x132xf32>
    %172 = arith.truncf %171 : vector<2x132xf32> to vector<2x132xbf16>
    %cst_44 = arith.constant dense<0.000000e+00> : vector<2x16xf32>
    %173 = tpu.matmul %172, %4, %cst_44 {dimension_numbers = #tpu.dot_dimension_numbers<[1], [0], [0], [1], [0, 0, 1, 1], [], []>} : vector<2x132xbf16>, vector<132x16xbf16>, vector<2x16xf32> -> vector<2x16xf32>
    %174 = arith.addf %173, %7 : vector<2x16xf32>
    %175 = vector.extract_strided_slice %174 {offsets = [0, 0], sizes = [2, 4], strides = [1, 1]} : vector<2x16xf32> to vector<2x4xf32>
    %176 = arith.negf %175 : vector<2x4xf32>
    %177 = math.exp %176 : vector<2x4xf32>
    %cst_45 = arith.constant 1.000000e+00 : f32
    %178 = vector.broadcast %cst_45 : f32 to vector<2x4xf32>
    %179 = arith.addf %178, %177 : vector<2x4xf32>
    %180 = arith.divf %178, %179 : vector<2x4xf32>
    %181 = vector.extract_strided_slice %174 {offsets = [0, 4], sizes = [2, 4], strides = [1, 1]} : vector<2x16xf32> to vector<2x4xf32>
    %182 = arith.negf %181 : vector<2x4xf32>
    %183 = math.exp %182 : vector<2x4xf32>
    %cst_46 = arith.constant 1.000000e+00 : f32
    %184 = vector.broadcast %cst_46 : f32 to vector<2x4xf32>
    %185 = arith.addf %184, %183 : vector<2x4xf32>
    %186 = arith.divf %184, %185 : vector<2x4xf32>
    %187 = vector.extract_strided_slice %174 {offsets = [0, 8], sizes = [2, 4], strides = [1, 1]} : vector<2x16xf32> to vector<2x4xf32>
    %188 = math.tanh %187 : vector<2x4xf32>
    %189 = vector.extract_strided_slice %174 {offsets = [0, 12], sizes = [2, 4], strides = [1, 1]} : vector<2x16xf32> to vector<2x4xf32>
    %190 = arith.negf %189 : vector<2x4xf32>
    %191 = math.exp %190 : vector<2x4xf32>
    %cst_47 = arith.constant 1.000000e+00 : f32
    %192 = vector.broadcast %cst_47 : f32 to vector<2x4xf32>
    %193 = arith.addf %192, %191 : vector<2x4xf32>
    %194 = arith.divf %192, %193 : vector<2x4xf32>
    %195 = arith.mulf %186, %133 : vector<2x4xf32>
    %196 = arith.mulf %180, %188 : vector<2x4xf32>
    %197 = arith.addf %195, %196 : vector<2x4xf32>
    %198 = math.tanh %197 : vector<2x4xf32>
    %199 = arith.mulf %194, %198 : vector<2x4xf32>
    %200 = arith.index_cast %c2_i32 : i32 to index
    %c0_48 = arith.constant 0 : index
    %c0_49 = arith.constant 0 : index
    %201 = vector.load %arg6[%200, %c0_48, %c0_49] : memref<12x2x4xf32, #tpu.memory_space<vmem>>, vector<1x2x4xf32>
    %202 = vector.shape_cast %201 : vector<1x2x4xf32> to vector<2x4xf32>
    %203 = vector.shape_cast %199 : vector<2x4xf32> to vector<1x2x4xf32>
    tpu.vector_store %arg6[%200, %c0_48, %c0_49], %203 {strides = array<i32>} : memref<12x2x4xf32, #tpu.memory_space<vmem>>, vector<1x2x4xf32>,
    %c3_i32 = arith.constant 3 : i32
    %204 = arith.index_cast %c3_i32 : i32 to index
    %c0_50 = arith.constant 0 : index
    %c0_51 = arith.constant 0 : index
    %205 = vector.load %arg2[%204, %c0_50, %c0_51] : memref<12x2x512xf32, #tpu.memory_space<vmem>>, vector<1x2x512xf32>
    %206 = vector.shape_cast %205 : vector<1x2x512xf32> to vector<2x512xf32>
    %207 = arith.truncf %170 : vector<2x128xf32> to vector<2x128xbf16>
    %cst_52 = arith.constant dense<0.000000e+00> : vector<2x512xf32>
    %208 = tpu.matmul %207, %3, %cst_52 {dimension_numbers = #tpu.dot_dimension_numbers<[1], [0], [0], [1], [0, 0, 1, 1], [], []>} : vector<2x128xbf16>, vector<128x512xbf16>, vector<2x512xf32> -> vector<2x512xf32>
    %209 = arith.addf %206, %208 : vector<2x512xf32>
    %210 = vector.extract_strided_slice %209 {offsets = [0, 0], sizes = [2, 128], strides = [1, 1]} : vector<2x512xf32> to vector<2x128xf32>
    %211 = arith.negf %210 : vector<2x128xf32>
    %212 = math.exp %211 : vector<2x128xf32>
    %cst_53 = arith.constant 1.000000e+00 : f32
    %213 = vector.broadcast %cst_53 : f32 to vector<2x128xf32>
    %214 = arith.addf %213, %212 : vector<2x128xf32>
    %215 = arith.divf %213, %214 : vector<2x128xf32>
    %216 = vector.extract_strided_slice %209 {offsets = [0, 128], sizes = [2, 128], strides = [1, 1]} : vector<2x512xf32> to vector<2x128xf32>
    %217 = arith.negf %216 : vector<2x128xf32>
    %218 = math.exp %217 : vector<2x128xf32>
    %cst_54 = arith.constant 1.000000e+00 : f32
    %219 = vector.broadcast %cst_54 : f32 to vector<2x128xf32>
    %220 = arith.addf %219, %218 : vector<2x128xf32>
    %221 = arith.divf %219, %220 : vector<2x128xf32>
    %222 = vector.extract_strided_slice %209 {offsets = [0, 256], sizes = [2, 128], strides = [1, 1]} : vector<2x512xf32> to vector<2x128xf32>
    %223 = math.tanh %222 : vector<2x128xf32>
    %224 = vector.extract_strided_slice %209 {offsets = [0, 384], sizes = [2, 128], strides = [1, 1]} : vector<2x512xf32> to vector<2x128xf32>
    %225 = arith.negf %224 : vector<2x128xf32>
    %226 = math.exp %225 : vector<2x128xf32>
    %cst_55 = arith.constant 1.000000e+00 : f32
    %227 = vector.broadcast %cst_55 : f32 to vector<2x128xf32>
    %228 = arith.addf %227, %226 : vector<2x128xf32>
    %229 = arith.divf %227, %228 : vector<2x128xf32>
    %230 = arith.mulf %221, %168 : vector<2x128xf32>
    %231 = arith.mulf %215, %223 : vector<2x128xf32>
    %232 = arith.addf %230, %231 : vector<2x128xf32>
    %233 = math.tanh %232 : vector<2x128xf32>
    %234 = arith.mulf %229, %233 : vector<2x128xf32>
    %235 = tpu.concatenate %234, %199 in 1 : vector<2x128xf32>, vector<2x4xf32> -> vector<2x132xf32>
    %236 = arith.truncf %235 : vector<2x132xf32> to vector<2x132xbf16>
    %cst_56 = arith.constant dense<0.000000e+00> : vector<2x16xf32>
    %237 = tpu.matmul %236, %4, %cst_56 {dimension_numbers = #tpu.dot_dimension_numbers<[1], [0], [0], [1], [0, 0, 1, 1], [], []>} : vector<2x132xbf16>, vector<132x16xbf16>, vector<2x16xf32> -> vector<2x16xf32>
    %238 = arith.addf %237, %7 : vector<2x16xf32>
    %239 = vector.extract_strided_slice %238 {offsets = [0, 0], sizes = [2, 4], strides = [1, 1]} : vector<2x16xf32> to vector<2x4xf32>
    %240 = arith.negf %239 : vector<2x4xf32>
    %241 = math.exp %240 : vector<2x4xf32>
    %cst_57 = arith.constant 1.000000e+00 : f32
    %242 = vector.broadcast %cst_57 : f32 to vector<2x4xf32>
    %243 = arith.addf %242, %241 : vector<2x4xf32>
    %244 = arith.divf %242, %243 : vector<2x4xf32>
    %245 = vector.extract_strided_slice %238 {offsets = [0, 4], sizes = [2, 4], strides = [1, 1]} : vector<2x16xf32> to vector<2x4xf32>
    %246 = arith.negf %245 : vector<2x4xf32>
    %247 = math.exp %246 : vector<2x4xf32>
    %cst_58 = arith.constant 1.000000e+00 : f32
    %248 = vector.broadcast %cst_58 : f32 to vector<2x4xf32>
    %249 = arith.addf %248, %247 : vector<2x4xf32>
    %250 = arith.divf %248, %249 : vector<2x4xf32>
    %251 = vector.extract_strided_slice %238 {offsets = [0, 8], sizes = [2, 4], strides = [1, 1]} : vector<2x16xf32> to vector<2x4xf32>
    %252 = math.tanh %251 : vector<2x4xf32>
    %253 = vector.extract_strided_slice %238 {offsets = [0, 12], sizes = [2, 4], strides = [1, 1]} : vector<2x16xf32> to vector<2x4xf32>
    %254 = arith.negf %253 : vector<2x4xf32>
    %255 = math.exp %254 : vector<2x4xf32>
    %cst_59 = arith.constant 1.000000e+00 : f32
    %256 = vector.broadcast %cst_59 : f32 to vector<2x4xf32>
    %257 = arith.addf %256, %255 : vector<2x4xf32>
    %258 = arith.divf %256, %257 : vector<2x4xf32>
    %259 = arith.mulf %250, %197 : vector<2x4xf32>
    %260 = arith.mulf %244, %252 : vector<2x4xf32>
    %261 = arith.addf %259, %260 : vector<2x4xf32>
    %262 = math.tanh %261 : vector<2x4xf32>
    %263 = arith.mulf %258, %262 : vector<2x4xf32>
    %264 = arith.index_cast %c3_i32 : i32 to index
    %c0_60 = arith.constant 0 : index
    %c0_61 = arith.constant 0 : index
    %265 = vector.load %arg6[%264, %c0_60, %c0_61] : memref<12x2x4xf32, #tpu.memory_space<vmem>>, vector<1x2x4xf32>
    %266 = vector.shape_cast %265 : vector<1x2x4xf32> to vector<2x4xf32>
    %267 = vector.shape_cast %263 : vector<2x4xf32> to vector<1x2x4xf32>
    tpu.vector_store %arg6[%264, %c0_60, %c0_61], %267 {strides = array<i32>} : memref<12x2x4xf32, #tpu.memory_space<vmem>>, vector<1x2x4xf32>,
    %c4_i32 = arith.constant 4 : i32
    %268 = arith.index_cast %c4_i32 : i32 to index
    %c0_62 = arith.constant 0 : index
    %c0_63 = arith.constant 0 : index
    %269 = vector.load %arg2[%268, %c0_62, %c0_63] : memref<12x2x512xf32, #tpu.memory_space<vmem>>, vector<1x2x512xf32>
    %270 = vector.shape_cast %269 : vector<1x2x512xf32> to vector<2x512xf32>
    %271 = arith.truncf %234 : vector<2x128xf32> to vector<2x128xbf16>
    %cst_64 = arith.constant dense<0.000000e+00> : vector<2x512xf32>
    %272 = tpu.matmul %271, %3, %cst_64 {dimension_numbers = #tpu.dot_dimension_numbers<[1], [0], [0], [1], [0, 0, 1, 1], [], []>} : vector<2x128xbf16>, vector<128x512xbf16>, vector<2x512xf32> -> vector<2x512xf32>
    %273 = arith.addf %270, %272 : vector<2x512xf32>
    %274 = vector.extract_strided_slice %273 {offsets = [0, 0], sizes = [2, 128], strides = [1, 1]} : vector<2x512xf32> to vector<2x128xf32>
    %275 = arith.negf %274 : vector<2x128xf32>
    %276 = math.exp %275 : vector<2x128xf32>
    %cst_65 = arith.constant 1.000000e+00 : f32
    %277 = vector.broadcast %cst_65 : f32 to vector<2x128xf32>
    %278 = arith.addf %277, %276 : vector<2x128xf32>
    %279 = arith.divf %277, %278 : vector<2x128xf32>
    %280 = vector.extract_strided_slice %273 {offsets = [0, 128], sizes = [2, 128], strides = [1, 1]} : vector<2x512xf32> to vector<2x128xf32>
    %281 = arith.negf %280 : vector<2x128xf32>
    %282 = math.exp %281 : vector<2x128xf32>
    %cst_66 = arith.constant 1.000000e+00 : f32
    %283 = vector.broadcast %cst_66 : f32 to vector<2x128xf32>
    %284 = arith.addf %283, %282 : vector<2x128xf32>
    %285 = arith.divf %283, %284 : vector<2x128xf32>
    %286 = vector.extract_strided_slice %273 {offsets = [0, 256], sizes = [2, 128], strides = [1, 1]} : vector<2x512xf32> to vector<2x128xf32>
    %287 = math.tanh %286 : vector<2x128xf32>
    %288 = vector.extract_strided_slice %273 {offsets = [0, 384], sizes = [2, 128], strides = [1, 1]} : vector<2x512xf32> to vector<2x128xf32>
    %289 = arith.negf %288 : vector<2x128xf32>
    %290 = math.exp %289 : vector<2x128xf32>
    %cst_67 = arith.constant 1.000000e+00 : f32
    %291 = vector.broadcast %cst_67 : f32 to vector<2x128xf32>
    %292 = arith.addf %291, %290 : vector<2x128xf32>
    %293 = arith.divf %291, %292 : vector<2x128xf32>
    %294 = arith.mulf %285, %232 : vector<2x128xf32>
    %295 = arith.mulf %279, %287 : vector<2x128xf32>
    %296 = arith.addf %294, %295 : vector<2x128xf32>
    %297 = math.tanh %296 : vector<2x128xf32>
    %298 = arith.mulf %293, %297 : vector<2x128xf32>
    %299 = tpu.concatenate %298, %263 in 1 : vector<2x128xf32>, vector<2x4xf32> -> vector<2x132xf32>
    %300 = arith.truncf %299 : vector<2x132xf32> to vector<2x132xbf16>
    %cst_68 = arith.constant dense<0.000000e+00> : vector<2x16xf32>
    %301 = tpu.matmul %300, %4, %cst_68 {dimension_numbers = #tpu.dot_dimension_numbers<[1], [0], [0], [1], [0, 0, 1, 1], [], []>} : vector<2x132xbf16>, vector<132x16xbf16>, vector<2x16xf32> -> vector<2x16xf32>
    %302 = arith.addf %301, %7 : vector<2x16xf32>
    %303 = vector.extract_strided_slice %302 {offsets = [0, 0], sizes = [2, 4], strides = [1, 1]} : vector<2x16xf32> to vector<2x4xf32>
    %304 = arith.negf %303 : vector<2x4xf32>
    %305 = math.exp %304 : vector<2x4xf32>
    %cst_69 = arith.constant 1.000000e+00 : f32
    %306 = vector.broadcast %cst_69 : f32 to vector<2x4xf32>
    %307 = arith.addf %306, %305 : vector<2x4xf32>
    %308 = arith.divf %306, %307 : vector<2x4xf32>
    %309 = vector.extract_strided_slice %302 {offsets = [0, 4], sizes = [2, 4], strides = [1, 1]} : vector<2x16xf32> to vector<2x4xf32>
    %310 = arith.negf %309 : vector<2x4xf32>
    %311 = math.exp %310 : vector<2x4xf32>
    %cst_70 = arith.constant 1.000000e+00 : f32
    %312 = vector.broadcast %cst_70 : f32 to vector<2x4xf32>
    %313 = arith.addf %312, %311 : vector<2x4xf32>
    %314 = arith.divf %312, %313 : vector<2x4xf32>
    %315 = vector.extract_strided_slice %302 {offsets = [0, 8], sizes = [2, 4], strides = [1, 1]} : vector<2x16xf32> to vector<2x4xf32>
    %316 = math.tanh %315 : vector<2x4xf32>
    %317 = vector.extract_strided_slice %302 {offsets = [0, 12], sizes = [2, 4], strides = [1, 1]} : vector<2x16xf32> to vector<2x4xf32>
    %318 = arith.negf %317 : vector<2x4xf32>
    %319 = math.exp %318 : vector<2x4xf32>
    %cst_71 = arith.constant 1.000000e+00 : f32
    %320 = vector.broadcast %cst_71 : f32 to vector<2x4xf32>
    %321 = arith.addf %320, %319 : vector<2x4xf32>
    %322 = arith.divf %320, %321 : vector<2x4xf32>
    %323 = arith.mulf %314, %261 : vector<2x4xf32>
    %324 = arith.mulf %308, %316 : vector<2x4xf32>
    %325 = arith.addf %323, %324 : vector<2x4xf32>
    %326 = math.tanh %325 : vector<2x4xf32>
    %327 = arith.mulf %322, %326 : vector<2x4xf32>
    %328 = arith.index_cast %c4_i32 : i32 to index
    %c0_72 = arith.constant 0 : index
    %c0_73 = arith.constant 0 : index
    %329 = vector.load %arg6[%328, %c0_72, %c0_73] : memref<12x2x4xf32, #tpu.memory_space<vmem>>, vector<1x2x4xf32>
    %330 = vector.shape_cast %329 : vector<1x2x4xf32> to vector<2x4xf32>
    %331 = vector.shape_cast %327 : vector<2x4xf32> to vector<1x2x4xf32>
    tpu.vector_store %arg6[%328, %c0_72, %c0_73], %331 {strides = array<i32>} : memref<12x2x4xf32, #tpu.memory_space<vmem>>, vector<1x2x4xf32>,
    %c5_i32 = arith.constant 5 : i32
    %332 = arith.index_cast %c5_i32 : i32 to index
    %c0_74 = arith.constant 0 : index
    %c0_75 = arith.constant 0 : index
    %333 = vector.load %arg2[%332, %c0_74, %c0_75] : memref<12x2x512xf32, #tpu.memory_space<vmem>>, vector<1x2x512xf32>
    %334 = vector.shape_cast %333 : vector<1x2x512xf32> to vector<2x512xf32>
    %335 = arith.truncf %298 : vector<2x128xf32> to vector<2x128xbf16>
    %cst_76 = arith.constant dense<0.000000e+00> : vector<2x512xf32>
    %336 = tpu.matmul %335, %3, %cst_76 {dimension_numbers = #tpu.dot_dimension_numbers<[1], [0], [0], [1], [0, 0, 1, 1], [], []>} : vector<2x128xbf16>, vector<128x512xbf16>, vector<2x512xf32> -> vector<2x512xf32>
    %337 = arith.addf %334, %336 : vector<2x512xf32>
    %338 = vector.extract_strided_slice %337 {offsets = [0, 0], sizes = [2, 128], strides = [1, 1]} : vector<2x512xf32> to vector<2x128xf32>
    %339 = arith.negf %338 : vector<2x128xf32>
    %340 = math.exp %339 : vector<2x128xf32>
    %cst_77 = arith.constant 1.000000e+00 : f32
    %341 = vector.broadcast %cst_77 : f32 to vector<2x128xf32>
    %342 = arith.addf %341, %340 : vector<2x128xf32>
    %343 = arith.divf %341, %342 : vector<2x128xf32>
    %344 = vector.extract_strided_slice %337 {offsets = [0, 128], sizes = [2, 128], strides = [1, 1]} : vector<2x512xf32> to vector<2x128xf32>
    %345 = arith.negf %344 : vector<2x128xf32>
    %346 = math.exp %345 : vector<2x128xf32>
    %cst_78 = arith.constant 1.000000e+00 : f32
    %347 = vector.broadcast %cst_78 : f32 to vector<2x128xf32>
    %348 = arith.addf %347, %346 : vector<2x128xf32>
    %349 = arith.divf %347, %348 : vector<2x128xf32>
    %350 = vector.extract_strided_slice %337 {offsets = [0, 256], sizes = [2, 128], strides = [1, 1]} : vector<2x512xf32> to vector<2x128xf32>
    %351 = math.tanh %350 : vector<2x128xf32>
    %352 = vector.extract_strided_slice %337 {offsets = [0, 384], sizes = [2, 128], strides = [1, 1]} : vector<2x512xf32> to vector<2x128xf32>
    %353 = arith.negf %352 : vector<2x128xf32>
    %354 = math.exp %353 : vector<2x128xf32>
    %cst_79 = arith.constant 1.000000e+00 : f32
    %355 = vector.broadcast %cst_79 : f32 to vector<2x128xf32>
    %356 = arith.addf %355, %354 : vector<2x128xf32>
    %357 = arith.divf %355, %356 : vector<2x128xf32>
    %358 = arith.mulf %349, %296 : vector<2x128xf32>
    %359 = arith.mulf %343, %351 : vector<2x128xf32>
    %360 = arith.addf %358, %359 : vector<2x128xf32>
    %361 = math.tanh %360 : vector<2x128xf32>
    %362 = arith.mulf %357, %361 : vector<2x128xf32>
    %363 = tpu.concatenate %362, %327 in 1 : vector<2x128xf32>, vector<2x4xf32> -> vector<2x132xf32>
    %364 = arith.truncf %363 : vector<2x132xf32> to vector<2x132xbf16>
    %cst_80 = arith.constant dense<0.000000e+00> : vector<2x16xf32>
    %365 = tpu.matmul %364, %4, %cst_80 {dimension_numbers = #tpu.dot_dimension_numbers<[1], [0], [0], [1], [0, 0, 1, 1], [], []>} : vector<2x132xbf16>, vector<132x16xbf16>, vector<2x16xf32> -> vector<2x16xf32>
    %366 = arith.addf %365, %7 : vector<2x16xf32>
    %367 = vector.extract_strided_slice %366 {offsets = [0, 0], sizes = [2, 4], strides = [1, 1]} : vector<2x16xf32> to vector<2x4xf32>
    %368 = arith.negf %367 : vector<2x4xf32>
    %369 = math.exp %368 : vector<2x4xf32>
    %cst_81 = arith.constant 1.000000e+00 : f32
    %370 = vector.broadcast %cst_81 : f32 to vector<2x4xf32>
    %371 = arith.addf %370, %369 : vector<2x4xf32>
    %372 = arith.divf %370, %371 : vector<2x4xf32>
    %373 = vector.extract_strided_slice %366 {offsets = [0, 4], sizes = [2, 4], strides = [1, 1]} : vector<2x16xf32> to vector<2x4xf32>
    %374 = arith.negf %373 : vector<2x4xf32>
    %375 = math.exp %374 : vector<2x4xf32>
    %cst_82 = arith.constant 1.000000e+00 : f32
    %376 = vector.broadcast %cst_82 : f32 to vector<2x4xf32>
    %377 = arith.addf %376, %375 : vector<2x4xf32>
    %378 = arith.divf %376, %377 : vector<2x4xf32>
    %379 = vector.extract_strided_slice %366 {offsets = [0, 8], sizes = [2, 4], strides = [1, 1]} : vector<2x16xf32> to vector<2x4xf32>
    %380 = math.tanh %379 : vector<2x4xf32>
    %381 = vector.extract_strided_slice %366 {offsets = [0, 12], sizes = [2, 4], strides = [1, 1]} : vector<2x16xf32> to vector<2x4xf32>
    %382 = arith.negf %381 : vector<2x4xf32>
    %383 = math.exp %382 : vector<2x4xf32>
    %cst_83 = arith.constant 1.000000e+00 : f32
    %384 = vector.broadcast %cst_83 : f32 to vector<2x4xf32>
    %385 = arith.addf %384, %383 : vector<2x4xf32>
    %386 = arith.divf %384, %385 : vector<2x4xf32>
    %387 = arith.mulf %378, %325 : vector<2x4xf32>
    %388 = arith.mulf %372, %380 : vector<2x4xf32>
    %389 = arith.addf %387, %388 : vector<2x4xf32>
    %390 = math.tanh %389 : vector<2x4xf32>
    %391 = arith.mulf %386, %390 : vector<2x4xf32>
    %392 = arith.index_cast %c5_i32 : i32 to index
    %c0_84 = arith.constant 0 : index
    %c0_85 = arith.constant 0 : index
    %393 = vector.load %arg6[%392, %c0_84, %c0_85] : memref<12x2x4xf32, #tpu.memory_space<vmem>>, vector<1x2x4xf32>
    %394 = vector.shape_cast %393 : vector<1x2x4xf32> to vector<2x4xf32>
    %395 = vector.shape_cast %391 : vector<2x4xf32> to vector<1x2x4xf32>
    tpu.vector_store %arg6[%392, %c0_84, %c0_85], %395 {strides = array<i32>} : memref<12x2x4xf32, #tpu.memory_space<vmem>>, vector<1x2x4xf32>,
    %c6_i32 = arith.constant 6 : i32
    %396 = arith.index_cast %c6_i32 : i32 to index
    %c0_86 = arith.constant 0 : index
    %c0_87 = arith.constant 0 : index
    %397 = vector.load %arg2[%396, %c0_86, %c0_87] : memref<12x2x512xf32, #tpu.memory_space<vmem>>, vector<1x2x512xf32>
    %398 = vector.shape_cast %397 : vector<1x2x512xf32> to vector<2x512xf32>
    %399 = arith.truncf %362 : vector<2x128xf32> to vector<2x128xbf16>
    %cst_88 = arith.constant dense<0.000000e+00> : vector<2x512xf32>
    %400 = tpu.matmul %399, %3, %cst_88 {dimension_numbers = #tpu.dot_dimension_numbers<[1], [0], [0], [1], [0, 0, 1, 1], [], []>} : vector<2x128xbf16>, vector<128x512xbf16>, vector<2x512xf32> -> vector<2x512xf32>
    %401 = arith.addf %398, %400 : vector<2x512xf32>
    %402 = vector.extract_strided_slice %401 {offsets = [0, 0], sizes = [2, 128], strides = [1, 1]} : vector<2x512xf32> to vector<2x128xf32>
    %403 = arith.negf %402 : vector<2x128xf32>
    %404 = math.exp %403 : vector<2x128xf32>
    %cst_89 = arith.constant 1.000000e+00 : f32
    %405 = vector.broadcast %cst_89 : f32 to vector<2x128xf32>
    %406 = arith.addf %405, %404 : vector<2x128xf32>
    %407 = arith.divf %405, %406 : vector<2x128xf32>
    %408 = vector.extract_strided_slice %401 {offsets = [0, 128], sizes = [2, 128], strides = [1, 1]} : vector<2x512xf32> to vector<2x128xf32>
    %409 = arith.negf %408 : vector<2x128xf32>
    %410 = math.exp %409 : vector<2x128xf32>
    %cst_90 = arith.constant 1.000000e+00 : f32
    %411 = vector.broadcast %cst_90 : f32 to vector<2x128xf32>
    %412 = arith.addf %411, %410 : vector<2x128xf32>
    %413 = arith.divf %411, %412 : vector<2x128xf32>
    %414 = vector.extract_strided_slice %401 {offsets = [0, 256], sizes = [2, 128], strides = [1, 1]} : vector<2x512xf32> to vector<2x128xf32>
    %415 = math.tanh %414 : vector<2x128xf32>
    %416 = vector.extract_strided_slice %401 {offsets = [0, 384], sizes = [2, 128], strides = [1, 1]} : vector<2x512xf32> to vector<2x128xf32>
    %417 = arith.negf %416 : vector<2x128xf32>
    %418 = math.exp %417 : vector<2x128xf32>
    %cst_91 = arith.constant 1.000000e+00 : f32
    %419 = vector.broadcast %cst_91 : f32 to vector<2x128xf32>
    %420 = arith.addf %419, %418 : vector<2x128xf32>
    %421 = arith.divf %419, %420 : vector<2x128xf32>
    %422 = arith.mulf %413, %360 : vector<2x128xf32>
    %423 = arith.mulf %407, %415 : vector<2x128xf32>
    %424 = arith.addf %422, %423 : vector<2x128xf32>
    %425 = math.tanh %424 : vector<2x128xf32>
    %426 = arith.mulf %421, %425 : vector<2x128xf32>
    %427 = tpu.concatenate %426, %391 in 1 : vector<2x128xf32>, vector<2x4xf32> -> vector<2x132xf32>
    %428 = arith.truncf %427 : vector<2x132xf32> to vector<2x132xbf16>
    %cst_92 = arith.constant dense<0.000000e+00> : vector<2x16xf32>
    %429 = tpu.matmul %428, %4, %cst_92 {dimension_numbers = #tpu.dot_dimension_numbers<[1], [0], [0], [1], [0, 0, 1, 1], [], []>} : vector<2x132xbf16>, vector<132x16xbf16>, vector<2x16xf32> -> vector<2x16xf32>
    %430 = arith.addf %429, %7 : vector<2x16xf32>
    %431 = vector.extract_strided_slice %430 {offsets = [0, 0], sizes = [2, 4], strides = [1, 1]} : vector<2x16xf32> to vector<2x4xf32>
    %432 = arith.negf %431 : vector<2x4xf32>
    %433 = math.exp %432 : vector<2x4xf32>
    %cst_93 = arith.constant 1.000000e+00 : f32
    %434 = vector.broadcast %cst_93 : f32 to vector<2x4xf32>
    %435 = arith.addf %434, %433 : vector<2x4xf32>
    %436 = arith.divf %434, %435 : vector<2x4xf32>
    %437 = vector.extract_strided_slice %430 {offsets = [0, 4], sizes = [2, 4], strides = [1, 1]} : vector<2x16xf32> to vector<2x4xf32>
    %438 = arith.negf %437 : vector<2x4xf32>
    %439 = math.exp %438 : vector<2x4xf32>
    %cst_94 = arith.constant 1.000000e+00 : f32
    %440 = vector.broadcast %cst_94 : f32 to vector<2x4xf32>
    %441 = arith.addf %440, %439 : vector<2x4xf32>
    %442 = arith.divf %440, %441 : vector<2x4xf32>
    %443 = vector.extract_strided_slice %430 {offsets = [0, 8], sizes = [2, 4], strides = [1, 1]} : vector<2x16xf32> to vector<2x4xf32>
    %444 = math.tanh %443 : vector<2x4xf32>
    %445 = vector.extract_strided_slice %430 {offsets = [0, 12], sizes = [2, 4], strides = [1, 1]} : vector<2x16xf32> to vector<2x4xf32>
    %446 = arith.negf %445 : vector<2x4xf32>
    %447 = math.exp %446 : vector<2x4xf32>
    %cst_95 = arith.constant 1.000000e+00 : f32
    %448 = vector.broadcast %cst_95 : f32 to vector<2x4xf32>
    %449 = arith.addf %448, %447 : vector<2x4xf32>
    %450 = arith.divf %448, %449 : vector<2x4xf32>
    %451 = arith.mulf %442, %389 : vector<2x4xf32>
    %452 = arith.mulf %436, %444 : vector<2x4xf32>
    %453 = arith.addf %451, %452 : vector<2x4xf32>
    %454 = math.tanh %453 : vector<2x4xf32>
    %455 = arith.mulf %450, %454 : vector<2x4xf32>
    %456 = arith.index_cast %c6_i32 : i32 to index
    %c0_96 = arith.constant 0 : index
    %c0_97 = arith.constant 0 : index
    %457 = vector.load %arg6[%456, %c0_96, %c0_97] : memref<12x2x4xf32, #tpu.memory_space<vmem>>, vector<1x2x4xf32>
    %458 = vector.shape_cast %457 : vector<1x2x4xf32> to vector<2x4xf32>
    %459 = vector.shape_cast %455 : vector<2x4xf32> to vector<1x2x4xf32>
    tpu.vector_store %arg6[%456, %c0_96, %c0_97], %459 {strides = array<i32>} : memref<12x2x4xf32, #tpu.memory_space<vmem>>, vector<1x2x4xf32>,
    %c7_i32 = arith.constant 7 : i32
    %460 = arith.index_cast %c7_i32 : i32 to index
    %c0_98 = arith.constant 0 : index
    %c0_99 = arith.constant 0 : index
    %461 = vector.load %arg2[%460, %c0_98, %c0_99] : memref<12x2x512xf32, #tpu.memory_space<vmem>>, vector<1x2x512xf32>
    %462 = vector.shape_cast %461 : vector<1x2x512xf32> to vector<2x512xf32>
    %463 = arith.truncf %426 : vector<2x128xf32> to vector<2x128xbf16>
    %cst_100 = arith.constant dense<0.000000e+00> : vector<2x512xf32>
    %464 = tpu.matmul %463, %3, %cst_100 {dimension_numbers = #tpu.dot_dimension_numbers<[1], [0], [0], [1], [0, 0, 1, 1], [], []>} : vector<2x128xbf16>, vector<128x512xbf16>, vector<2x512xf32> -> vector<2x512xf32>
    %465 = arith.addf %462, %464 : vector<2x512xf32>
    %466 = vector.extract_strided_slice %465 {offsets = [0, 0], sizes = [2, 128], strides = [1, 1]} : vector<2x512xf32> to vector<2x128xf32>
    %467 = arith.negf %466 : vector<2x128xf32>
    %468 = math.exp %467 : vector<2x128xf32>
    %cst_101 = arith.constant 1.000000e+00 : f32
    %469 = vector.broadcast %cst_101 : f32 to vector<2x128xf32>
    %470 = arith.addf %469, %468 : vector<2x128xf32>
    %471 = arith.divf %469, %470 : vector<2x128xf32>
    %472 = vector.extract_strided_slice %465 {offsets = [0, 128], sizes = [2, 128], strides = [1, 1]} : vector<2x512xf32> to vector<2x128xf32>
    %473 = arith.negf %472 : vector<2x128xf32>
    %474 = math.exp %473 : vector<2x128xf32>
    %cst_102 = arith.constant 1.000000e+00 : f32
    %475 = vector.broadcast %cst_102 : f32 to vector<2x128xf32>
    %476 = arith.addf %475, %474 : vector<2x128xf32>
    %477 = arith.divf %475, %476 : vector<2x128xf32>
    %478 = vector.extract_strided_slice %465 {offsets = [0, 256], sizes = [2, 128], strides = [1, 1]} : vector<2x512xf32> to vector<2x128xf32>
    %479 = math.tanh %478 : vector<2x128xf32>
    %480 = vector.extract_strided_slice %465 {offsets = [0, 384], sizes = [2, 128], strides = [1, 1]} : vector<2x512xf32> to vector<2x128xf32>
    %481 = arith.negf %480 : vector<2x128xf32>
    %482 = math.exp %481 : vector<2x128xf32>
    %cst_103 = arith.constant 1.000000e+00 : f32
    %483 = vector.broadcast %cst_103 : f32 to vector<2x128xf32>
    %484 = arith.addf %483, %482 : vector<2x128xf32>
    %485 = arith.divf %483, %484 : vector<2x128xf32>
    %486 = arith.mulf %477, %424 : vector<2x128xf32>
    %487 = arith.mulf %471, %479 : vector<2x128xf32>
    %488 = arith.addf %486, %487 : vector<2x128xf32>
    %489 = math.tanh %488 : vector<2x128xf32>
    %490 = arith.mulf %485, %489 : vector<2x128xf32>
    %491 = tpu.concatenate %490, %455 in 1 : vector<2x128xf32>, vector<2x4xf32> -> vector<2x132xf32>
    %492 = arith.truncf %491 : vector<2x132xf32> to vector<2x132xbf16>
    %cst_104 = arith.constant dense<0.000000e+00> : vector<2x16xf32>
    %493 = tpu.matmul %492, %4, %cst_104 {dimension_numbers = #tpu.dot_dimension_numbers<[1], [0], [0], [1], [0, 0, 1, 1], [], []>} : vector<2x132xbf16>, vector<132x16xbf16>, vector<2x16xf32> -> vector<2x16xf32>
    %494 = arith.addf %493, %7 : vector<2x16xf32>
    %495 = vector.extract_strided_slice %494 {offsets = [0, 0], sizes = [2, 4], strides = [1, 1]} : vector<2x16xf32> to vector<2x4xf32>
    %496 = arith.negf %495 : vector<2x4xf32>
    %497 = math.exp %496 : vector<2x4xf32>
    %cst_105 = arith.constant 1.000000e+00 : f32
    %498 = vector.broadcast %cst_105 : f32 to vector<2x4xf32>
    %499 = arith.addf %498, %497 : vector<2x4xf32>
    %500 = arith.divf %498, %499 : vector<2x4xf32>
    %501 = vector.extract_strided_slice %494 {offsets = [0, 4], sizes = [2, 4], strides = [1, 1]} : vector<2x16xf32> to vector<2x4xf32>
    %502 = arith.negf %501 : vector<2x4xf32>
    %503 = math.exp %502 : vector<2x4xf32>
    %cst_106 = arith.constant 1.000000e+00 : f32
    %504 = vector.broadcast %cst_106 : f32 to vector<2x4xf32>
    %505 = arith.addf %504, %503 : vector<2x4xf32>
    %506 = arith.divf %504, %505 : vector<2x4xf32>
    %507 = vector.extract_strided_slice %494 {offsets = [0, 8], sizes = [2, 4], strides = [1, 1]} : vector<2x16xf32> to vector<2x4xf32>
    %508 = math.tanh %507 : vector<2x4xf32>
    %509 = vector.extract_strided_slice %494 {offsets = [0, 12], sizes = [2, 4], strides = [1, 1]} : vector<2x16xf32> to vector<2x4xf32>
    %510 = arith.negf %509 : vector<2x4xf32>
    %511 = math.exp %510 : vector<2x4xf32>
    %cst_107 = arith.constant 1.000000e+00 : f32
    %512 = vector.broadcast %cst_107 : f32 to vector<2x4xf32>
    %513 = arith.addf %512, %511 : vector<2x4xf32>
    %514 = arith.divf %512, %513 : vector<2x4xf32>
    %515 = arith.mulf %506, %453 : vector<2x4xf32>
    %516 = arith.mulf %500, %508 : vector<2x4xf32>
    %517 = arith.addf %515, %516 : vector<2x4xf32>
    %518 = math.tanh %517 : vector<2x4xf32>
    %519 = arith.mulf %514, %518 : vector<2x4xf32>
    %520 = arith.index_cast %c7_i32 : i32 to index
    %c0_108 = arith.constant 0 : index
    %c0_109 = arith.constant 0 : index
    %521 = vector.load %arg6[%520, %c0_108, %c0_109] : memref<12x2x4xf32, #tpu.memory_space<vmem>>, vector<1x2x4xf32>
    %522 = vector.shape_cast %521 : vector<1x2x4xf32> to vector<2x4xf32>
    %523 = vector.shape_cast %519 : vector<2x4xf32> to vector<1x2x4xf32>
    tpu.vector_store %arg6[%520, %c0_108, %c0_109], %523 {strides = array<i32>} : memref<12x2x4xf32, #tpu.memory_space<vmem>>, vector<1x2x4xf32>,
    %c8_i32 = arith.constant 8 : i32
    %524 = arith.index_cast %c8_i32 : i32 to index
    %c0_110 = arith.constant 0 : index
    %c0_111 = arith.constant 0 : index
    %525 = vector.load %arg2[%524, %c0_110, %c0_111] : memref<12x2x512xf32, #tpu.memory_space<vmem>>, vector<1x2x512xf32>
    %526 = vector.shape_cast %525 : vector<1x2x512xf32> to vector<2x512xf32>
    %527 = arith.truncf %490 : vector<2x128xf32> to vector<2x128xbf16>
    %cst_112 = arith.constant dense<0.000000e+00> : vector<2x512xf32>
    %528 = tpu.matmul %527, %3, %cst_112 {dimension_numbers = #tpu.dot_dimension_numbers<[1], [0], [0], [1], [0, 0, 1, 1], [], []>} : vector<2x128xbf16>, vector<128x512xbf16>, vector<2x512xf32> -> vector<2x512xf32>
    %529 = arith.addf %526, %528 : vector<2x512xf32>
    %530 = vector.extract_strided_slice %529 {offsets = [0, 0], sizes = [2, 128], strides = [1, 1]} : vector<2x512xf32> to vector<2x128xf32>
    %531 = arith.negf %530 : vector<2x128xf32>
    %532 = math.exp %531 : vector<2x128xf32>
    %cst_113 = arith.constant 1.000000e+00 : f32
    %533 = vector.broadcast %cst_113 : f32 to vector<2x128xf32>
    %534 = arith.addf %533, %532 : vector<2x128xf32>
    %535 = arith.divf %533, %534 : vector<2x128xf32>
    %536 = vector.extract_strided_slice %529 {offsets = [0, 128], sizes = [2, 128], strides = [1, 1]} : vector<2x512xf32> to vector<2x128xf32>
    %537 = arith.negf %536 : vector<2x128xf32>
    %538 = math.exp %537 : vector<2x128xf32>
    %cst_114 = arith.constant 1.000000e+00 : f32
    %539 = vector.broadcast %cst_114 : f32 to vector<2x128xf32>
    %540 = arith.addf %539, %538 : vector<2x128xf32>
    %541 = arith.divf %539, %540 : vector<2x128xf32>
    %542 = vector.extract_strided_slice %529 {offsets = [0, 256], sizes = [2, 128], strides = [1, 1]} : vector<2x512xf32> to vector<2x128xf32>
    %543 = math.tanh %542 : vector<2x128xf32>
    %544 = vector.extract_strided_slice %529 {offsets = [0, 384], sizes = [2, 128], strides = [1, 1]} : vector<2x512xf32> to vector<2x128xf32>
    %545 = arith.negf %544 : vector<2x128xf32>
    %546 = math.exp %545 : vector<2x128xf32>
    %cst_115 = arith.constant 1.000000e+00 : f32
    %547 = vector.broadcast %cst_115 : f32 to vector<2x128xf32>
    %548 = arith.addf %547, %546 : vector<2x128xf32>
    %549 = arith.divf %547, %548 : vector<2x128xf32>
    %550 = arith.mulf %541, %488 : vector<2x128xf32>
    %551 = arith.mulf %535, %543 : vector<2x128xf32>
    %552 = arith.addf %550, %551 : vector<2x128xf32>
    %553 = math.tanh %552 : vector<2x128xf32>
    %554 = arith.mulf %549, %553 : vector<2x128xf32>
    %555 = tpu.concatenate %554, %519 in 1 : vector<2x128xf32>, vector<2x4xf32> -> vector<2x132xf32>
    %556 = arith.truncf %555 : vector<2x132xf32> to vector<2x132xbf16>
    %cst_116 = arith.constant dense<0.000000e+00> : vector<2x16xf32>
    %557 = tpu.matmul %556, %4, %cst_116 {dimension_numbers = #tpu.dot_dimension_numbers<[1], [0], [0], [1], [0, 0, 1, 1], [], []>} : vector<2x132xbf16>, vector<132x16xbf16>, vector<2x16xf32> -> vector<2x16xf32>
    %558 = arith.addf %557, %7 : vector<2x16xf32>
    %559 = vector.extract_strided_slice %558 {offsets = [0, 0], sizes = [2, 4], strides = [1, 1]} : vector<2x16xf32> to vector<2x4xf32>
    %560 = arith.negf %559 : vector<2x4xf32>
    %561 = math.exp %560 : vector<2x4xf32>
    %cst_117 = arith.constant 1.000000e+00 : f32
    %562 = vector.broadcast %cst_117 : f32 to vector<2x4xf32>
    %563 = arith.addf %562, %561 : vector<2x4xf32>
    %564 = arith.divf %562, %563 : vector<2x4xf32>
    %565 = vector.extract_strided_slice %558 {offsets = [0, 4], sizes = [2, 4], strides = [1, 1]} : vector<2x16xf32> to vector<2x4xf32>
    %566 = arith.negf %565 : vector<2x4xf32>
    %567 = math.exp %566 : vector<2x4xf32>
    %cst_118 = arith.constant 1.000000e+00 : f32
    %568 = vector.broadcast %cst_118 : f32 to vector<2x4xf32>
    %569 = arith.addf %568, %567 : vector<2x4xf32>
    %570 = arith.divf %568, %569 : vector<2x4xf32>
    %571 = vector.extract_strided_slice %558 {offsets = [0, 8], sizes = [2, 4], strides = [1, 1]} : vector<2x16xf32> to vector<2x4xf32>
    %572 = math.tanh %571 : vector<2x4xf32>
    %573 = vector.extract_strided_slice %558 {offsets = [0, 12], sizes = [2, 4], strides = [1, 1]} : vector<2x16xf32> to vector<2x4xf32>
    %574 = arith.negf %573 : vector<2x4xf32>
    %575 = math.exp %574 : vector<2x4xf32>
    %cst_119 = arith.constant 1.000000e+00 : f32
    %576 = vector.broadcast %cst_119 : f32 to vector<2x4xf32>
    %577 = arith.addf %576, %575 : vector<2x4xf32>
    %578 = arith.divf %576, %577 : vector<2x4xf32>
    %579 = arith.mulf %570, %517 : vector<2x4xf32>
    %580 = arith.mulf %564, %572 : vector<2x4xf32>
    %581 = arith.addf %579, %580 : vector<2x4xf32>
    %582 = math.tanh %581 : vector<2x4xf32>
    %583 = arith.mulf %578, %582 : vector<2x4xf32>
    %584 = arith.index_cast %c8_i32 : i32 to index
    %c0_120 = arith.constant 0 : index
    %c0_121 = arith.constant 0 : index
    %585 = vector.load %arg6[%584, %c0_120, %c0_121] : memref<12x2x4xf32, #tpu.memory_space<vmem>>, vector<1x2x4xf32>
    %586 = vector.shape_cast %585 : vector<1x2x4xf32> to vector<2x4xf32>
    %587 = vector.shape_cast %583 : vector<2x4xf32> to vector<1x2x4xf32>
    tpu.vector_store %arg6[%584, %c0_120, %c0_121], %587 {strides = array<i32>} : memref<12x2x4xf32, #tpu.memory_space<vmem>>, vector<1x2x4xf32>,
    %c9_i32 = arith.constant 9 : i32
    %588 = arith.index_cast %c9_i32 : i32 to index
    %c0_122 = arith.constant 0 : index
    %c0_123 = arith.constant 0 : index
    %589 = vector.load %arg2[%588, %c0_122, %c0_123] : memref<12x2x512xf32, #tpu.memory_space<vmem>>, vector<1x2x512xf32>
    %590 = vector.shape_cast %589 : vector<1x2x512xf32> to vector<2x512xf32>
    %591 = arith.truncf %554 : vector<2x128xf32> to vector<2x128xbf16>
    %cst_124 = arith.constant dense<0.000000e+00> : vector<2x512xf32>
    %592 = tpu.matmul %591, %3, %cst_124 {dimension_numbers = #tpu.dot_dimension_numbers<[1], [0], [0], [1], [0, 0, 1, 1], [], []>} : vector<2x128xbf16>, vector<128x512xbf16>, vector<2x512xf32> -> vector<2x512xf32>
    %593 = arith.addf %590, %592 : vector<2x512xf32>
    %594 = vector.extract_strided_slice %593 {offsets = [0, 0], sizes = [2, 128], strides = [1, 1]} : vector<2x512xf32> to vector<2x128xf32>
    %595 = arith.negf %594 : vector<2x128xf32>
    %596 = math.exp %595 : vector<2x128xf32>
    %cst_125 = arith.constant 1.000000e+00 : f32
    %597 = vector.broadcast %cst_125 : f32 to vector<2x128xf32>
    %598 = arith.addf %597, %596 : vector<2x128xf32>
    %599 = arith.divf %597, %598 : vector<2x128xf32>
    %600 = vector.extract_strided_slice %593 {offsets = [0, 128], sizes = [2, 128], strides = [1, 1]} : vector<2x512xf32> to vector<2x128xf32>
    %601 = arith.negf %600 : vector<2x128xf32>
    %602 = math.exp %601 : vector<2x128xf32>
    %cst_126 = arith.constant 1.000000e+00 : f32
    %603 = vector.broadcast %cst_126 : f32 to vector<2x128xf32>
    %604 = arith.addf %603, %602 : vector<2x128xf32>
    %605 = arith.divf %603, %604 : vector<2x128xf32>
    %606 = vector.extract_strided_slice %593 {offsets = [0, 256], sizes = [2, 128], strides = [1, 1]} : vector<2x512xf32> to vector<2x128xf32>
    %607 = math.tanh %606 : vector<2x128xf32>
    %608 = vector.extract_strided_slice %593 {offsets = [0, 384], sizes = [2, 128], strides = [1, 1]} : vector<2x512xf32> to vector<2x128xf32>
    %609 = arith.negf %608 : vector<2x128xf32>
    %610 = math.exp %609 : vector<2x128xf32>
    %cst_127 = arith.constant 1.000000e+00 : f32
    %611 = vector.broadcast %cst_127 : f32 to vector<2x128xf32>
    %612 = arith.addf %611, %610 : vector<2x128xf32>
    %613 = arith.divf %611, %612 : vector<2x128xf32>
    %614 = arith.mulf %605, %552 : vector<2x128xf32>
    %615 = arith.mulf %599, %607 : vector<2x128xf32>
    %616 = arith.addf %614, %615 : vector<2x128xf32>
    %617 = math.tanh %616 : vector<2x128xf32>
    %618 = arith.mulf %613, %617 : vector<2x128xf32>
    %619 = tpu.concatenate %618, %583 in 1 : vector<2x128xf32>, vector<2x4xf32> -> vector<2x132xf32>
    %620 = arith.truncf %619 : vector<2x132xf32> to vector<2x132xbf16>
    %cst_128 = arith.constant dense<0.000000e+00> : vector<2x16xf32>
    %621 = tpu.matmul %620, %4, %cst_128 {dimension_numbers = #tpu.dot_dimension_numbers<[1], [0], [0], [1], [0, 0, 1, 1], [], []>} : vector<2x132xbf16>, vector<132x16xbf16>, vector<2x16xf32> -> vector<2x16xf32>
    %622 = arith.addf %621, %7 : vector<2x16xf32>
    %623 = vector.extract_strided_slice %622 {offsets = [0, 0], sizes = [2, 4], strides = [1, 1]} : vector<2x16xf32> to vector<2x4xf32>
    %624 = arith.negf %623 : vector<2x4xf32>
    %625 = math.exp %624 : vector<2x4xf32>
    %cst_129 = arith.constant 1.000000e+00 : f32
    %626 = vector.broadcast %cst_129 : f32 to vector<2x4xf32>
    %627 = arith.addf %626, %625 : vector<2x4xf32>
    %628 = arith.divf %626, %627 : vector<2x4xf32>
    %629 = vector.extract_strided_slice %622 {offsets = [0, 4], sizes = [2, 4], strides = [1, 1]} : vector<2x16xf32> to vector<2x4xf32>
    %630 = arith.negf %629 : vector<2x4xf32>
    %631 = math.exp %630 : vector<2x4xf32>
    %cst_130 = arith.constant 1.000000e+00 : f32
    %632 = vector.broadcast %cst_130 : f32 to vector<2x4xf32>
    %633 = arith.addf %632, %631 : vector<2x4xf32>
    %634 = arith.divf %632, %633 : vector<2x4xf32>
    %635 = vector.extract_strided_slice %622 {offsets = [0, 8], sizes = [2, 4], strides = [1, 1]} : vector<2x16xf32> to vector<2x4xf32>
    %636 = math.tanh %635 : vector<2x4xf32>
    %637 = vector.extract_strided_slice %622 {offsets = [0, 12], sizes = [2, 4], strides = [1, 1]} : vector<2x16xf32> to vector<2x4xf32>
    %638 = arith.negf %637 : vector<2x4xf32>
    %639 = math.exp %638 : vector<2x4xf32>
    %cst_131 = arith.constant 1.000000e+00 : f32
    %640 = vector.broadcast %cst_131 : f32 to vector<2x4xf32>
    %641 = arith.addf %640, %639 : vector<2x4xf32>
    %642 = arith.divf %640, %641 : vector<2x4xf32>
    %643 = arith.mulf %634, %581 : vector<2x4xf32>
    %644 = arith.mulf %628, %636 : vector<2x4xf32>
    %645 = arith.addf %643, %644 : vector<2x4xf32>
    %646 = math.tanh %645 : vector<2x4xf32>
    %647 = arith.mulf %642, %646 : vector<2x4xf32>
    %648 = arith.index_cast %c9_i32 : i32 to index
    %c0_132 = arith.constant 0 : index
    %c0_133 = arith.constant 0 : index
    %649 = vector.load %arg6[%648, %c0_132, %c0_133] : memref<12x2x4xf32, #tpu.memory_space<vmem>>, vector<1x2x4xf32>
    %650 = vector.shape_cast %649 : vector<1x2x4xf32> to vector<2x4xf32>
    %651 = vector.shape_cast %647 : vector<2x4xf32> to vector<1x2x4xf32>
    tpu.vector_store %arg6[%648, %c0_132, %c0_133], %651 {strides = array<i32>} : memref<12x2x4xf32, #tpu.memory_space<vmem>>, vector<1x2x4xf32>,
    %c10_i32 = arith.constant 10 : i32
    %652 = arith.index_cast %c10_i32 : i32 to index
    %c0_134 = arith.constant 0 : index
    %c0_135 = arith.constant 0 : index
    %653 = vector.load %arg2[%652, %c0_134, %c0_135] : memref<12x2x512xf32, #tpu.memory_space<vmem>>, vector<1x2x512xf32>
    %654 = vector.shape_cast %653 : vector<1x2x512xf32> to vector<2x512xf32>
    %655 = arith.truncf %618 : vector<2x128xf32> to vector<2x128xbf16>
    %cst_136 = arith.constant dense<0.000000e+00> : vector<2x512xf32>
    %656 = tpu.matmul %655, %3, %cst_136 {dimension_numbers = #tpu.dot_dimension_numbers<[1], [0], [0], [1], [0, 0, 1, 1], [], []>} : vector<2x128xbf16>, vector<128x512xbf16>, vector<2x512xf32> -> vector<2x512xf32>
    %657 = arith.addf %654, %656 : vector<2x512xf32>
    %658 = vector.extract_strided_slice %657 {offsets = [0, 0], sizes = [2, 128], strides = [1, 1]} : vector<2x512xf32> to vector<2x128xf32>
    %659 = arith.negf %658 : vector<2x128xf32>
    %660 = math.exp %659 : vector<2x128xf32>
    %cst_137 = arith.constant 1.000000e+00 : f32
    %661 = vector.broadcast %cst_137 : f32 to vector<2x128xf32>
    %662 = arith.addf %661, %660 : vector<2x128xf32>
    %663 = arith.divf %661, %662 : vector<2x128xf32>
    %664 = vector.extract_strided_slice %657 {offsets = [0, 128], sizes = [2, 128], strides = [1, 1]} : vector<2x512xf32> to vector<2x128xf32>
    %665 = arith.negf %664 : vector<2x128xf32>
    %666 = math.exp %665 : vector<2x128xf32>
    %cst_138 = arith.constant 1.000000e+00 : f32
    %667 = vector.broadcast %cst_138 : f32 to vector<2x128xf32>
    %668 = arith.addf %667, %666 : vector<2x128xf32>
    %669 = arith.divf %667, %668 : vector<2x128xf32>
    %670 = vector.extract_strided_slice %657 {offsets = [0, 256], sizes = [2, 128], strides = [1, 1]} : vector<2x512xf32> to vector<2x128xf32>
    %671 = math.tanh %670 : vector<2x128xf32>
    %672 = vector.extract_strided_slice %657 {offsets = [0, 384], sizes = [2, 128], strides = [1, 1]} : vector<2x512xf32> to vector<2x128xf32>
    %673 = arith.negf %672 : vector<2x128xf32>
    %674 = math.exp %673 : vector<2x128xf32>
    %cst_139 = arith.constant 1.000000e+00 : f32
    %675 = vector.broadcast %cst_139 : f32 to vector<2x128xf32>
    %676 = arith.addf %675, %674 : vector<2x128xf32>
    %677 = arith.divf %675, %676 : vector<2x128xf32>
    %678 = arith.mulf %669, %616 : vector<2x128xf32>
    %679 = arith.mulf %663, %671 : vector<2x128xf32>
    %680 = arith.addf %678, %679 : vector<2x128xf32>
    %681 = math.tanh %680 : vector<2x128xf32>
    %682 = arith.mulf %677, %681 : vector<2x128xf32>
    %683 = tpu.concatenate %682, %647 in 1 : vector<2x128xf32>, vector<2x4xf32> -> vector<2x132xf32>
    %684 = arith.truncf %683 : vector<2x132xf32> to vector<2x132xbf16>
    %cst_140 = arith.constant dense<0.000000e+00> : vector<2x16xf32>
    %685 = tpu.matmul %684, %4, %cst_140 {dimension_numbers = #tpu.dot_dimension_numbers<[1], [0], [0], [1], [0, 0, 1, 1], [], []>} : vector<2x132xbf16>, vector<132x16xbf16>, vector<2x16xf32> -> vector<2x16xf32>
    %686 = arith.addf %685, %7 : vector<2x16xf32>
    %687 = vector.extract_strided_slice %686 {offsets = [0, 0], sizes = [2, 4], strides = [1, 1]} : vector<2x16xf32> to vector<2x4xf32>
    %688 = arith.negf %687 : vector<2x4xf32>
    %689 = math.exp %688 : vector<2x4xf32>
    %cst_141 = arith.constant 1.000000e+00 : f32
    %690 = vector.broadcast %cst_141 : f32 to vector<2x4xf32>
    %691 = arith.addf %690, %689 : vector<2x4xf32>
    %692 = arith.divf %690, %691 : vector<2x4xf32>
    %693 = vector.extract_strided_slice %686 {offsets = [0, 4], sizes = [2, 4], strides = [1, 1]} : vector<2x16xf32> to vector<2x4xf32>
    %694 = arith.negf %693 : vector<2x4xf32>
    %695 = math.exp %694 : vector<2x4xf32>
    %cst_142 = arith.constant 1.000000e+00 : f32
    %696 = vector.broadcast %cst_142 : f32 to vector<2x4xf32>
    %697 = arith.addf %696, %695 : vector<2x4xf32>
    %698 = arith.divf %696, %697 : vector<2x4xf32>
    %699 = vector.extract_strided_slice %686 {offsets = [0, 8], sizes = [2, 4], strides = [1, 1]} : vector<2x16xf32> to vector<2x4xf32>
    %700 = math.tanh %699 : vector<2x4xf32>
    %701 = vector.extract_strided_slice %686 {offsets = [0, 12], sizes = [2, 4], strides = [1, 1]} : vector<2x16xf32> to vector<2x4xf32>
    %702 = arith.negf %701 : vector<2x4xf32>
    %703 = math.exp %702 : vector<2x4xf32>
    %cst_143 = arith.constant 1.000000e+00 : f32
    %704 = vector.broadcast %cst_143 : f32 to vector<2x4xf32>
    %705 = arith.addf %704, %703 : vector<2x4xf32>
    %706 = arith.divf %704, %705 : vector<2x4xf32>
    %707 = arith.mulf %698, %645 : vector<2x4xf32>
    %708 = arith.mulf %692, %700 : vector<2x4xf32>
    %709 = arith.addf %707, %708 : vector<2x4xf32>
    %710 = math.tanh %709 : vector<2x4xf32>
    %711 = arith.mulf %706, %710 : vector<2x4xf32>
    %712 = arith.index_cast %c10_i32 : i32 to index
    %c0_144 = arith.constant 0 : index
    %c0_145 = arith.constant 0 : index
    %713 = vector.load %arg6[%712, %c0_144, %c0_145] : memref<12x2x4xf32, #tpu.memory_space<vmem>>, vector<1x2x4xf32>
    %714 = vector.shape_cast %713 : vector<1x2x4xf32> to vector<2x4xf32>
    %715 = vector.shape_cast %711 : vector<2x4xf32> to vector<1x2x4xf32>
    tpu.vector_store %arg6[%712, %c0_144, %c0_145], %715 {strides = array<i32>} : memref<12x2x4xf32, #tpu.memory_space<vmem>>, vector<1x2x4xf32>,
    %c11_i32 = arith.constant 11 : i32
    %716 = arith.index_cast %c11_i32 : i32 to index
    %c0_146 = arith.constant 0 : index
    %c0_147 = arith.constant 0 : index
    %717 = vector.load %arg2[%716, %c0_146, %c0_147] : memref<12x2x512xf32, #tpu.memory_space<vmem>>, vector<1x2x512xf32>
    %718 = vector.shape_cast %717 : vector<1x2x512xf32> to vector<2x512xf32>
    %719 = arith.truncf %682 : vector<2x128xf32> to vector<2x128xbf16>
    %cst_148 = arith.constant dense<0.000000e+00> : vector<2x512xf32>
    %720 = tpu.matmul %719, %3, %cst_148 {dimension_numbers = #tpu.dot_dimension_numbers<[1], [0], [0], [1], [0, 0, 1, 1], [], []>} : vector<2x128xbf16>, vector<128x512xbf16>, vector<2x512xf32> -> vector<2x512xf32>
    %721 = arith.addf %718, %720 : vector<2x512xf32>
    %722 = vector.extract_strided_slice %721 {offsets = [0, 0], sizes = [2, 128], strides = [1, 1]} : vector<2x512xf32> to vector<2x128xf32>
    %723 = arith.negf %722 : vector<2x128xf32>
    %724 = math.exp %723 : vector<2x128xf32>
    %cst_149 = arith.constant 1.000000e+00 : f32
    %725 = vector.broadcast %cst_149 : f32 to vector<2x128xf32>
    %726 = arith.addf %725, %724 : vector<2x128xf32>
    %727 = arith.divf %725, %726 : vector<2x128xf32>
    %728 = vector.extract_strided_slice %721 {offsets = [0, 128], sizes = [2, 128], strides = [1, 1]} : vector<2x512xf32> to vector<2x128xf32>
    %729 = arith.negf %728 : vector<2x128xf32>
    %730 = math.exp %729 : vector<2x128xf32>
    %cst_150 = arith.constant 1.000000e+00 : f32
    %731 = vector.broadcast %cst_150 : f32 to vector<2x128xf32>
    %732 = arith.addf %731, %730 : vector<2x128xf32>
    %733 = arith.divf %731, %732 : vector<2x128xf32>
    %734 = vector.extract_strided_slice %721 {offsets = [0, 256], sizes = [2, 128], strides = [1, 1]} : vector<2x512xf32> to vector<2x128xf32>
    %735 = math.tanh %734 : vector<2x128xf32>
    %736 = vector.extract_strided_slice %721 {offsets = [0, 384], sizes = [2, 128], strides = [1, 1]} : vector<2x512xf32> to vector<2x128xf32>
    %737 = arith.negf %736 : vector<2x128xf32>
    %738 = math.exp %737 : vector<2x128xf32>
    %cst_151 = arith.constant 1.000000e+00 : f32
    %739 = vector.broadcast %cst_151 : f32 to vector<2x128xf32>
    %740 = arith.addf %739, %738 : vector<2x128xf32>
    %741 = arith.divf %739, %740 : vector<2x128xf32>
    %742 = arith.mulf %733, %680 : vector<2x128xf32>
    %743 = arith.mulf %727, %735 : vector<2x128xf32>
    %744 = arith.addf %742, %743 : vector<2x128xf32>
    %745 = math.tanh %744 : vector<2x128xf32>
    %746 = arith.mulf %741, %745 : vector<2x128xf32>
    %747 = tpu.concatenate %746, %711 in 1 : vector<2x128xf32>, vector<2x4xf32> -> vector<2x132xf32>
    %748 = arith.truncf %747 : vector<2x132xf32> to vector<2x132xbf16>
    %cst_152 = arith.constant dense<0.000000e+00> : vector<2x16xf32>
    %749 = tpu.matmul %748, %4, %cst_152 {dimension_numbers = #tpu.dot_dimension_numbers<[1], [0], [0], [1], [0, 0, 1, 1], [], []>} : vector<2x132xbf16>, vector<132x16xbf16>, vector<2x16xf32> -> vector<2x16xf32>
    %750 = arith.addf %749, %7 : vector<2x16xf32>
    %751 = vector.extract_strided_slice %750 {offsets = [0, 0], sizes = [2, 4], strides = [1, 1]} : vector<2x16xf32> to vector<2x4xf32>
    %752 = arith.negf %751 : vector<2x4xf32>
    %753 = math.exp %752 : vector<2x4xf32>
    %cst_153 = arith.constant 1.000000e+00 : f32
    %754 = vector.broadcast %cst_153 : f32 to vector<2x4xf32>
    %755 = arith.addf %754, %753 : vector<2x4xf32>
    %756 = arith.divf %754, %755 : vector<2x4xf32>
    %757 = vector.extract_strided_slice %750 {offsets = [0, 4], sizes = [2, 4], strides = [1, 1]} : vector<2x16xf32> to vector<2x4xf32>
    %758 = arith.negf %757 : vector<2x4xf32>
    %759 = math.exp %758 : vector<2x4xf32>
    %cst_154 = arith.constant 1.000000e+00 : f32
    %760 = vector.broadcast %cst_154 : f32 to vector<2x4xf32>
    %761 = arith.addf %760, %759 : vector<2x4xf32>
    %762 = arith.divf %760, %761 : vector<2x4xf32>
    %763 = vector.extract_strided_slice %750 {offsets = [0, 8], sizes = [2, 4], strides = [1, 1]} : vector<2x16xf32> to vector<2x4xf32>
    %764 = math.tanh %763 : vector<2x4xf32>
    %765 = vector.extract_strided_slice %750 {offsets = [0, 12], sizes = [2, 4], strides = [1, 1]} : vector<2x16xf32> to vector<2x4xf32>
    %766 = arith.negf %765 : vector<2x4xf32>
    %767 = math.exp %766 : vector<2x4xf32>
    %cst_155 = arith.constant 1.000000e+00 : f32
    %768 = vector.broadcast %cst_155 : f32 to vector<2x4xf32>
    %769 = arith.addf %768, %767 : vector<2x4xf32>
    %770 = arith.divf %768, %769 : vector<2x4xf32>
    %771 = arith.mulf %762, %709 : vector<2x4xf32>
    %772 = arith.mulf %756, %764 : vector<2x4xf32>
    %773 = arith.addf %771, %772 : vector<2x4xf32>
    %774 = math.tanh %773 : vector<2x4xf32>
    %775 = arith.mulf %770, %774 : vector<2x4xf32>
    %776 = arith.index_cast %c11_i32 : i32 to index
    %c0_156 = arith.constant 0 : index
    %c0_157 = arith.constant 0 : index
    %777 = vector.load %arg6[%776, %c0_156, %c0_157] : memref<12x2x4xf32, #tpu.memory_space<vmem>>, vector<1x2x4xf32>
    %778 = vector.shape_cast %777 : vector<1x2x4xf32> to vector<2x4xf32>
    %779 = vector.shape_cast %775 : vector<2x4xf32> to vector<1x2x4xf32>
    tpu.vector_store %arg6[%776, %c0_156, %c0_157], %779 {strides = array<i32>} : memref<12x2x4xf32, #tpu.memory_space<vmem>>, vector<1x2x4xf32>,
    %c12_i32 = arith.constant 12 : i32
    %c0_158 = arith.constant 0 : index
    %c0_159 = arith.constant 0 : index
    %780 = vector.load %arg7[%c0_158, %c0_159] : memref<2x128xf32, #tpu.memory_space<vmem>>, vector<2x128xf32>
    tpu.vector_store %arg7[%c0_158, %c0_159], %746 {strides = array<i32>} : memref<2x128xf32, #tpu.memory_space<vmem>>, vector<2x128xf32>,
    %c0_160 = arith.constant 0 : index
    %c0_161 = arith.constant 0 : index
    %781 = vector.load %arg8[%c0_160, %c0_161] : memref<2x128xf32, #tpu.memory_space<vmem>>, vector<2x128xf32>
    tpu.vector_store %arg8[%c0_160, %c0_161], %744 {strides = array<i32>} : memref<2x128xf32, #tpu.memory_space<vmem>>, vector<2x128xf32>,
    %c0_162 = arith.constant 0 : index
    %c0_163 = arith.constant 0 : index
    %782 = vector.load %arg9[%c0_162, %c0_163] : memref<2x4xf32, #tpu.memory_space<vmem>>, vector<2x4xf32>
    tpu.vector_store %arg9[%c0_162, %c0_163], %775 {strides = array<i32>} : memref<2x4xf32, #tpu.memory_space<vmem>>, vector<2x4xf32>,
    %c0_164 = arith.constant 0 : index
    %c0_165 = arith.constant 0 : index
    %783 = vector.load %arg10[%c0_164, %c0_165] : memref<2x4xf32, #tpu.memory_space<vmem>>, vector<2x4xf32>
    tpu.vector_store %arg10[%c0_164, %c0_165], %773 {strides = array<i32>} : memref<2x4xf32, #tpu.memory_space<vmem>>, vector<2x4xf32>,
    return
  }
  func.func @transform_0(%arg0: i32, %arg1: i32) -> (i32, i32, i32) {
    %c0_i32 = arith.constant 0 : i32
    %c0_i32_0 = arith.constant 0 : i32
    return %arg1, %arg0, %c0_i32 : i32, i32, i32
  }
  func.func @transform_1(%arg0: i32, %arg1: i32) -> (i32, i32) {
    %c0_i32 = arith.constant 0 : i32
    %c0_i32_0 = arith.constant 0 : i32
    %c0_i32_1 = arith.constant 0 : i32
    return %c0_i32, %c0_i32_0 : i32, i32
  }
  func.func @transform_2(%arg0: i32, %arg1: i32) -> (i32, i32) {
    %c0_i32 = arith.constant 0 : i32
    %c0_i32_0 = arith.constant 0 : i32
    %c0_i32_1 = arith.constant 0 : i32
    return %c0_i32, %c0_i32_0 : i32, i32
  }
  func.func @transform_3(%arg0: i32, %arg1: i32) -> (i32, i32) {
    %c0_i32 = arith.constant 0 : i32
    %c0_i32_0 = arith.constant 0 : i32
    %c0_i32_1 = arith.constant 0 : i32
    return %c0_i32, %c0_i32_0 : i32, i32
  }
  func.func @transform_4(%arg0: i32, %arg1: i32) -> (i32, i32, i32) {
    %c0_i32 = arith.constant 0 : i32
    %c0_i32_0 = arith.constant 0 : i32
    return %arg1, %arg0, %c0_i32 : i32, i32, i32
  }
}

</mosaic_0001>

<llo_original>
// kernel: vit_masked_encoder_with_meta_head_forward.2
$region0: #{vit_masked_encoder_with_meta_head_forward.2}
  #allocation0 [shape = 'u32[]', space=smem, size = 0x4, offset = 0x4, fixed_abs, tag = 'smem constant byte address 0x4 - core index']
  #allocation1 [shape = 'u32[72,128]{1,0:T(1,128)}', space=vmem, size = 0x9000, scoped, tag = 'internal scratch']
  %s0 = inlined_call_operand.vmem [shape: bf16[24,256], index: 0, kind: input, shape index: {}]
  %s1 = inlined_call_operand.vmem [shape: s32[24,1], index: 1, kind: input, shape index: {}]
  %s2 = inlined_call_operand.vmem [shape: bf16[256,512], index: 2, kind: input, shape index: {}]
  %s3 = inlined_call_operand.vmem [shape: f32[4,512], index: 3, kind: input, shape index: {}]
  %s4 = inlined_call_operand.vmem [shape: f32[1,512], index: 4, kind: input, shape index: {}]
  %s5 = inlined_call_operand.vmem [shape: f32[24,512], index: 5, kind: output, shape index: {}]
  %s6 = sld [smem:[#allocation0]]
  $region53: #{vit_masked_encoder_with_meta_head_forward.2} parent=0
    _
  %s8 = ssub.s32 1, %s6
  %s9 = scalar_select 0, %s8, %s6
  loop: start=0, step=1, limit=5
  $region2: #{vit_masked_encoder_with_meta_head_forward.2} parent=0 // loop_pre_header
    _
  $region3: #{vit_masked_encoder_with_meta_head_forward.2} parent=0 // loop_header
    %s11 = sphi 0, %s15
    %p12 = scmp.ge.s32.totalorder %s11, 5
    %s21 = sphi 0, %s23
    %s24 = sphi 0, %s21
    %s25 = sphi 0, %s24
    %s41 = sphi 0, %s25
    %s47 = sphi 0, %s49
    %s50 = sphi 0, %s47
    %s51 = sphi 0, %s50
    %s67 = sphi 0, %s51
    %s71 = sphi 0, %s71
    %s73 = sphi 0, %s71
    %s74 = sphi 0, %s73
    %s88 = sphi 0, %s74
    %s92 = sphi 0, %s92
    %s94 = sphi 0, %s92
    %s95 = sphi 0, %s94
    %s109 = sphi 0, %s95
    %s113 = sphi 0, %s113
    %s115 = sphi 0, %s113
    %s116 = sphi 0, %s115
    %s130 = sphi 0, %s116
    %s136 = sphi 0, %s138
    %s139 = sphi 0, %s136
    %s140 = sphi 0, %s139
    %s156 = sphi 0, %s140
  $region4: #{vit_masked_encoder_with_meta_head_forward.2} parent=0 // loop_header_branch
    %14 = sbr.rel (%p12) target = $region8
  $region5: #{vit_masked_encoder_with_meta_head_forward.2} parent=0 // loop_body
    %s16 = ssub.s32 %s11, 1
    %s17 = ssub.s32 %s11, 2
    %s18 = sadd.s32 %s11, 1
    %s19 = ssub.s32 %s11, %s18
    %p20 = scmp.eq.s32.totalorder %s19, 0
    %s22 = sadd.s32 %s21, 1
    %s23 = scalar_select %p20, %s21, %s22
    %p26 = pneg %p20
    %p27 = scmp.eq.s32.totalorder %s11, 2
    %p28 = por %p26, %p27
    %p29 = scmp.ne.s32.totalorder %s21, %s24
    %p30 = scmp.eq.s32.totalorder %s11, 0
    %p31 = por %p29, %p30
    %p32 = scmp.ne.s32.totalorder %s21, %s24
    %p33 = scmp.eq.s32.totalorder %s16, 2
    %p34 = por %p32, %p33
    %p35 = scmp.ne.s32.totalorder %s24, %s25
    %p36 = scmp.eq.s32.totalorder %s16, 0
    %p37 = por %p35, %p36
    %p38 = scmp.ne.s32.totalorder %s24, %s25
    %p39 = scmp.eq.s32.totalorder %s17, 2
    %p40 = por %p38, %p39
    %p42 = scmp.ne.s32.totalorder %s25, %s41
    %p43 = scmp.eq.s32.totalorder %s17, 0
    %p44 = por %p42, %p43
    %s45 = ssub.s32 %s11, %s18
    %p46 = scmp.eq.s32.totalorder %s45, 0
    %s48 = sadd.s32 %s47, 1
    %s49 = scalar_select %p46, %s47, %s48
    %p52 = pneg %p46
    %p53 = scmp.eq.s32.totalorder %s11, 2
    %p54 = por %p52, %p53
    %p55 = scmp.ne.s32.totalorder %s47, %s50
    %p56 = scmp.eq.s32.totalorder %s11, 0
    %p57 = por %p55, %p56
    %p58 = scmp.ne.s32.totalorder %s47, %s50
    %p59 = scmp.eq.s32.totalorder %s16, 2
    %p60 = por %p58, %p59
    %p61 = scmp.ne.s32.totalorder %s50, %s51
    %p62 = scmp.eq.s32.totalorder %s16, 0
    %p63 = por %p61, %p62
    %p64 = scmp.ne.s32.totalorder %s50, %s51
    %p65 = scmp.eq.s32.totalorder %s17, 2
    %p66 = por %p64, %p65
    %p68 = scmp.ne.s32.totalorder %s51, %s67
    %p69 = scmp.eq.s32.totalorder %s17, 0
    %p70 = por %p68, %p69
    %s72 = sadd.s32 %s71, 1
    %p75 = scmp.eq.s32.totalorder %s11, 2
    %p76 = scmp.ne.s32.totalorder %s71, %s73
    %p77 = scmp.eq.s32.totalorder %s11, 0
    %p78 = por %p76, %p77
    %p79 = scmp.ne.s32.totalorder %s71, %s73
    %p80 = scmp.eq.s32.totalorder %s16, 2
    %p81 = por %p79, %p80
    %p82 = scmp.ne.s32.totalorder %s73, %s74
    %p83 = scmp.eq.s32.totalorder %s16, 0
    %p84 = por %p82, %p83
    %p85 = scmp.ne.s32.totalorder %s73, %s74
    %p86 = scmp.eq.s32.totalorder %s17, 2
    %p87 = por %p85, %p86
    %p89 = scmp.ne.s32.totalorder %s74, %s88
    %p90 = scmp.eq.s32.totalorder %s17, 0
    %p91 = por %p89, %p90
    %s93 = sadd.s32 %s92, 1
    %p96 = scmp.eq.s32.totalorder %s11, 2
    %p97 = scmp.ne.s32.totalorder %s92, %s94
    %p98 = scmp.eq.s32.totalorder %s11, 0
    %p99 = por %p97, %p98
    %p100 = scmp.ne.s32.totalorder %s92, %s94
    %p101 = scmp.eq.s32.totalorder %s16, 2
    %p102 = por %p100, %p101
    %p103 = scmp.ne.s32.totalorder %s94, %s95
    %p104 = scmp.eq.s32.totalorder %s16, 0
    %p105 = por %p103, %p104
    %p106 = scmp.ne.s32.totalorder %s94, %s95
    %p107 = scmp.eq.s32.totalorder %s17, 2
    %p108 = por %p106, %p107
    %p110 = scmp.ne.s32.totalorder %s95, %s109
    %p111 = scmp.eq.s32.totalorder %s17, 0
    %p112 = por %p110, %p111
    %s114 = sadd.s32 %s113, 1
    %p117 = scmp.eq.s32.totalorder %s11, 2
    %p118 = scmp.ne.s32.totalorder %s113, %s115
    %p119 = scmp.eq.s32.totalorder %s11, 0
    %p120 = por %p118, %p119
    %p121 = scmp.ne.s32.totalorder %s113, %s115
    %p122 = scmp.eq.s32.totalorder %s16, 2
    %p123 = por %p121, %p122
    %p124 = scmp.ne.s32.totalorder %s115, %s116
    %p125 = scmp.eq.s32.totalorder %s16, 0
    %p126 = por %p124, %p125
    %p127 = scmp.ne.s32.totalorder %s115, %s116
    %p128 = scmp.eq.s32.totalorder %s17, 2
    %p129 = por %p127, %p128
    %p131 = scmp.ne.s32.totalorder %s116, %s130
    %p132 = scmp.eq.s32.totalorder %s17, 0
    %p133 = por %p131, %p132
    %s134 = ssub.s32 %s11, %s18
    %p135 = scmp.eq.s32.totalorder %s134, 0
    %s137 = sadd.s32 %s136, 1
    %s138 = scalar_select %p135, %s136, %s137
    %p141 = pneg %p135
    %p142 = scmp.eq.s32.totalorder %s11, 2
    %p143 = por %p141, %p142
    %p144 = scmp.ne.s32.totalorder %s136, %s139
    %p145 = scmp.eq.s32.totalorder %s11, 0
    %p146 = por %p144, %p145
    %p147 = scmp.ne.s32.totalorder %s136, %s139
    %p148 = scmp.eq.s32.totalorder %s16, 2
    %p149 = por %p147, %p148
    %p150 = scmp.ne.s32.totalorder %s139, %s140
    %p151 = scmp.eq.s32.totalorder %s16, 0
    %p152 = por %p150, %p151
    %p153 = scmp.ne.s32.totalorder %s139, %s140
    %p154 = scmp.eq.s32.totalorder %s17, 2
    %p155 = por %p153, %p154
    %p157 = scmp.ne.s32.totalorder %s140, %s156
    %p158 = scmp.eq.s32.totalorder %s17, 0
    %p159 = por %p157, %p158
    %p160 = scmp.le.s32.totalorder 1, %s11
    %p161 = scmp.lt.s32.totalorder %s11, 4
    %p162 = pnand %p160, %p161
    %p163 = pneg %p162
    // Predicated region
    $region9: #{vit_masked_encoder_with_meta_head_forward.2} parent=5 // pred_check
      _
    $region10: #{vit_masked_encoder_with_meta_head_forward.2} parent=5 // pred_check_branch
      %165 = sbr.rel (%p162) target = $region12
    $region11: #{vit_masked_encoder_with_meta_head_forward.2} parent=5 // pred_region
      %s166 = ssub.s32 %s11, 1
      // Predicated region
      $region13: #{vit_masked_encoder_with_meta_head_forward.2} parent=11 // pred_check
        %p167 = pneg %p84
      $region14: #{vit_masked_encoder_with_meta_head_forward.2} parent=11 // pred_check_branch
        %169 = sbr.rel (%p167) target = $region16
      $region15: #{vit_masked_encoder_with_meta_head_forward.2} parent=11 // pred_region
        _
      $region16: #{vit_masked_encoder_with_meta_head_forward.2} parent=11 // pred_fallthru
        _
      // Predicated region
      $region17: #{vit_masked_encoder_with_meta_head_forward.2} parent=11 // pred_check
        %p170 = pneg %p105
      $region18: #{vit_masked_encoder_with_meta_head_forward.2} parent=11 // pred_check_branch
        %172 = sbr.rel (%p170) target = $region20
      $region19: #{vit_masked_encoder_with_meta_head_forward.2} parent=11 // pred_region
        _
      $region20: #{vit_masked_encoder_with_meta_head_forward.2} parent=11 // pred_fallthru
        _
      // Predicated region
      $region21: #{vit_masked_encoder_with_meta_head_forward.2} parent=11 // pred_check
        %p173 = pneg %p126
      $region22: #{vit_masked_encoder_with_meta_head_forward.2} parent=11 // pred_check_branch
        %175 = sbr.rel (%p173) target = $region24
      $region23: #{vit_masked_encoder_with_meta_head_forward.2} parent=11 // pred_region
        _
      $region24: #{vit_masked_encoder_with_meta_head_forward.2} parent=11 // pred_fallthru
        _
    $region12: #{vit_masked_encoder_with_meta_head_forward.2} parent=5 // pred_fallthru
      _
    %p176 = scmp.lt.s32.totalorder %s11, 3
    // Predicated region
    $region25: #{vit_masked_encoder_with_meta_head_forward.2} parent=5 // pred_check
      %p177 = pneg %p176
    $region26: #{vit_masked_encoder_with_meta_head_forward.2} parent=5 // pred_check_branch
      %179 = sbr.rel (%p177) target = $region28
    $region27: #{vit_masked_encoder_with_meta_head_forward.2} parent=5 // pred_region
      // Predicated region
      $region29: #{vit_masked_encoder_with_meta_head_forward.2} parent=27 // pred_check
        %p180 = pneg %p31
      $region30: #{vit_masked_encoder_with_meta_head_forward.2} parent=27 // pred_check_branch
        %182 = sbr.rel (%p180) target = $region32
      $region31: #{vit_masked_encoder_with_meta_head_forward.2} parent=27 // pred_region
        %p183 = scmp.lt.s32.totalorder %s11, 2
        %s184 = scalar_select %p183, %s11, 2
        %s185 = smul.addr %s184, 2
        %s186 = smul.addr %s185, 4
        %s187 = scalar_lea.vmem %s0, %s186
      $region32: #{vit_masked_encoder_with_meta_head_forward.2} parent=27 // pred_fallthru
        _
      // Predicated region
      $region33: #{vit_masked_encoder_with_meta_head_forward.2} parent=27 // pred_check
        %p188 = pneg %p57
      $region34: #{vit_masked_encoder_with_meta_head_forward.2} parent=27 // pred_check_branch
        %190 = sbr.rel (%p188) target = $region36
      $region35: #{vit_masked_encoder_with_meta_head_forward.2} parent=27 // pred_region
        %p191 = scmp.lt.s32.totalorder %s11, 2
        %s192 = scalar_select %p191, %s11, 2
        %s193 = smul.addr %s192, 8
        %s194 = scalar_lea.vmem %s1, %s193
      $region36: #{vit_masked_encoder_with_meta_head_forward.2} parent=27 // pred_fallthru
        _
    $region28: #{vit_masked_encoder_with_meta_head_forward.2} parent=5 // pred_fallthru
      _
    %p195 = scmp.le.s32.totalorder 1, %s11
    %p196 = scmp.lt.s32.totalorder %s11, 4
    %p197 = pnand %p195, %p196
    %p198 = pneg %p197
    // Predicated region
    $region37: #{vit_masked_encoder_with_meta_head_forward.2} parent=5 // pred_check
      _
    $region38: #{vit_masked_encoder_with_meta_head_forward.2} parent=5 // pred_check_branch
      %200 = sbr.rel (%p197) target = $region40
    $region39: #{vit_masked_encoder_with_meta_head_forward.2} parent=5 // pred_region
      %s201 = ssub.s32 %s11, 1
      %p202 = scmp.lt.s32.totalorder %s16, 2
      %s203 = scalar_select %p202, %s16, 2
      %s204 = smul.addr %s203, 2
      %s205 = smul.addr %s204, 4
      %s206 = scalar_lea.vmem %s0, %s205
      %p207 = pneg %p37
      %p208 = pneg %p34
      %p209 = scmp.lt.s32.totalorder %s16, 2
      %s210 = scalar_select %p209, %s16, 2
      %s211 = smul.addr %s210, 8
      %s212 = scalar_lea.vmem %s1, %s211
      %p213 = pneg %p63
      %p214 = pneg %p60
      %p215 = pneg %p84
      %p216 = pneg %p81
      %p217 = pneg %p105
      %p218 = pneg %p102
      %p219 = pneg %p126
      %p220 = pneg %p123
      %p221 = pneg %p152
      %p222 = pneg %p149
      %p223 = scmp.lt.s32.totalorder %s16, 2
      %s224 = scalar_select %p223, %s16, 2
      %s225 = smul.addr %s224, 4
      %s226 = smul.addr %s225, 8
      %s227 = scalar_lea.vmem %s5, %s226
      %p228 = scmp.lt.s32.totalorder %s16, 2
      %s229 = scalar_select %p228, %s16, 2
      %s230 = smul.addr %s229, 2
      %s231 = smul.addr %s230, 4
      %s232 = scalar_lea.vmem %s0, %s231
      %p233 = scmp.lt.s32.totalorder %s16, 2
      %s234 = scalar_select %p233, %s16, 2
      %s235 = smul.addr %s234, 8
      %s236 = scalar_lea.vmem %s1, %s235
      %p237 = scmp.lt.s32.totalorder %s16, 2
      %s238 = scalar_select %p237, %s16, 2
      %s239 = smul.addr %s238, 4
      %s240 = smul.addr %s239, 8
      %s241 = scalar_lea.vmem %s5, %s240
      %v242 = vld [vmem:[%s232] sm:$0xff]
      %v243 = vld [vmem:[%s2] sm:$0xff]
      %v244 = vld [vmem:[%s2 + $0x8] sm:$0xff]
      %v245 = vld [vmem:[%s2 + $0x10] sm:$0xff]
      %v246 = vld [vmem:[%s2 + $0x18] sm:$0xff]
      %v247 = vld [vmem:[%s2 + $0x20] sm:$0xff]
      %v248 = vld [vmem:[%s2 + $0x28] sm:$0xff]
      %v249 = vld [vmem:[%s2 + $0x30] sm:$0xff]
      %v250 = vld [vmem:[%s2 + $0x38] sm:$0xff]
      %v251 = vld [vmem:[%s2 + $0x40] sm:$0xff]
      %v252 = vld [vmem:[%s2 + $0x48] sm:$0xff]
      %v253 = vld [vmem:[%s2 + $0x50] sm:$0xff]
      %v254 = vld [vmem:[%s2 + $0x58] sm:$0xff]
      %v255 = vld [vmem:[%s2 + $0x60] sm:$0xff]
      %v256 = vld [vmem:[%s2 + $0x68] sm:$0xff]
      %v257 = vld [vmem:[%s2 + $0x70] sm:$0xff]
      %v258 = vld [vmem:[%s2 + $0x78] sm:$0xff]
      %v259 = vld [vmem:[%s2 + $0x80] sm:$0xff]
      %v260 = vld [vmem:[%s2 + $0x88] sm:$0xff]
      %v261 = vld [vmem:[%s2 + $0x90] sm:$0xff]
      %v262 = vld [vmem:[%s2 + $0x98] sm:$0xff]
      %v263 = vld [vmem:[%s2 + $0xa0] sm:$0xff]
      %v264 = vld [vmem:[%s2 + $0xa8] sm:$0xff]
      %v265 = vld [vmem:[%s2 + $0xb0] sm:$0xff]
      %v266 = vld [vmem:[%s2 + $0xb8] sm:$0xff]
      %v267 = vld [vmem:[%s2 + $0xc0] sm:$0xff]
      %v268 = vld [vmem:[%s2 + $0xc8] sm:$0xff]
      %v269 = vld [vmem:[%s2 + $0xd0] sm:$0xff]
      %v270 = vld [vmem:[%s2 + $0xd8] sm:$0xff]
      %v271 = vld [vmem:[%s2 + $0xe0] sm:$0xff]
      %v272 = vld [vmem:[%s2 + $0xe8] sm:$0xff]
      %v273 = vld [vmem:[%s2 + $0xf0] sm:$0xff]
      %v274 = vld [vmem:[%s2 + $0xf8] sm:$0xff]
      %v275 = vld [vmem:[%s2 + $0x100] sm:$0xff]
      %v276 = vld [vmem:[%s2 + $0x108] sm:$0xff]
      %v277 = vld [vmem:[%s2 + $0x110] sm:$0xff]
      %v278 = vld [vmem:[%s2 + $0x118] sm:$0xff]
      %v279 = vld [vmem:[%s2 + $0x120] sm:$0xff]
      %v280 = vld [vmem:[%s2 + $0x128] sm:$0xff]
      %v281 = vld [vmem:[%s2 + $0x130] sm:$0xff]
      %v282 = vld [vmem:[%s2 + $0x138] sm:$0xff]
      %v283 = vld [vmem:[%s2 + $0x140] sm:$0xff]
      %v284 = vld [vmem:[%s2 + $0x148] sm:$0xff]
      %v285 = vld [vmem:[%s2 + $0x150] sm:$0xff]
      %v286 = vld [vmem:[%s2 + $0x158] sm:$0xff]
      %v287 = vld [vmem:[%s2 + $0x160] sm:$0xff]
      %v288 = vld [vmem:[%s2 + $0x168] sm:$0xff]
      %v289 = vld [vmem:[%s2 + $0x170] sm:$0xff]
      %v290 = vld [vmem:[%s2 + $0x178] sm:$0xff]
      %v291 = vld [vmem:[%s2 + $0x180] sm:$0xff]
      %v292 = vld [vmem:[%s2 + $0x188] sm:$0xff]
      %v293 = vld [vmem:[%s2 + $0x190] sm:$0xff]
      %v294 = vld [vmem:[%s2 + $0x198] sm:$0xff]
      %v295 = vld [vmem:[%s2 + $0x1a0] sm:$0xff]
      %v296 = vld [vmem:[%s2 + $0x1a8] sm:$0xff]
      %v297 = vld [vmem:[%s2 + $0x1b0] sm:$0xff]
      %v298 = vld [vmem:[%s2 + $0x1b8] sm:$0xff]
      %v299 = vld [vmem:[%s2 + $0x1c0] sm:$0xff]
      %v300 = vld [vmem:[%s2 + $0x1c8] sm:$0xff]
      %v301 = vld [vmem:[%s2 + $0x1d0] sm:$0xff]
      %v302 = vld [vmem:[%s2 + $0x1d8] sm:$0xff]
      %v303 = vld [vmem:[%s2 + $0x1e0] sm:$0xff]
      %v304 = vld [vmem:[%s2 + $0x1e8] sm:$0xff]
      %v305 = vld [vmem:[%s2 + $0x1f0] sm:$0xff]
      %v306 = vld [vmem:[%s2 + $0x1f8] sm:$0xff]
      %v307 = vld [vmem:[%s4] sm:$0xf]
      %v309 = vperm.slane %v307, 0
      %v310 = vperm.slane %v307, 1
      %v311 = vperm.slane %v307, 2
      %v312 = vperm.slane %v307, 3
      %v318 = vunpack.c.l.b16 %v242
      %v319 = vunpack.c.h.b16 %v242
      %v320 = vpack.c.b16 %v318, %v318
      %v321 = vpack.c.b16 %v319, %v319
      %v388 = vunpack.c.l.b16 %v243
      %v389 = vunpack.c.h.b16 %v243
      %v390 = vunpack.c.l.b16 %v244
      %v391 = vunpack.c.h.b16 %v244
      %v392 = vunpack.c.l.b16 %v245
      %v393 = vunpack.c.h.b16 %v245
      %v394 = vunpack.c.l.b16 %v246
      %v395 = vunpack.c.h.b16 %v246
      %v396 = vunpack.c.l.b16 %v247
      %v397 = vunpack.c.h.b16 %v247
      %v398 = vunpack.c.l.b16 %v248
      %v399 = vunpack.c.h.b16 %v248
      %v400 = vunpack.c.l.b16 %v249
      %v401 = vunpack.c.h.b16 %v249
      %v402 = vunpack.c.l.b16 %v250
      %v403 = vunpack.c.h.b16 %v250
      %v404 = vunpack.c.l.b16 %v251
      %v405 = vunpack.c.h.b16 %v251
      %v406 = vunpack.c.l.b16 %v252
      %v407 = vunpack.c.h.b16 %v252
      %v408 = vunpack.c.l.b16 %v253
      %v409 = vunpack.c.h.b16 %v253
      %v410 = vunpack.c.l.b16 %v254
      %v411 = vunpack.c.h.b16 %v254
      %v412 = vunpack.c.l.b16 %v255
      %v413 = vunpack.c.h.b16 %v255
      %v414 = vunpack.c.l.b16 %v256
      %v415 = vunpack.c.h.b16 %v256
      %v416 = vunpack.c.l.b16 %v257
      %v417 = vunpack.c.h.b16 %v257
      %v418 = vunpack.c.l.b16 %v258
      %v419 = vunpack.c.h.b16 %v258
      %v420 = vunpack.c.l.b16 %v259
      %v421 = vunpack.c.h.b16 %v259
      %v422 = vunpack.c.l.b16 %v260
      %v423 = vunpack.c.h.b16 %v260
      %v424 = vunpack.c.l.b16 %v261
      %v425 = vunpack.c.h.b16 %v261
      %v426 = vunpack.c.l.b16 %v262
      %v427 = vunpack.c.h.b16 %v262
      %v428 = vunpack.c.l.b16 %v263
      %v429 = vunpack.c.h.b16 %v263
      %v430 = vunpack.c.l.b16 %v264
      %v431 = vunpack.c.h.b16 %v264
      %v432 = vunpack.c.l.b16 %v265
      %v433 = vunpack.c.h.b16 %v265
      %v434 = vunpack.c.l.b16 %v266
      %v435 = vunpack.c.h.b16 %v266
      %v436 = vunpack.c.l.b16 %v267
      %v437 = vunpack.c.h.b16 %v267
      %v438 = vunpack.c.l.b16 %v268
      %v439 = vunpack.c.h.b16 %v268
      %v440 = vunpack.c.l.b16 %v269
      %v441 = vunpack.c.h.b16 %v269
      %v442 = vunpack.c.l.b16 %v270
      %v443 = vunpack.c.h.b16 %v270
      %v444 = vunpack.c.l.b16 %v271
      %v445 = vunpack.c.h.b16 %v271
      %v446 = vunpack.c.l.b16 %v272
      %v447 = vunpack.c.h.b16 %v272
      %v448 = vunpack.c.l.b16 %v273
      %v449 = vunpack.c.h.b16 %v273
      %v450 = vunpack.c.l.b16 %v274
      %v451 = vunpack.c.h.b16 %v274
      %v452 = vunpack.c.l.b16 %v275
      %v453 = vunpack.c.h.b16 %v275
      %v454 = vunpack.c.l.b16 %v276
      %v455 = vunpack.c.h.b16 %v276
      %v456 = vunpack.c.l.b16 %v277
      %v457 = vunpack.c.h.b16 %v277
      %v458 = vunpack.c.l.b16 %v278
      %v459 = vunpack.c.h.b16 %v278
      %v460 = vunpack.c.l.b16 %v279
      %v461 = vunpack.c.h.b16 %v279
      %v462 = vunpack.c.l.b16 %v280
      %v463 = vunpack.c.h.b16 %v280
      %v464 = vunpack.c.l.b16 %v281
      %v465 = vunpack.c.h.b16 %v281
      %v466 = vunpack.c.l.b16 %v282
      %v467 = vunpack.c.h.b16 %v282
      %v468 = vunpack.c.l.b16 %v283
      %v469 = vunpack.c.h.b16 %v283
      %v470 = vunpack.c.l.b16 %v284
      %v471 = vunpack.c.h.b16 %v284
      %v472 = vunpack.c.l.b16 %v285
      %v473 = vunpack.c.h.b16 %v285
      %v474 = vunpack.c.l.b16 %v286
      %v475 = vunpack.c.h.b16 %v286
      %v476 = vunpack.c.l.b16 %v287
      %v477 = vunpack.c.h.b16 %v287
      %v478 = vunpack.c.l.b16 %v288
      %v479 = vunpack.c.h.b16 %v288
      %v480 = vunpack.c.l.b16 %v289
      %v481 = vunpack.c.h.b16 %v289
      %v482 = vunpack.c.l.b16 %v290
      %v483 = vunpack.c.h.b16 %v290
      %v484 = vunpack.c.l.b16 %v291
      %v485 = vunpack.c.h.b16 %v291
      %v486 = vunpack.c.l.b16 %v292
      %v487 = vunpack.c.h.b16 %v292
      %v488 = vunpack.c.l.b16 %v293
      %v489 = vunpack.c.h.b16 %v293
      %v490 = vunpack.c.l.b16 %v294
      %v491 = vunpack.c.h.b16 %v294
      %v492 = vunpack.c.l.b16 %v295
      %v493 = vunpack.c.h.b16 %v295
      %v494 = vunpack.c.l.b16 %v296
      %v495 = vunpack.c.h.b16 %v296
      %v496 = vunpack.c.l.b16 %v297
      %v497 = vunpack.c.h.b16 %v297
      %v498 = vunpack.c.l.b16 %v298
      %v499 = vunpack.c.h.b16 %v298
      %v500 = vunpack.c.l.b16 %v299
      %v501 = vunpack.c.h.b16 %v299
      %v502 = vunpack.c.l.b16 %v300
      %v503 = vunpack.c.h.b16 %v300
      %v504 = vunpack.c.l.b16 %v301
      %v505 = vunpack.c.h.b16 %v301
      %v506 = vunpack.c.l.b16 %v302
      %v507 = vunpack.c.h.b16 %v302
      %v508 = vunpack.c.l.b16 %v303
      %v509 = vunpack.c.h.b16 %v303
      %v510 = vunpack.c.l.b16 %v304
      %v511 = vunpack.c.h.b16 %v304
      %v512 = vunpack.c.l.b16 %v305
      %v513 = vunpack.c.h.b16 %v305
      %v514 = vunpack.c.l.b16 %v306
      %v515 = vunpack.c.h.b16 %v306
      %v516 = vpack.c.b16 %v392, %v388
      %v517 = vpack.c.b16 %v393, %v389
      %v518 = vpack.c.b16 %v394, %v390
      %v519 = vpack.c.b16 %v395, %v391
      %v520 = vpack.c.b16 %v400, %v396
      %v521 = vpack.c.b16 %v401, %v397
      %v522 = vpack.c.b16 %v402, %v398
      %v523 = vpack.c.b16 %v403, %v399
      %v524 = vpack.c.b16 %v408, %v404
      %v525 = vpack.c.b16 %v409, %v405
      %v526 = vpack.c.b16 %v410, %v406
      %v527 = vpack.c.b16 %v411, %v407
      %v528 = vpack.c.b16 %v416, %v412
      %v529 = vpack.c.b16 %v417, %v413
      %v530 = vpack.c.b16 %v418, %v414
      %v531 = vpack.c.b16 %v419, %v415
      %v532 = vpack.c.b16 %v424, %v420
      %v533 = vpack.c.b16 %v425, %v421
      %v534 = vpack.c.b16 %v426, %v422
      %v535 = vpack.c.b16 %v427, %v423
      %v536 = vpack.c.b16 %v432, %v428
      %v537 = vpack.c.b16 %v433, %v429
      %v538 = vpack.c.b16 %v434, %v430
      %v539 = vpack.c.b16 %v435, %v431
      %v540 = vpack.c.b16 %v440, %v436
      %v541 = vpack.c.b16 %v441, %v437
      %v542 = vpack.c.b16 %v442, %v438
      %v543 = vpack.c.b16 %v443, %v439
      %v544 = vpack.c.b16 %v448, %v444
      %v545 = vpack.c.b16 %v449, %v445
      %v546 = vpack.c.b16 %v450, %v446
      %v547 = vpack.c.b16 %v451, %v447
      %v548 = vpack.c.b16 %v456, %v452
      %v549 = vpack.c.b16 %v457, %v453
      %v550 = vpack.c.b16 %v458, %v454
      %v551 = vpack.c.b16 %v459, %v455
      %v552 = vpack.c.b16 %v464, %v460
      %v553 = vpack.c.b16 %v465, %v461
      %v554 = vpack.c.b16 %v466, %v462
      %v555 = vpack.c.b16 %v467, %v463
      %v556 = vpack.c.b16 %v472, %v468
      %v557 = vpack.c.b16 %v473, %v469
      %v558 = vpack.c.b16 %v474, %v470
      %v559 = vpack.c.b16 %v475, %v471
      %v560 = vpack.c.b16 %v480, %v476
      %v561 = vpack.c.b16 %v481, %v477
      %v562 = vpack.c.b16 %v482, %v478
      %v563 = vpack.c.b16 %v483, %v479
      %v564 = vpack.c.b16 %v488, %v484
      %v565 = vpack.c.b16 %v489, %v485
      %v566 = vpack.c.b16 %v490, %v486
      %v567 = vpack.c.b16 %v491, %v487
      %v568 = vpack.c.b16 %v496, %v492
      %v569 = vpack.c.b16 %v497, %v493
      %v570 = vpack.c.b16 %v498, %v494
      %v571 = vpack.c.b16 %v499, %v495
      %v572 = vpack.c.b16 %v504, %v500
      %v573 = vpack.c.b16 %v505, %v501
      %v574 = vpack.c.b16 %v506, %v502
      %v575 = vpack.c.b16 %v507, %v503
      %v576 = vpack.c.b16 %v512, %v508
      %v577 = vpack.c.b16 %v513, %v509
      %v578 = vpack.c.b16 %v514, %v510
      %v579 = vpack.c.b16 %v515, %v511
      %644 = vmatpush.bf16.msra.mxu0 %v544
      %645 = vmatpush.bf16.msra.mxu0 %v540
      %646 = vmatpush.bf16.msra.mxu0 %v536
      %647 = vmatpush.bf16.msra.mxu0 %v532
      %648 = vmatpush.bf16.msra.mxu0 %v528
      %649 = vmatpush.bf16.msra.mxu0 %v524
      %650 = vmatpush.bf16.msra.mxu0 %v520
      %651 = vmatpush.bf16.msra.mxu0 %v516
      %652 = vmatmul.bf16.gmra.mxu0 %v320
      %v653 = vpop.f32.mrf.mxu0
      %v654 = vadd.f32 %v309, %v653
      %v655 = vpop.f32.mrf.mxu0
      %656 = vdwg.mxu0
      %657 = vmatpush.bf16.msra.mxu0 %v576
      %658 = vmatpush.bf16.msra.mxu0 %v572
      %659 = vmatpush.bf16.msra.mxu0 %v568
      %660 = vmatpush.bf16.msra.mxu0 %v564
      %661 = vmatpush.bf16.msra.mxu0 %v560
      %662 = vmatpush.bf16.msra.mxu0 %v556
      %663 = vmatpush.bf16.msra.mxu0 %v552
      %664 = vmatpush.bf16.msra.mxu0 %v548
      %665 = vmatmul.bf16.gmra.mxu0 %v321
      %v666 = vpop.f32.mrf.mxu0
      %v667 = vadd.f32 %v654, %v666
      %v668 = vpop.f32.mrf.mxu0
      %669 = vdwg.mxu0
      %670 = vmatpush.bf16.msra.mxu0 %v545
      %671 = vmatpush.bf16.msra.mxu0 %v541
      %672 = vmatpush.bf16.msra.mxu0 %v537
      %673 = vmatpush.bf16.msra.mxu0 %v533
      %674 = vmatpush.bf16.msra.mxu0 %v529
      %675 = vmatpush.bf16.msra.mxu0 %v525
      %676 = vmatpush.bf16.msra.mxu0 %v521
      %677 = vmatpush.bf16.msra.mxu0 %v517
      %678 = vmatmul.bf16.gmra.mxu0 %v320
      %v679 = vpop.f32.mrf.mxu0
      %v680 = vadd.f32 %v310, %v679
      %v681 = vpop.f32.mrf.mxu0
      %682 = vdwg.mxu0
      %683 = vmatpush.bf16.msra.mxu0 %v577
      %684 = vmatpush.bf16.msra.mxu0 %v573
      %685 = vmatpush.bf16.msra.mxu0 %v569
      %686 = vmatpush.bf16.msra.mxu0 %v565
      %687 = vmatpush.bf16.msra.mxu0 %v561
      %688 = vmatpush.bf16.msra.mxu0 %v557
      %689 = vmatpush.bf16.msra.mxu0 %v553
      %690 = vmatpush.bf16.msra.mxu0 %v549
      %691 = vmatmul.bf16.gmra.mxu0 %v321
      %v692 = vpop.f32.mrf.mxu0
      %v693 = vadd.f32 %v680, %v692
      %v694 = vpop.f32.mrf.mxu0
      %695 = vdwg.mxu0
      %696 = vmatpush.bf16.msra.mxu0 %v546
      %697 = vmatpush.bf16.msra.mxu0 %v542
      %698 = vmatpush.bf16.msra.mxu0 %v538
      %699 = vmatpush.bf16.msra.mxu0 %v534
      %700 = vmatpush.bf16.msra.mxu0 %v530
      %701 = vmatpush.bf16.msra.mxu0 %v526
      %702 = vmatpush.bf16.msra.mxu0 %v522
      %703 = vmatpush.bf16.msra.mxu0 %v518
      %704 = vmatmul.bf16.gmra.mxu0 %v320
      %v705 = vpop.f32.mrf.mxu0
      %v706 = vadd.f32 %v311, %v705
      %v707 = vpop.f32.mrf.mxu0
      %708 = vdwg.mxu0
      %709 = vmatpush.bf16.msra.mxu0 %v578
      %710 = vmatpush.bf16.msra.mxu0 %v574
      %711 = vmatpush.bf16.msra.mxu0 %v570
      %712 = vmatpush.bf16.msra.mxu0 %v566
      %713 = vmatpush.bf16.msra.mxu0 %v562
      %714 = vmatpush.bf16.msra.mxu0 %v558
      %715 = vmatpush.bf16.msra.mxu0 %v554
      %716 = vmatpush.bf16.msra.mxu0 %v550
      %717 = vmatmul.bf16.gmra.mxu0 %v321
      %v718 = vpop.f32.mrf.mxu0
      %v719 = vadd.f32 %v706, %v718
      %v720 = vpop.f32.mrf.mxu0
      %721 = vdwg.mxu0
      %722 = vmatpush.bf16.msra.mxu0 %v547
      %723 = vmatpush.bf16.msra.mxu0 %v543
      %724 = vmatpush.bf16.msra.mxu0 %v539
      %725 = vmatpush.bf16.msra.mxu0 %v535
      %726 = vmatpush.bf16.msra.mxu0 %v531
      %727 = vmatpush.bf16.msra.mxu0 %v527
      %728 = vmatpush.bf16.msra.mxu0 %v523
      %729 = vmatpush.bf16.msra.mxu0 %v519
      %730 = vmatmul.bf16.gmra.mxu0 %v320
      %v731 = vpop.f32.mrf.mxu0
      %v732 = vadd.f32 %v312, %v731
      %v733 = vpop.f32.mrf.mxu0
      %734 = vdwg.mxu0
      %735 = vmatpush.bf16.msra.mxu0 %v579
      %736 = vmatpush.bf16.msra.mxu0 %v575
      %737 = vmatpush.bf16.msra.mxu0 %v571
      %738 = vmatpush.bf16.msra.mxu0 %v567
      %739 = vmatpush.bf16.msra.mxu0 %v563
      %740 = vmatpush.bf16.msra.mxu0 %v559
      %741 = vmatpush.bf16.msra.mxu0 %v555
      %742 = vmatpush.bf16.msra.mxu0 %v551
      %743 = vmatmul.bf16.gmra.mxu0 %v321
      %v744 = vpop.f32.mrf.mxu0
      %v745 = vadd.f32 %v732, %v744
      %v746 = vpop.f32.mrf.mxu0
      %747 = vdwg.mxu0
      %v748 = vld [vmem:[%s236] sm:$0xff]
      %vm749 = vcmp.eq.s32.totalorder %v748, 0
      %v750 = vsel %vm749, 1.0, 0.0
      %v751 = vld [vmem:[%s3] ss:$4 sm:$0xf]
      %753 = vset.pattern.permute.xlu0 0
      %754 = vperm.xlu0 %753, %v750
      %v755 = vpop.permute.xlu0 %754
      %v758 = vperm.slane %v751, 0
      %v759 = vperm.slane %v751, 1
      %v760 = vperm.slane %v751, 2
      %v761 = vperm.slane %v751, 3
      %v766 = vmul.f32 %v755, %v758
      %v767 = vmul.f32 %v755, %v759
      %v768 = vmul.f32 %v755, %v760
      %v769 = vmul.f32 %v755, %v761
      %v770 = vadd.f32 %v667, %v766
      %v771 = vadd.f32 %v693, %v767
      %v772 = vadd.f32 %v719, %v768
      %v773 = vadd.f32 %v745, %v769
      %vm774 = vcmp.eq.s32.totalorder %v748, 1
      %v775 = vsel %vm774, 1.0, 0.0
      %s776 = scalar_lea.vmem %s3, 1
      %v777 = vld [vmem:[%s776] ss:$4 sm:$0xf]
      %779 = vset.pattern.permute.xlu0 0
      %780 = vperm.xlu0 %779, %v775
      %v781 = vpop.permute.xlu0 %780
      %v784 = vperm.slane %v777, 0
      %v785 = vperm.slane %v777, 1
      %v786 = vperm.slane %v777, 2
      %v787 = vperm.slane %v777, 3
      %v792 = vmul.f32 %v781, %v784
      %v793 = vmul.f32 %v781, %v785
      %v794 = vmul.f32 %v781, %v786
      %v795 = vmul.f32 %v781, %v787
      %v796 = vadd.f32 %v770, %v792
      %v797 = vadd.f32 %v771, %v793
      %v798 = vadd.f32 %v772, %v794
      %v799 = vadd.f32 %v773, %v795
      %vm800 = vcmp.eq.s32.totalorder %v748, 2
      %v801 = vsel %vm800, 1.0, 0.0
      %s802 = scalar_lea.vmem %s3, 2
      %v803 = vld [vmem:[%s802] ss:$4 sm:$0xf]
      %805 = vset.pattern.permute.xlu0 0
      %806 = vperm.xlu0 %805, %v801
      %v807 = vpop.permute.xlu0 %806
      %v810 = vperm.slane %v803, 0
      %v811 = vperm.slane %v803, 1
      %v812 = vperm.slane %v803, 2
      %v813 = vperm.slane %v803, 3
      %v818 = vmul.f32 %v807, %v810
      %v819 = vmul.f32 %v807, %v811
      %v820 = vmul.f32 %v807, %v812
      %v821 = vmul.f32 %v807, %v813
      %v822 = vadd.f32 %v796, %v818
      %v823 = vadd.f32 %v797, %v819
      %v824 = vadd.f32 %v798, %v820
      %v825 = vadd.f32 %v799, %v821
      %vm826 = vcmp.eq.s32.totalorder %v748, 3
      %v827 = vsel %vm826, 1.0, 0.0
      %s828 = scalar_lea.vmem %s3, 3
      %v829 = vld [vmem:[%s828] ss:$4 sm:$0xf]
      %831 = vset.pattern.permute.xlu0 0
      %832 = vperm.xlu0 %831, %v827
      %v833 = vpop.permute.xlu0 %832
      %v836 = vperm.slane %v829, 0
      %v837 = vperm.slane %v829, 1
      %v838 = vperm.slane %v829, 2
      %v839 = vperm.slane %v829, 3
      %v844 = vmul.f32 %v833, %v836
      %v845 = vmul.f32 %v833, %v837
      %v846 = vmul.f32 %v833, %v838
      %v847 = vmul.f32 %v833, %v839
      %v848 = vadd.f32 %v822, %v844
      %v849 = vadd.f32 %v823, %v845
      %v850 = vadd.f32 %v824, %v846
      %v851 = vadd.f32 %v825, %v847
      %852 = vst [vmem:[%s241] sm:$0xff] %v848
      %853 = vst [vmem:[%s241 + $0x8] sm:$0xff] %v849
      %854 = vst [vmem:[%s241 + $0x10] sm:$0xff] %v850
      %855 = vst [vmem:[%s241 + $0x18] sm:$0xff] %v851
      %p856 = scmp.lt.s32.totalorder %s16, 2
      %s857 = scalar_select %p856, %s16, 2
      %s858 = smul.addr %s857, 4
      %s859 = smul.addr %s858, 8
      %s860 = scalar_lea.vmem %s5, %s859
      // Predicated region
      $region41: #{vit_masked_encoder_with_meta_head_forward.2} parent=39 // pred_check
        %p861 = pneg %p149
      $region42: #{vit_masked_encoder_with_meta_head_forward.2} parent=39 // pred_check_branch
        %863 = sbr.rel (%p861) target = $region44
      $region43: #{vit_masked_encoder_with_meta_head_forward.2} parent=39 // pred_region
        _
      $region44: #{vit_masked_encoder_with_meta_head_forward.2} parent=39 // pred_fallthru
        _
    $region40: #{vit_masked_encoder_with_meta_head_forward.2} parent=5 // pred_fallthru
      _
    %p864 = scmp.le.s32.totalorder 2, %s11
    // Predicated region
    $region45: #{vit_masked_encoder_with_meta_head_forward.2} parent=5 // pred_check
      %p865 = pneg %p864
    $region46: #{vit_masked_encoder_with_meta_head_forward.2} parent=5 // pred_check_branch
      %867 = sbr.rel (%p865) target = $region48
    $region47: #{vit_masked_encoder_with_meta_head_forward.2} parent=5 // pred_region
      %s868 = ssub.s32 %s11, 2
      // Predicated region
      $region49: #{vit_masked_encoder_with_meta_head_forward.2} parent=47 // pred_check
        %p869 = pneg %p155
      $region50: #{vit_masked_encoder_with_meta_head_forward.2} parent=47 // pred_check_branch
        %871 = sbr.rel (%p869) target = $region52
      $region51: #{vit_masked_encoder_with_meta_head_forward.2} parent=47 // pred_region
        %p872 = scmp.lt.s32.totalorder %s17, 2
        %s873 = scalar_select %p872, %s17, 2
        %s874 = smul.addr %s873, 4
        %s875 = smul.addr %s874, 8
        %s876 = scalar_lea.vmem %s5, %s875
      $region52: #{vit_masked_encoder_with_meta_head_forward.2} parent=47 // pred_fallthru
        _
    $region48: #{vit_masked_encoder_with_meta_head_forward.2} parent=5 // pred_fallthru
      _
  $region6: #{vit_masked_encoder_with_meta_head_forward.2} parent=0 // loop_footer
    %s15 = sadd.s32 1, %s11
  $region7: #{vit_masked_encoder_with_meta_head_forward.2} parent=0 // loop_footer_branch
    %10 = sbr.rel target = $region3
  $region8: #{vit_masked_encoder_with_meta_head_forward.2} parent=0 // loop_exit
    _

// kernel: vit_masked_encoder_with_meta_head_forward.3
$region0: #{vit_masked_encoder_with_meta_head_forward.3}
  #allocation0 [shape = 'u32[]', space=smem, size = 0x4, offset = 0x4, fixed_abs, tag = 'smem constant byte address 0x4 - core index']
  #allocation1 [shape = 'u32[72,128]{1,0:T(1,128)}', space=vmem, size = 0x9000, scoped, tag = 'internal scratch']
  #allocation2 [shape = 'f32[2,128]{1,0:T(2,128)}', space=vmem, size = 0x400, scoped, tag = 'scratch operand']
  #allocation3 [shape = 'f32[2,128]{1,0:T(2,128)}', space=vmem, size = 0x400, scoped, tag = 'scratch operand']
  #allocation4 [shape = 'f32[2,4]{1,0:T(2,128)}', space=vmem, size = 0x400, scoped, tag = 'scratch operand']
  #allocation5 [shape = 'f32[2,4]{1,0:T(2,128)}', space=vmem, size = 0x400, scoped, tag = 'scratch operand']
  %s0 = inlined_call_operand.vmem [shape: f32[12,2,512], index: 0, kind: input, shape index: {}]
  %s1 = inlined_call_operand.vmem [shape: bf16[128,512], index: 1, kind: input, shape index: {}]
  %s2 = inlined_call_operand.vmem [shape: bf16[132,16], index: 2, kind: input, shape index: {}]
  %s3 = inlined_call_operand.vmem [shape: f32[1,16], index: 3, kind: input, shape index: {}]
  %s4 = inlined_call_operand.vmem [shape: f32[12,2,4], index: 4, kind: output, shape index: {}]
  %s5 = sld [smem:[#allocation0]]
  $region30: #{vit_masked_encoder_with_meta_head_forward.3} parent=0
    _
  %s7 = ssub.s32 1, %s5
  %s8 = scalar_select 0, %s7, %s5
  // Predicated region
  $region2: #{vit_masked_encoder_with_meta_head_forward.3} parent=0 // pred_check
    _
  $region3: #{vit_masked_encoder_with_meta_head_forward.3} parent=0 // pred_check_branch
    %10 = sbr.rel (0) target = $region5
  $region4: #{vit_masked_encoder_with_meta_head_forward.3} parent=0 // pred_region
    _
  $region5: #{vit_masked_encoder_with_meta_head_forward.3} parent=0 // pred_fallthru
    _
  // Predicated region
  $region6: #{vit_masked_encoder_with_meta_head_forward.3} parent=0 // pred_check
    _
  $region7: #{vit_masked_encoder_with_meta_head_forward.3} parent=0 // pred_check_branch
    %12 = sbr.rel (0) target = $region9
  $region8: #{vit_masked_encoder_with_meta_head_forward.3} parent=0 // pred_region
    _
  $region9: #{vit_masked_encoder_with_meta_head_forward.3} parent=0 // pred_fallthru
    _
  // Predicated region
  $region10: #{vit_masked_encoder_with_meta_head_forward.3} parent=0 // pred_check
    _
  $region11: #{vit_masked_encoder_with_meta_head_forward.3} parent=0 // pred_check_branch
    %14 = sbr.rel (0) target = $region13
  $region12: #{vit_masked_encoder_with_meta_head_forward.3} parent=0 // pred_region
    _
  $region13: #{vit_masked_encoder_with_meta_head_forward.3} parent=0 // pred_fallthru
    _
  // Predicated region
  $region14: #{vit_masked_encoder_with_meta_head_forward.3} parent=0 // pred_check
    _
  $region15: #{vit_masked_encoder_with_meta_head_forward.3} parent=0 // pred_check_branch
    %16 = sbr.rel (0) target = $region17
  $region16: #{vit_masked_encoder_with_meta_head_forward.3} parent=0 // pred_region
    _
  $region17: #{vit_masked_encoder_with_meta_head_forward.3} parent=0 // pred_fallthru
    _
  %p18 = scmp.eq.s32.totalorder 0, 0
  // Predicated region
  $region18: #{vit_masked_encoder_with_meta_head_forward.3} parent=0 // pred_check
    %p19 = pneg %p18
  $region19: #{vit_masked_encoder_with_meta_head_forward.3} parent=0 // pred_check_branch
    %21 = sbr.rel (%p19) target = $region21
  $region20: #{vit_masked_encoder_with_meta_head_forward.3} parent=0 // pred_region
    %22 = vst [vmem:[#allocation2] sm:$0x3] 0.0
    %23 = vst [vmem:[#allocation3] sm:$0x3] 0.0
    %vm24 = vcmask 25600
    %25 = vst.msk [vmem:[#allocation4] sm:$0x3] %vm24, 0.0
    %26 = vst.msk [vmem:[#allocation5] sm:$0x3] %vm24, 0.0
  $region21: #{vit_masked_encoder_with_meta_head_forward.3} parent=0 // pred_fallthru
    _
  %v27 = vld [vmem:[%s1] sm:$0xff]
  %v28 = vld [vmem:[%s1 + $0x8] sm:$0xff]
  %v29 = vld [vmem:[%s1 + $0x10] sm:$0xff]
  %v30 = vld [vmem:[%s1 + $0x18] sm:$0xff]
  %v31 = vld [vmem:[%s1 + $0x20] sm:$0xff]
  %v32 = vld [vmem:[%s1 + $0x28] sm:$0xff]
  %v33 = vld [vmem:[%s1 + $0x30] sm:$0xff]
  %v34 = vld [vmem:[%s1 + $0x38] sm:$0xff]
  %v35 = vld [vmem:[%s1 + $0x40] sm:$0xff]
  %v36 = vld [vmem:[%s1 + $0x48] sm:$0xff]
  %v37 = vld [vmem:[%s1 + $0x50] sm:$0xff]
  %v38 = vld [vmem:[%s1 + $0x58] sm:$0xff]
  %v39 = vld [vmem:[%s1 + $0x60] sm:$0xff]
  %v40 = vld [vmem:[%s1 + $0x68] sm:$0xff]
  %v41 = vld [vmem:[%s1 + $0x70] sm:$0xff]
  %v42 = vld [vmem:[%s1 + $0x78] sm:$0xff]
  %v43 = vld [vmem:[%s1 + $0x80] sm:$0xff]
  %v44 = vld [vmem:[%s1 + $0x88] sm:$0xff]
  %v45 = vld [vmem:[%s1 + $0x90] sm:$0xff]
  %v46 = vld [vmem:[%s1 + $0x98] sm:$0xff]
  %v47 = vld [vmem:[%s1 + $0xa0] sm:$0xff]
  %v48 = vld [vmem:[%s1 + $0xa8] sm:$0xff]
  %v49 = vld [vmem:[%s1 + $0xb0] sm:$0xff]
  %v50 = vld [vmem:[%s1 + $0xb8] sm:$0xff]
  %v51 = vld [vmem:[%s1 + $0xc0] sm:$0xff]
  %v52 = vld [vmem:[%s1 + $0xc8] sm:$0xff]
  %v53 = vld [vmem:[%s1 + $0xd0] sm:$0xff]
  %v54 = vld [vmem:[%s1 + $0xd8] sm:$0xff]
  %v55 = vld [vmem:[%s1 + $0xe0] sm:$0xff]
  %v56 = vld [vmem:[%s1 + $0xe8] sm:$0xff]
  %v57 = vld [vmem:[%s1 + $0xf0] sm:$0xff]
  %v58 = vld [vmem:[%s1 + $0xf8] sm:$0xff]
  %v59 = vld [vmem:[%s2] sm:$0xf]
  %v60 = vld [vmem:[%s2 + $0x4] sm:$0xf]
  %v61 = vld [vmem:[%s2 + $0x8] sm:$0xf]
  %v62 = vld [vmem:[%s2 + $0xc] sm:$0xf]
  %v63 = vld [vmem:[%s2 + $0x10] sm:$0xf]
  %v64 = vld [vmem:[%s2 + $0x14] sm:$0xf]
  %v65 = vld [vmem:[%s2 + $0x18] sm:$0xf]
  %v66 = vld [vmem:[%s2 + $0x1c] sm:$0xf]
  %v67 = vld [vmem:[%s2 + $0x20] sm:$0xf]
  %v68 = vld [vmem:[%s2 + $0x24] sm:$0xf]
  %v69 = vld [vmem:[%s2 + $0x28] sm:$0xf]
  %v70 = vld [vmem:[%s2 + $0x2c] sm:$0xf]
  %v71 = vld [vmem:[%s2 + $0x30] sm:$0xf]
  %v72 = vld [vmem:[%s2 + $0x34] sm:$0xf]
  %v73 = vld [vmem:[%s2 + $0x38] sm:$0xf]
  %v74 = vld [vmem:[%s2 + $0x3c] sm:$0xf]
  %v75 = vld [vmem:[%s2 + $0x40] sm:$0x3]
  %v76 = vld [vmem:[%s3] sm:$0x1]
  %v78 = vperm.slane %v76, 0
  %v80 = vld [vmem:[#allocation2] sm:$0x3]
  %v81 = vld [vmem:[#allocation3] sm:$0x3]
  %v82 = vld [vmem:[#allocation4] sm:$0x3]
  %v83 = vld [vmem:[#allocation5] sm:$0x3]
  %v84 = vld [vmem:[%s0] sm:$0xff]
  %v85 = vpack.c.bf16 %v80, %v80
  %v118 = vunpack.c.l.b16 %v27
  %v119 = vunpack.c.h.b16 %v27
  %v120 = vunpack.c.l.b16 %v28
  %v121 = vunpack.c.h.b16 %v28
  %v122 = vunpack.c.l.b16 %v29
  %v123 = vunpack.c.h.b16 %v29
  %v124 = vunpack.c.l.b16 %v30
  %v125 = vunpack.c.h.b16 %v30
  %v126 = vunpack.c.l.b16 %v31
  %v127 = vunpack.c.h.b16 %v31
  %v128 = vunpack.c.l.b16 %v32
  %v129 = vunpack.c.h.b16 %v32
  %v130 = vunpack.c.l.b16 %v33
  %v131 = vunpack.c.h.b16 %v33
  %v132 = vunpack.c.l.b16 %v34
  %v133 = vunpack.c.h.b16 %v34
  %v134 = vunpack.c.l.b16 %v35
  %v135 = vunpack.c.h.b16 %v35
  %v136 = vunpack.c.l.b16 %v36
  %v137 = vunpack.c.h.b16 %v36
  %v138 = vunpack.c.l.b16 %v37
  %v139 = vunpack.c.h.b16 %v37
  %v140 = vunpack.c.l.b16 %v38
  %v141 = vunpack.c.h.b16 %v38
  %v142 = vunpack.c.l.b16 %v39
  %v143 = vunpack.c.h.b16 %v39
  %v144 = vunpack.c.l.b16 %v40
  %v145 = vunpack.c.h.b16 %v40
  %v146 = vunpack.c.l.b16 %v41
  %v147 = vunpack.c.h.b16 %v41
  %v148 = vunpack.c.l.b16 %v42
  %v149 = vunpack.c.h.b16 %v42
  %v150 = vunpack.c.l.b16 %v43
  %v151 = vunpack.c.h.b16 %v43
  %v152 = vunpack.c.l.b16 %v44
  %v153 = vunpack.c.h.b16 %v44
  %v154 = vunpack.c.l.b16 %v45
  %v155 = vunpack.c.h.b16 %v45
  %v156 = vunpack.c.l.b16 %v46
  %v157 = vunpack.c.h.b16 %v46
  %v158 = vunpack.c.l.b16 %v47
  %v159 = vunpack.c.h.b16 %v47
  %v160 = vunpack.c.l.b16 %v48
  %v161 = vunpack.c.h.b16 %v48
  %v162 = vunpack.c.l.b16 %v49
  %v163 = vunpack.c.h.b16 %v49
  %v164 = vunpack.c.l.b16 %v50
  %v165 = vunpack.c.h.b16 %v50
  %v166 = vunpack.c.l.b16 %v51
  %v167 = vunpack.c.h.b16 %v51
  %v168 = vunpack.c.l.b16 %v52
  %v169 = vunpack.c.h.b16 %v52
  %v170 = vunpack.c.l.b16 %v53
  %v171 = vunpack.c.h.b16 %v53
  %v172 = vunpack.c.l.b16 %v54
  %v173 = vunpack.c.h.b16 %v54
  %v174 = vunpack.c.l.b16 %v55
  %v175 = vunpack.c.h.b16 %v55
  %v176 = vunpack.c.l.b16 %v56
  %v177 = vunpack.c.h.b16 %v56
  %v178 = vunpack.c.l.b16 %v57
  %v179 = vunpack.c.h.b16 %v57
  %v180 = vunpack.c.l.b16 %v58
  %v181 = vunpack.c.h.b16 %v58
  %v182 = vpack.c.b16 %v122, %v118
  %v183 = vpack.c.b16 %v123, %v119
  %v184 = vpack.c.b16 %v124, %v120
  %v185 = vpack.c.b16 %v125, %v121
  %v186 = vpack.c.b16 %v130, %v126
  %v187 = vpack.c.b16 %v131, %v127
  %v188 = vpack.c.b16 %v132, %v128
  %v189 = vpack.c.b16 %v133, %v129
  %v190 = vpack.c.b16 %v138, %v134
  %v191 = vpack.c.b16 %v139, %v135
  %v192 = vpack.c.b16 %v140, %v136
  %v193 = vpack.c.b16 %v141, %v137
  %v194 = vpack.c.b16 %v146, %v142
  %v195 = vpack.c.b16 %v147, %v143
  %v196 = vpack.c.b16 %v148, %v144
  %v197 = vpack.c.b16 %v149, %v145
  %v198 = vpack.c.b16 %v154, %v150
  %v199 = vpack.c.b16 %v155, %v151
  %v200 = vpack.c.b16 %v156, %v152
  %v201 = vpack.c.b16 %v157, %v153
  %v202 = vpack.c.b16 %v162, %v158
  %v203 = vpack.c.b16 %v163, %v159
  %v204 = vpack.c.b16 %v164, %v160
  %v205 = vpack.c.b16 %v165, %v161
  %v206 = vpack.c.b16 %v170, %v166
  %v207 = vpack.c.b16 %v171, %v167
  %v208 = vpack.c.b16 %v172, %v168
  %v209 = vpack.c.b16 %v173, %v169
  %v210 = vpack.c.b16 %v178, %v174
  %v211 = vpack.c.b16 %v179, %v175
  %v212 = vpack.c.b16 %v180, %v176
  %v213 = vpack.c.b16 %v181, %v177
  %246 = vmatpush.bf16.msra.mxu0 %v210
  %247 = vmatpush.bf16.msra.mxu0 %v206
  %248 = vmatpush.bf16.msra.mxu0 %v202
  %249 = vmatpush.bf16.msra.mxu0 %v198
  %250 = vmatpush.bf16.msra.mxu0 %v194
  %251 = vmatpush.bf16.msra.mxu0 %v190
  %252 = vmatpush.bf16.msra.mxu0 %v186
  %253 = vmatpush.bf16.msra.mxu0 %v182
  %254 = vmatmul.bf16.gmra.mxu0 %v85
  %v255 = vpop.f32.mrf.mxu0
  %v256 = vadd.f32 0.0, %v255
  %v257 = vpop.f32.mrf.mxu0
  %258 = vdwg.mxu0
  %259 = vmatpush.bf16.msra.mxu0 %v211
  %260 = vmatpush.bf16.msra.mxu0 %v207
  %261 = vmatpush.bf16.msra.mxu0 %v203
  %262 = vmatpush.bf16.msra.mxu0 %v199
  %263 = vmatpush.bf16.msra.mxu0 %v195
  %264 = vmatpush.bf16.msra.mxu0 %v191
  %265 = vmatpush.bf16.msra.mxu0 %v187
  %266 = vmatpush.bf16.msra.mxu0 %v183
  %267 = vmatmul.bf16.gmra.mxu0 %v85
  %v268 = vpop.f32.mrf.mxu0
  %v269 = vadd.f32 0.0, %v268
  %v270 = vpop.f32.mrf.mxu0
  %271 = vdwg.mxu0
  %272 = vmatpush.bf16.msra.mxu0 %v212
  %273 = vmatpush.bf16.msra.mxu0 %v208
  %274 = vmatpush.bf16.msra.mxu0 %v204
  %275 = vmatpush.bf16.msra.mxu0 %v200
  %276 = vmatpush.bf16.msra.mxu0 %v196
  %277 = vmatpush.bf16.msra.mxu0 %v192
  %278 = vmatpush.bf16.msra.mxu0 %v188
  %279 = vmatpush.bf16.msra.mxu0 %v184
  %280 = vmatmul.bf16.gmra.mxu0 %v85
  %v281 = vpop.f32.mrf.mxu0
  %v282 = vadd.f32 0.0, %v281
  %v283 = vpop.f32.mrf.mxu0
  %284 = vdwg.mxu0
  %285 = vmatpush.bf16.msra.mxu0 %v213
  %286 = vmatpush.bf16.msra.mxu0 %v209
  %287 = vmatpush.bf16.msra.mxu0 %v205
  %288 = vmatpush.bf16.msra.mxu0 %v201
  %289 = vmatpush.bf16.msra.mxu0 %v197
  %290 = vmatpush.bf16.msra.mxu0 %v193
  %291 = vmatpush.bf16.msra.mxu0 %v189
  %292 = vmatpush.bf16.msra.mxu0 %v185
  %293 = vmatmul.bf16.gmra.mxu0 %v85
  %v294 = vpop.f32.mrf.mxu0
  %v295 = vadd.f32 0.0, %v294
  %v296 = vpop.f32.mrf.mxu0
  %297 = vdwg.mxu0
  %v302 = vrot.slane %v269, 6
  %v303 = vrot.slane %v282, 4
  %v304 = vrot.slane %v295, 2
  %vm305 = vcmask 1041408
  %v306 = vsel %vm305, %v256, %v302
  %vm307 = vcmask 1045508
  %v308 = vsel %vm307, %v303, %v304
  %vm309 = vcmask 1043456
  %v310 = vsel %vm309, %v306, %v308
  %v312 = vadd.f32 %v84, %v310
  %v313 = vxor.u32 %v312, 2147483648
  %v314 = vmul.f32 %v313, 1.442695
  %v315 = vpow.pop %v314
  %v316 = vadd.f32 %v315, 1.0
  %v317 = vrcp.pop %v316
  %v318 = vmul.f32 %v316, %v317
  %v319 = vsub.f32 1.0, %v318
  %v320 = vmul.f32 %v317, %v319
  %v321 = vadd.f32 %v317, %v320
  %vm322 = vweird.f32 %v316
  %vm323 = vweird.f32 %v317
  %vm324 = vmor %vm322, %vm323
  %v325 = vsel %vm324, %v317, %v321
  %v326 = vand.u32 2147483647, %v316
  %vm327 = vcmp.eq.f32.partialorder %v326, 8.507059e+37
  %v328 = vand.u32 %v316, 2147483648
  %v329 = vor.u32 1.1754944e-38, %v328
  %v330 = vsel %vm327, %v329, %v325
  %v331 = vmul.f32 1.0, %v330
  %v333 = vrot.slane %v312, 2
  %v335 = vxor.u32 %v333, 2147483648
  %v336 = vmul.f32 %v335, 1.442695
  %v337 = vpow.pop %v336
  %v338 = vadd.f32 %v337, 1.0
  %v339 = vrcp.pop %v338
  %v340 = vmul.f32 %v338, %v339
  %v341 = vsub.f32 1.0, %v340
  %v342 = vmul.f32 %v339, %v341
  %v343 = vadd.f32 %v339, %v342
  %vm344 = vweird.f32 %v338
  %vm345 = vweird.f32 %v339
  %vm346 = vmor %vm344, %vm345
  %v347 = vsel %vm346, %v339, %v343
  %v348 = vand.u32 2147483647, %v338
  %vm349 = vcmp.eq.f32.partialorder %v348, 8.507059e+37
  %v350 = vand.u32 %v338, 2147483648
  %v351 = vor.u32 1.1754944e-38, %v350
  %v352 = vsel %vm349, %v351, %v347
  %v353 = vmul.f32 1.0, %v352
  %v354 = vrot.slane %v312, 4
  %v356 = vtanh.pop %v354
  %v357 = vrot.slane %v312, 6
  %v359 = vxor.u32 %v357, 2147483648
  %v360 = vmul.f32 %v359, 1.442695
  %v361 = vpow.pop %v360
  %v362 = vadd.f32 %v361, 1.0
  %v363 = vrcp.pop %v362
  %v364 = vmul.f32 %v362, %v363
  %v365 = vsub.f32 1.0, %v364
  %v366 = vmul.f32 %v363, %v365
  %v367 = vadd.f32 %v363, %v366
  %vm368 = vweird.f32 %v362
  %vm369 = vweird.f32 %v363
  %vm370 = vmor %vm368, %vm369
  %v371 = vsel %vm370, %v363, %v367
  %v372 = vand.u32 2147483647, %v362
  %vm373 = vcmp.eq.f32.partialorder %v372, 8.507059e+37
  %v374 = vand.u32 %v362, 2147483648
  %v375 = vor.u32 1.1754944e-38, %v374
  %v376 = vsel %vm373, %v375, %v371
  %v377 = vmul.f32 1.0, %v376
  %v378 = vmul.f32 %v353, %v81
  %v379 = vmul.f32 %v331, %v356
  %v380 = vadd.f32 %v378, %v379
  %v381 = vtanh.pop %v380
  %v382 = vmul.f32 %v377, %v381
  %v383 = vpack.c.bf16 %v382, %v382
  %v384 = vpack.c.bf16 %v82, %v82
  %v402 = vunpack.c.l.b16 %v59
  %v403 = vunpack.c.l.b16 %v60
  %v404 = vunpack.c.l.b16 %v61
  %v405 = vunpack.c.l.b16 %v62
  %v406 = vunpack.c.l.b16 %v63
  %v407 = vunpack.c.l.b16 %v64
  %v408 = vunpack.c.l.b16 %v65
  %v409 = vunpack.c.l.b16 %v66
  %v410 = vunpack.c.l.b16 %v67
  %v411 = vunpack.c.l.b16 %v68
  %v412 = vunpack.c.l.b16 %v69
  %v413 = vunpack.c.l.b16 %v70
  %v414 = vunpack.c.l.b16 %v71
  %v415 = vunpack.c.l.b16 %v72
  %v416 = vunpack.c.l.b16 %v73
  %v417 = vunpack.c.l.b16 %v74
  %v418 = vunpack.c.l.b16 %v75
  %v419 = vpack.c.b16 %v403, %v402
  %v420 = vpack.c.b16 %v405, %v404
  %v421 = vpack.c.b16 %v407, %v406
  %v422 = vpack.c.b16 %v409, %v408
  %v423 = vpack.c.b16 %v411, %v410
  %v424 = vpack.c.b16 %v413, %v412
  %v425 = vpack.c.b16 %v415, %v414
  %v426 = vpack.c.b16 %v417, %v416
  %v427 = vpack.c.b16 %v418, %v418
  %vm436 = vcmask 31744
  %v438 = vsel %vm436, %v384, 0
  %v441 = vsel %vm305, %v427, 0
  %443 = vmatpush.bf16.msra.mxu0 %v426
  %444 = vmatpush.bf16.msra.mxu0 %v425
  %445 = vmatpush.bf16.msra.mxu0 %v424
  %446 = vmatpush.bf16.msra.mxu0 %v423
  %447 = vmatpush.bf16.msra.mxu0 %v422
  %448 = vmatpush.bf16.msra.mxu0 %v421
  %449 = vmatpush.bf16.msra.mxu0 %v420
  %450 = vmatpush.bf16.msra.mxu0 %v419
  %451 = vmatmul.bf16.gmra.mxu0 %v383
  %v452 = vpop.f32.mrf.mxu0
  %v453 = vadd.f32 %v78, %v452
  %v454 = vpop.f32.mrf.mxu0
  %455 = vdwg.mxu0
  %456 = vmatpush.bf16.msra.mxu0 0
  %457 = vmatpush.bf16.msra.mxu0 0
  %458 = vmatpush.bf16.msra.mxu0 0
  %459 = vmatpush.bf16.msra.mxu0 0
  %460 = vmatpush.bf16.msra.mxu0 0
  %461 = vmatpush.bf16.msra.mxu0 0
  %462 = vmatpush.bf16.msra.mxu0 0
  %463 = vmatpush.bf16.msra.mxu0 %v441
  %464 = vmatmul.bf16.gmra.mxu0 %v438
  %v465 = vpop.f32.mrf.mxu0
  %v466 = vadd.f32 %v453, %v465
  %v467 = vpop.f32.mrf.mxu0
  %468 = vdwg.mxu0
  %v469 = vxor.u32 %v466, 2147483648
  %v470 = vmul.f32 %v469, 1.442695
  %v471 = vpow.pop %v470
  %v472 = vadd.f32 %v471, 1.0
  %v473 = vrcp.pop %v472
  %v474 = vmul.f32 %v472, %v473
  %v475 = vsub.f32 1.0, %v474
  %v476 = vmul.f32 %v473, %v475
  %v477 = vadd.f32 %v473, %v476
  %vm478 = vweird.f32 %v472
  %vm479 = vweird.f32 %v473
  %vm480 = vmor %vm478, %vm479
  %v481 = vsel %vm480, %v473, %v477
  %v482 = vand.u32 2147483647, %v472
  %vm483 = vcmp.eq.f32.partialorder %v482, 8.507059e+37
  %v484 = vand.u32 %v472, 2147483648
  %v485 = vor.u32 1.1754944e-38, %v484
  %v486 = vsel %vm483, %v485, %v481
  %v487 = vmul.f32 1.0, %v486
  %v488 = vtanh.pop %v466
  %490 = vrot.lane.b32.xlu0 %v83, 4
  %v491 = vpop.permute.xlu0 %490
  %v493 = vmul.f32 %v487, %v491
  %495 = vrot.lane.b32.xlu0 %v488, 120
  %v496 = vpop.permute.xlu0 %495
  %v498 = vmul.f32 %v487, %v496
  %500 = vrot.lane.b32.xlu0 %v498, 4
  %v501 = vpop.permute.xlu0 %500
  %v503 = vadd.f32 %v493, %v501
  %v504 = vtanh.pop %v503
  %506 = vrot.lane.b32.xlu0 %v504, 8
  %v507 = vpop.permute.xlu0 %506
  %v509 = vmul.f32 %v487, %v507
  %511 = vrot.lane.b32.xlu0 %v509, 116
  %v512 = vpop.permute.xlu0 %511
  %vm514 = vcmask 25600
  %515 = vst.msk [vmem:[%s4] sm:$0x3] %vm514, %v512
  %s516 = scalar_lea.vmem %s0, 8
  %v517 = vld [vmem:[%s516] sm:$0xff]
  %518 = vmatpush.bf16.msra.mxu0 %v210
  %519 = vmatpush.bf16.msra.mxu0 %v206
  %520 = vmatpush.bf16.msra.mxu0 %v202
  %521 = vmatpush.bf16.msra.mxu0 %v198
  %522 = vmatpush.bf16.msra.mxu0 %v194
  %523 = vmatpush.bf16.msra.mxu0 %v190
  %524 = vmatpush.bf16.msra.mxu0 %v186
  %525 = vmatpush.bf16.msra.mxu0 %v182
  %526 = vmatmul.bf16.gmra.mxu0 %v383
  %v527 = vpop.f32.mrf.mxu0
  %v528 = vadd.f32 0.0, %v527
  %v529 = vpop.f32.mrf.mxu0
  %530 = vdwg.mxu0
  %531 = vmatpush.bf16.msra.mxu0 %v211
  %532 = vmatpush.bf16.msra.mxu0 %v207
  %533 = vmatpush.bf16.msra.mxu0 %v203
  %534 = vmatpush.bf16.msra.mxu0 %v199
  %535 = vmatpush.bf16.msra.mxu0 %v195
  %536 = vmatpush.bf16.msra.mxu0 %v191
  %537 = vmatpush.bf16.msra.mxu0 %v187
  %538 = vmatpush.bf16.msra.mxu0 %v183
  %539 = vmatmul.bf16.gmra.mxu0 %v383
  %v540 = vpop.f32.mrf.mxu0
  %v541 = vadd.f32 0.0, %v540
  %v542 = vpop.f32.mrf.mxu0
  %543 = vdwg.mxu0
  %544 = vmatpush.bf16.msra.mxu0 %v212
  %545 = vmatpush.bf16.msra.mxu0 %v208
  %546 = vmatpush.bf16.msra.mxu0 %v204
  %547 = vmatpush.bf16.msra.mxu0 %v200
  %548 = vmatpush.bf16.msra.mxu0 %v196
  %549 = vmatpush.bf16.msra.mxu0 %v192
  %550 = vmatpush.bf16.msra.mxu0 %v188
  %551 = vmatpush.bf16.msra.mxu0 %v184
  %552 = vmatmul.bf16.gmra.mxu0 %v383
  %v553 = vpop.f32.mrf.mxu0
  %v554 = vadd.f32 0.0, %v553
  %v555 = vpop.f32.mrf.mxu0
  %556 = vdwg.mxu0
  %557 = vmatpush.bf16.msra.mxu0 %v213
  %558 = vmatpush.bf16.msra.mxu0 %v209
  %559 = vmatpush.bf16.msra.mxu0 %v205
  %560 = vmatpush.bf16.msra.mxu0 %v201
  %561 = vmatpush.bf16.msra.mxu0 %v197
  %562 = vmatpush.bf16.msra.mxu0 %v193
  %563 = vmatpush.bf16.msra.mxu0 %v189
  %564 = vmatpush.bf16.msra.mxu0 %v185
  %565 = vmatmul.bf16.gmra.mxu0 %v383
  %v566 = vpop.f32.mrf.mxu0
  %v567 = vadd.f32 0.0, %v566
  %v568 = vpop.f32.mrf.mxu0
  %569 = vdwg.mxu0
  %v574 = vrot.slane %v541, 6
  %v575 = vrot.slane %v554, 4
  %v576 = vrot.slane %v567, 2
  %v577 = vsel %vm305, %v528, %v574
  %v578 = vsel %vm307, %v575, %v576
  %v579 = vsel %vm309, %v577, %v578
  %v581 = vadd.f32 %v517, %v579
  %v582 = vxor.u32 %v581, 2147483648
  %v583 = vmul.f32 %v582, 1.442695
  %v584 = vpow.pop %v583
  %v585 = vadd.f32 %v584, 1.0
  %v586 = vrcp.pop %v585
  %v587 = vmul.f32 %v585, %v586
  %v588 = vsub.f32 1.0, %v587
  %v589 = vmul.f32 %v586, %v588
  %v590 = vadd.f32 %v586, %v589
  %vm591 = vweird.f32 %v585
  %vm592 = vweird.f32 %v586
  %vm593 = vmor %vm591, %vm592
  %v594 = vsel %vm593, %v586, %v590
  %v595 = vand.u32 2147483647, %v585
  %vm596 = vcmp.eq.f32.partialorder %v595, 8.507059e+37
  %v597 = vand.u32 %v585, 2147483648
  %v598 = vor.u32 1.1754944e-38, %v597
  %v599 = vsel %vm596, %v598, %v594
  %v600 = vmul.f32 1.0, %v599
  %v602 = vrot.slane %v581, 2
  %v604 = vxor.u32 %v602, 2147483648
  %v605 = vmul.f32 %v604, 1.442695
  %v606 = vpow.pop %v605
  %v607 = vadd.f32 %v606, 1.0
  %v608 = vrcp.pop %v607
  %v609 = vmul.f32 %v607, %v608
  %v610 = vsub.f32 1.0, %v609
  %v611 = vmul.f32 %v608, %v610
  %v612 = vadd.f32 %v608, %v611
  %vm613 = vweird.f32 %v607
  %vm614 = vweird.f32 %v608
  %vm615 = vmor %vm613, %vm614
  %v616 = vsel %vm615, %v608, %v612
  %v617 = vand.u32 2147483647, %v607
  %vm618 = vcmp.eq.f32.partialorder %v617, 8.507059e+37
  %v619 = vand.u32 %v607, 2147483648
  %v620 = vor.u32 1.1754944e-38, %v619
  %v621 = vsel %vm618, %v620, %v616
  %v622 = vmul.f32 1.0, %v621
  %v623 = vrot.slane %v581, 4
  %v625 = vtanh.pop %v623
  %v626 = vrot.slane %v581, 6
  %v628 = vxor.u32 %v626, 2147483648
  %v629 = vmul.f32 %v628, 1.442695
  %v630 = vpow.pop %v629
  %v631 = vadd.f32 %v630, 1.0
  %v632 = vrcp.pop %v631
  %v633 = vmul.f32 %v631, %v632
  %v634 = vsub.f32 1.0, %v633
  %v635 = vmul.f32 %v632, %v634
  %v636 = vadd.f32 %v632, %v635
  %vm637 = vweird.f32 %v631
  %vm638 = vweird.f32 %v632
  %vm639 = vmor %vm637, %vm638
  %v640 = vsel %vm639, %v632, %v636
  %v641 = vand.u32 2147483647, %v631
  %vm642 = vcmp.eq.f32.partialorder %v641, 8.507059e+37
  %v643 = vand.u32 %v631, 2147483648
  %v644 = vor.u32 1.1754944e-38, %v643
  %v645 = vsel %vm642, %v644, %v640
  %v646 = vmul.f32 1.0, %v645
  %v647 = vmul.f32 %v622, %v380
  %v648 = vmul.f32 %v600, %v625
  %v649 = vadd.f32 %v647, %v648
  %v650 = vtanh.pop %v649
  %v651 = vmul.f32 %v646, %v650
  %v652 = vpack.c.bf16 %v651, %v651
  %v653 = vpack.c.bf16 %v512, %v512
  %v655 = vsel %vm436, %v653, 0
  %657 = vmatpush.bf16.msra.mxu0 %v426
  %658 = vmatpush.bf16.msra.mxu0 %v425
  %659 = vmatpush.bf16.msra.mxu0 %v424
  %660 = vmatpush.bf16.msra.mxu0 %v423
  %661 = vmatpush.bf16.msra.mxu0 %v422
  %662 = vmatpush.bf16.msra.mxu0 %v421
  %663 = vmatpush.bf16.msra.mxu0 %v420
  %664 = vmatpush.bf16.msra.mxu0 %v419
  %665 = vmatmul.bf16.gmra.mxu0 %v652
  %v666 = vpop.f32.mrf.mxu0
  %v667 = vadd.f32 %v78, %v666
  %v668 = vpop.f32.mrf.mxu0
  %669 = vdwg.mxu0
  %670 = vmatpush.bf16.msra.mxu0 0
  %671 = vmatpush.bf16.msra.mxu0 0
  %672 = vmatpush.bf16.msra.mxu0 0
  %673 = vmatpush.bf16.msra.mxu0 0
  %674 = vmatpush.bf16.msra.mxu0 0
  %675 = vmatpush.bf16.msra.mxu0 0
  %676 = vmatpush.bf16.msra.mxu0 0
  %677 = vmatpush.bf16.msra.mxu0 %v441
  %678 = vmatmul.bf16.gmra.mxu0 %v655
  %v679 = vpop.f32.mrf.mxu0
  %v680 = vadd.f32 %v667, %v679
  %v681 = vpop.f32.mrf.mxu0
  %682 = vdwg.mxu0
  %v683 = vxor.u32 %v680, 2147483648
  %v684 = vmul.f32 %v683, 1.442695
  %v685 = vpow.pop %v684
  %v686 = vadd.f32 %v685, 1.0
  %v687 = vrcp.pop %v686
  %v688 = vmul.f32 %v686, %v687
  %v689 = vsub.f32 1.0, %v688
  %v690 = vmul.f32 %v687, %v689
  %v691 = vadd.f32 %v687, %v690
  %vm692 = vweird.f32 %v686
  %vm693 = vweird.f32 %v687
  %vm694 = vmor %vm692, %vm693
  %v695 = vsel %vm694, %v687, %v691
  %v696 = vand.u32 2147483647, %v686
  %vm697 = vcmp.eq.f32.partialorder %v696, 8.507059e+37
  %v698 = vand.u32 %v686, 2147483648
  %v699 = vor.u32 1.1754944e-38, %v698
  %v700 = vsel %vm697, %v699, %v695
  %v701 = vmul.f32 1.0, %v700
  %v702 = vtanh.pop %v680
  %v703 = vmul.f32 %v701, %v503
  %705 = vrot.lane.b32.xlu0 %v702, 120
  %v706 = vpop.permute.xlu0 %705
  %v708 = vmul.f32 %v701, %v706
  %710 = vrot.lane.b32.xlu0 %v708, 4
  %v711 = vpop.permute.xlu0 %710
  %v713 = vadd.f32 %v703, %v711
  %v714 = vtanh.pop %v713
  %716 = vrot.lane.b32.xlu0 %v714, 8
  %v717 = vpop.permute.xlu0 %716
  %v719 = vmul.f32 %v701, %v717
  %721 = vrot.lane.b32.xlu0 %v719, 116
  %v722 = vpop.permute.xlu0 %721
  %s724 = scalar_lea.vmem %s4, 2
  %725 = vst.msk [vmem:[%s724] sm:$0x3] %vm514, %v722
  %s726 = scalar_lea.vmem %s0, 16
  %v727 = vld [vmem:[%s726] sm:$0xff]
  %728 = vmatpush.bf16.msra.mxu0 %v210
  %729 = vmatpush.bf16.msra.mxu0 %v206
  %730 = vmatpush.bf16.msra.mxu0 %v202
  %731 = vmatpush.bf16.msra.mxu0 %v198
  %732 = vmatpush.bf16.msra.mxu0 %v194
  %733 = vmatpush.bf16.msra.mxu0 %v190
  %734 = vmatpush.bf16.msra.mxu0 %v186
  %735 = vmatpush.bf16.msra.mxu0 %v182
  %736 = vmatmul.bf16.gmra.mxu0 %v652
  %v737 = vpop.f32.mrf.mxu0
  %v738 = vadd.f32 0.0, %v737
  %v739 = vpop.f32.mrf.mxu0
  %740 = vdwg.mxu0
  %741 = vmatpush.bf16.msra.mxu0 %v211
  %742 = vmatpush.bf16.msra.mxu0 %v207
  %743 = vmatpush.bf16.msra.mxu0 %v203
  %744 = vmatpush.bf16.msra.mxu0 %v199
  %745 = vmatpush.bf16.msra.mxu0 %v195
  %746 = vmatpush.bf16.msra.mxu0 %v191
  %747 = vmatpush.bf16.msra.mxu0 %v187
  %748 = vmatpush.bf16.msra.mxu0 %v183
  %749 = vmatmul.bf16.gmra.mxu0 %v652
  %v750 = vpop.f32.mrf.mxu0
  %v751 = vadd.f32 0.0, %v750
  %v752 = vpop.f32.mrf.mxu0
  %753 = vdwg.mxu0
  %754 = vmatpush.bf16.msra.mxu0 %v212
  %755 = vmatpush.bf16.msra.mxu0 %v208
  %756 = vmatpush.bf16.msra.mxu0 %v204
  %757 = vmatpush.bf16.msra.mxu0 %v200
  %758 = vmatpush.bf16.msra.mxu0 %v196
  %759 = vmatpush.bf16.msra.mxu0 %v192
  %760 = vmatpush.bf16.msra.mxu0 %v188
  %761 = vmatpush.bf16.msra.mxu0 %v184
  %762 = vmatmul.bf16.gmra.mxu0 %v652
  %v763 = vpop.f32.mrf.mxu0
  %v764 = vadd.f32 0.0, %v763
  %v765 = vpop.f32.mrf.mxu0
  %766 = vdwg.mxu0
  %767 = vmatpush.bf16.msra.mxu0 %v213
  %768 = vmatpush.bf16.msra.mxu0 %v209
  %769 = vmatpush.bf16.msra.mxu0 %v205
  %770 = vmatpush.bf16.msra.mxu0 %v201
  %771 = vmatpush.bf16.msra.mxu0 %v197
  %772 = vmatpush.bf16.msra.mxu0 %v193
  %773 = vmatpush.bf16.msra.mxu0 %v189
  %774 = vmatpush.bf16.msra.mxu0 %v185
  %775 = vmatmul.bf16.gmra.mxu0 %v652
  %v776 = vpop.f32.mrf.mxu0
  %v777 = vadd.f32 0.0, %v776
  %v778 = vpop.f32.mrf.mxu0
  %779 = vdwg.mxu0
  %v784 = vrot.slane %v751, 6
  %v785 = vrot.slane %v764, 4
  %v786 = vrot.slane %v777, 2
  %v787 = vsel %vm305, %v738, %v784
  %v788 = vsel %vm307, %v785, %v786
  %v789 = vsel %vm309, %v787, %v788
  %v791 = vadd.f32 %v727, %v789
  %v792 = vxor.u32 %v791, 2147483648
  %v793 = vmul.f32 %v792, 1.442695
  %v794 = vpow.pop %v793
  %v795 = vadd.f32 %v794, 1.0
  %v796 = vrcp.pop %v795
  %v797 = vmul.f32 %v795, %v796
  %v798 = vsub.f32 1.0, %v797
  %v799 = vmul.f32 %v796, %v798
  %v800 = vadd.f32 %v796, %v799
  %vm801 = vweird.f32 %v795
  %vm802 = vweird.f32 %v796
  %vm803 = vmor %vm801, %vm802
  %v804 = vsel %vm803, %v796, %v800
  %v805 = vand.u32 2147483647, %v795
  %vm806 = vcmp.eq.f32.partialorder %v805, 8.507059e+37
  %v807 = vand.u32 %v795, 2147483648
  %v808 = vor.u32 1.1754944e-38, %v807
  %v809 = vsel %vm806, %v808, %v804
  %v810 = vmul.f32 1.0, %v809
  %v812 = vrot.slane %v791, 2
  %v814 = vxor.u32 %v812, 2147483648
  %v815 = vmul.f32 %v814, 1.442695
  %v816 = vpow.pop %v815
  %v817 = vadd.f32 %v816, 1.0
  %v818 = vrcp.pop %v817
  %v819 = vmul.f32 %v817, %v818
  %v820 = vsub.f32 1.0, %v819
  %v821 = vmul.f32 %v818, %v820
  %v822 = vadd.f32 %v818, %v821
  %vm823 = vweird.f32 %v817
  %vm824 = vweird.f32 %v818
  %vm825 = vmor %vm823, %vm824
  %v826 = vsel %vm825, %v818, %v822
  %v827 = vand.u32 2147483647, %v817
  %vm828 = vcmp.eq.f32.partialorder %v827, 8.507059e+37
  %v829 = vand.u32 %v817, 2147483648
  %v830 = vor.u32 1.1754944e-38, %v829
  %v831 = vsel %vm828, %v830, %v826
  %v832 = vmul.f32 1.0, %v831
  %v833 = vrot.slane %v791, 4
  %v835 = vtanh.pop %v833
  %v836 = vrot.slane %v791, 6
  %v838 = vxor.u32 %v836, 2147483648
  %v839 = vmul.f32 %v838, 1.442695
  %v840 = vpow.pop %v839
  %v841 = vadd.f32 %v840, 1.0
  %v842 = vrcp.pop %v841
  %v843 = vmul.f32 %v841, %v842
  %v844 = vsub.f32 1.0, %v843
  %v845 = vmul.f32 %v842, %v844
  %v846 = vadd.f32 %v842, %v845
  %vm847 = vweird.f32 %v841
  %vm848 = vweird.f32 %v842
  %vm849 = vmor %vm847, %vm848
  %v850 = vsel %vm849, %v842, %v846
  %v851 = vand.u32 2147483647, %v841
  %vm852 = vcmp.eq.f32.partialorder %v851, 8.507059e+37
  %v853 = vand.u32 %v841, 2147483648
  %v854 = vor.u32 1.1754944e-38, %v853
  %v855 = vsel %vm852, %v854, %v850
  %v856 = vmul.f32 1.0, %v855
  %v857 = vmul.f32 %v832, %v649
  %v858 = vmul.f32 %v810, %v835
  %v859 = vadd.f32 %v857, %v858
  %v860 = vtanh.pop %v859
  %v861 = vmul.f32 %v856, %v860
  %v862 = vpack.c.bf16 %v861, %v861
  %v863 = vpack.c.bf16 %v722, %v722
  %v865 = vsel %vm436, %v863, 0
  %867 = vmatpush.bf16.msra.mxu0 %v426
  %868 = vmatpush.bf16.msra.mxu0 %v425
  %869 = vmatpush.bf16.msra.mxu0 %v424
  %870 = vmatpush.bf16.msra.mxu0 %v423
  %871 = vmatpush.bf16.msra.mxu0 %v422
  %872 = vmatpush.bf16.msra.mxu0 %v421
  %873 = vmatpush.bf16.msra.mxu0 %v420
  %874 = vmatpush.bf16.msra.mxu0 %v419
  %875 = vmatmul.bf16.gmra.mxu0 %v862
  %v876 = vpop.f32.mrf.mxu0
  %v877 = vadd.f32 %v78, %v876
  %v878 = vpop.f32.mrf.mxu0
  %879 = vdwg.mxu0
  %880 = vmatpush.bf16.msra.mxu0 0
  %881 = vmatpush.bf16.msra.mxu0 0
  %882 = vmatpush.bf16.msra.mxu0 0
  %883 = vmatpush.bf16.msra.mxu0 0
  %884 = vmatpush.bf16.msra.mxu0 0
  %885 = vmatpush.bf16.msra.mxu0 0
  %886 = vmatpush.bf16.msra.mxu0 0
  %887 = vmatpush.bf16.msra.mxu0 %v441
  %888 = vmatmul.bf16.gmra.mxu0 %v865
  %v889 = vpop.f32.mrf.mxu0
  %v890 = vadd.f32 %v877, %v889
  %v891 = vpop.f32.mrf.mxu0
  %892 = vdwg.mxu0
  %v893 = vxor.u32 %v890, 2147483648
  %v894 = vmul.f32 %v893, 1.442695
  %v895 = vpow.pop %v894
  %v896 = vadd.f32 %v895, 1.0
  %v897 = vrcp.pop %v896
  %v898 = vmul.f32 %v896, %v897
  %v899 = vsub.f32 1.0, %v898
  %v900 = vmul.f32 %v897, %v899
  %v901 = vadd.f32 %v897, %v900
  %vm902 = vweird.f32 %v896
  %vm903 = vweird.f32 %v897
  %vm904 = vmor %vm902, %vm903
  %v905 = vsel %vm904, %v897, %v901
  %v906 = vand.u32 2147483647, %v896
  %vm907 = vcmp.eq.f32.partialorder %v906, 8.507059e+37
  %v908 = vand.u32 %v896, 2147483648
  %v909 = vor.u32 1.1754944e-38, %v908
  %v910 = vsel %vm907, %v909, %v905
  %v911 = vmul.f32 1.0, %v910
  %v912 = vtanh.pop %v890
  %v913 = vmul.f32 %v911, %v713
  %915 = vrot.lane.b32.xlu0 %v912, 120
  %v916 = vpop.permute.xlu0 %915
  %v918 = vmul.f32 %v911, %v916
  %920 = vrot.lane.b32.xlu0 %v918, 4
  %v921 = vpop.permute.xlu0 %920
  %v923 = vadd.f32 %v913, %v921
  %v924 = vtanh.pop %v923
  %926 = vrot.lane.b32.xlu0 %v924, 8
  %v927 = vpop.permute.xlu0 %926
  %v929 = vmul.f32 %v911, %v927
  %931 = vrot.lane.b32.xlu0 %v929, 116
  %v932 = vpop.permute.xlu0 %931
  %s934 = scalar_lea.vmem %s4, 4
  %935 = vst.msk [vmem:[%s934] sm:$0x3] %vm514, %v932
  %s936 = scalar_lea.vmem %s0, 24
  %v937 = vld [vmem:[%s936] sm:$0xff]
  %938 = vmatpush.bf16.msra.mxu0 %v210
  %939 = vmatpush.bf16.msra.mxu0 %v206
  %940 = vmatpush.bf16.msra.mxu0 %v202
  %941 = vmatpush.bf16.msra.mxu0 %v198
  %942 = vmatpush.bf16.msra.mxu0 %v194
  %943 = vmatpush.bf16.msra.mxu0 %v190
  %944 = vmatpush.bf16.msra.mxu0 %v186
  %945 = vmatpush.bf16.msra.mxu0 %v182
  %946 = vmatmul.bf16.gmra.mxu0 %v862
  %v947 = vpop.f32.mrf.mxu0
  %v948 = vadd.f32 0.0, %v947
  %v949 = vpop.f32.mrf.mxu0
  %950 = vdwg.mxu0
  %951 = vmatpush.bf16.msra.mxu0 %v211
  %952 = vmatpush.bf16.msra.mxu0 %v207
  %953 = vmatpush.bf16.msra.mxu0 %v203
  %954 = vmatpush.bf16.msra.mxu0 %v199
  %955 = vmatpush.bf16.msra.mxu0 %v195
  %956 = vmatpush.bf16.msra.mxu0 %v191
  %957 = vmatpush.bf16.msra.mxu0 %v187
  %958 = vmatpush.bf16.msra.mxu0 %v183
  %959 = vmatmul.bf16.gmra.mxu0 %v862
  %v960 = vpop.f32.mrf.mxu0
  %v961 = vadd.f32 0.0, %v960
  %v962 = vpop.f32.mrf.mxu0
  %963 = vdwg.mxu0
  %964 = vmatpush.bf16.msra.mxu0 %v212
  %965 = vmatpush.bf16.msra.mxu0 %v208
  %966 = vmatpush.bf16.msra.mxu0 %v204
  %967 = vmatpush.bf16.msra.mxu0 %v200
  %968 = vmatpush.bf16.msra.mxu0 %v196
  %969 = vmatpush.bf16.msra.mxu0 %v192
  %970 = vmatpush.bf16.msra.mxu0 %v188
  %971 = vmatpush.bf16.msra.mxu0 %v184
  %972 = vmatmul.bf16.gmra.mxu0 %v862
  %v973 = vpop.f32.mrf.mxu0
  %v974 = vadd.f32 0.0, %v973
  %v975 = vpop.f32.mrf.mxu0
  %976 = vdwg.mxu0
  %977 = vmatpush.bf16.msra.mxu0 %v213
  %978 = vmatpush.bf16.msra.mxu0 %v209
  %979 = vmatpush.bf16.msra.mxu0 %v205
  %980 = vmatpush.bf16.msra.mxu0 %v201
  %981 = vmatpush.bf16.msra.mxu0 %v197
  %982 = vmatpush.bf16.msra.mxu0 %v193
  %983 = vmatpush.bf16.msra.mxu0 %v189
  %984 = vmatpush.bf16.msra.mxu0 %v185
  %985 = vmatmul.bf16.gmra.mxu0 %v862
  %v986 = vpop.f32.mrf.mxu0
  %v987 = vadd.f32 0.0, %v986
  %v988 = vpop.f32.mrf.mxu0
  %989 = vdwg.mxu0
  %v994 = vrot.slane %v961, 6
  %v995 = vrot.slane %v974, 4
  %v996 = vrot.slane %v987, 2
  %v997 = vsel %vm305, %v948, %v994
  %v998 = vsel %vm307, %v995, %v996
  %v999 = vsel %vm309, %v997, %v998
  %v1001 = vadd.f32 %v937, %v999
  %v1002 = vxor.u32 %v1001, 2147483648
  %v1003 = vmul.f32 %v1002, 1.442695
  %v1004 = vpow.pop %v1003
  %v1005 = vadd.f32 %v1004, 1.0
  %v1006 = vrcp.pop %v1005
  %v1007 = vmul.f32 %v1005, %v1006
  %v1008 = vsub.f32 1.0, %v1007
  %v1009 = vmul.f32 %v1006, %v1008
  %v1010 = vadd.f32 %v1006, %v1009
  %vm1011 = vweird.f32 %v1005
  %vm1012 = vweird.f32 %v1006
  %vm1013 = vmor %vm1011, %vm1012
  %v1014 = vsel %vm1013, %v1006, %v1010
  %v1015 = vand.u32 2147483647, %v1005
  %vm1016 = vcmp.eq.f32.partialorder %v1015, 8.507059e+37
  %v1017 = vand.u32 %v1005, 2147483648
  %v1018 = vor.u32 1.1754944e-38, %v1017
  %v1019 = vsel %vm1016, %v1018, %v1014
  %v1020 = vmul.f32 1.0, %v1019
  %v1022 = vrot.slane %v1001, 2
  %v1024 = vxor.u32 %v1022, 2147483648
  %v1025 = vmul.f32 %v1024, 1.442695
  %v1026 = vpow.pop %v1025
  %v1027 = vadd.f32 %v1026, 1.0
  %v1028 = vrcp.pop %v1027
  %v1029 = vmul.f32 %v1027, %v1028
  %v1030 = vsub.f32 1.0, %v1029
  %v1031 = vmul.f32 %v1028, %v1030
  %v1032 = vadd.f32 %v1028, %v1031
  %vm1033 = vweird.f32 %v1027
  %vm1034 = vweird.f32 %v1028
  %vm1035 = vmor %vm1033, %vm1034
  %v1036 = vsel %vm1035, %v1028, %v1032
  %v1037 = vand.u32 2147483647, %v1027
  %vm1038 = vcmp.eq.f32.partialorder %v1037, 8.507059e+37
  %v1039 = vand.u32 %v1027, 2147483648
  %v1040 = vor.u32 1.1754944e-38, %v1039
  %v1041 = vsel %vm1038, %v1040, %v1036
  %v1042 = vmul.f32 1.0, %v1041
  %v1043 = vrot.slane %v1001, 4
  %v1045 = vtanh.pop %v1043
  %v1046 = vrot.slane %v1001, 6
  %v1048 = vxor.u32 %v1046, 2147483648
  %v1049 = vmul.f32 %v1048, 1.442695
  %v1050 = vpow.pop %v1049
  %v1051 = vadd.f32 %v1050, 1.0
  %v1052 = vrcp.pop %v1051
  %v1053 = vmul.f32 %v1051, %v1052
  %v1054 = vsub.f32 1.0, %v1053
  %v1055 = vmul.f32 %v1052, %v1054
  %v1056 = vadd.f32 %v1052, %v1055
  %vm1057 = vweird.f32 %v1051
  %vm1058 = vweird.f32 %v1052
  %vm1059 = vmor %vm1057, %vm1058
  %v1060 = vsel %vm1059, %v1052, %v1056
  %v1061 = vand.u32 2147483647, %v1051
  %vm1062 = vcmp.eq.f32.partialorder %v1061, 8.507059e+37
  %v1063 = vand.u32 %v1051, 2147483648
  %v1064 = vor.u32 1.1754944e-38, %v1063
  %v1065 = vsel %vm1062, %v1064, %v1060
  %v1066 = vmul.f32 1.0, %v1065
  %v1067 = vmul.f32 %v1042, %v859
  %v1068 = vmul.f32 %v1020, %v1045
  %v1069 = vadd.f32 %v1067, %v1068
  %v1070 = vtanh.pop %v1069
  %v1071 = vmul.f32 %v1066, %v1070
  %v1072 = vpack.c.bf16 %v1071, %v1071
  %v1073 = vpack.c.bf16 %v932, %v932
  %v1075 = vsel %vm436, %v1073, 0
  %1077 = vmatpush.bf16.msra.mxu0 %v426
  %1078 = vmatpush.bf16.msra.mxu0 %v425
  %1079 = vmatpush.bf16.msra.mxu0 %v424
  %1080 = vmatpush.bf16.msra.mxu0 %v423
  %1081 = vmatpush.bf16.msra.mxu0 %v422
  %1082 = vmatpush.bf16.msra.mxu0 %v421
  %1083 = vmatpush.bf16.msra.mxu0 %v420
  %1084 = vmatpush.bf16.msra.mxu0 %v419
  %1085 = vmatmul.bf16.gmra.mxu0 %v1072
  %v1086 = vpop.f32.mrf.mxu0
  %v1087 = vadd.f32 %v78, %v1086
  %v1088 = vpop.f32.mrf.mxu0
  %1089 = vdwg.mxu0
  %1090 = vmatpush.bf16.msra.mxu0 0
  %1091 = vmatpush.bf16.msra.mxu0 0
  %1092 = vmatpush.bf16.msra.mxu0 0
  %1093 = vmatpush.bf16.msra.mxu0 0
  %1094 = vmatpush.bf16.msra.mxu0 0
  %1095 = vmatpush.bf16.msra.mxu0 0
  %1096 = vmatpush.bf16.msra.mxu0 0
  %1097 = vmatpush.bf16.msra.mxu0 %v441
  %1098 = vmatmul.bf16.gmra.mxu0 %v1075
  %v1099 = vpop.f32.mrf.mxu0
  %v1100 = vadd.f32 %v1087, %v1099
  %v1101 = vpop.f32.mrf.mxu0
  %1102 = vdwg.mxu0
  %v1103 = vxor.u32 %v1100, 2147483648
  %v1104 = vmul.f32 %v1103, 1.442695
  %v1105 = vpow.pop %v1104
  %v1106 = vadd.f32 %v1105, 1.0
  %v1107 = vrcp.pop %v1106
  %v1108 = vmul.f32 %v1106, %v1107
  %v1109 = vsub.f32 1.0, %v1108
  %v1110 = vmul.f32 %v1107, %v1109
  %v1111 = vadd.f32 %v1107, %v1110
  %vm1112 = vweird.f32 %v1106
  %vm1113 = vweird.f32 %v1107
  %vm1114 = vmor %vm1112, %vm1113
  %v1115 = vsel %vm1114, %v1107, %v1111
  %v1116 = vand.u32 2147483647, %v1106
  %vm1117 = vcmp.eq.f32.partialorder %v1116, 8.507059e+37
  %v1118 = vand.u32 %v1106, 2147483648
  %v1119 = vor.u32 1.1754944e-38, %v1118
  %v1120 = vsel %vm1117, %v1119, %v1115
  %v1121 = vmul.f32 1.0, %v1120
  %v1122 = vtanh.pop %v1100
  %v1123 = vmul.f32 %v1121, %v923
  %1125 = vrot.lane.b32.xlu0 %v1122, 120
  %v1126 = vpop.permute.xlu0 %1125
  %v1128 = vmul.f32 %v1121, %v1126
  %1130 = vrot.lane.b32.xlu0 %v1128, 4
  %v1131 = vpop.permute.xlu0 %1130
  %v1133 = vadd.f32 %v1123, %v1131
  %v1134 = vtanh.pop %v1133
  %1136 = vrot.lane.b32.xlu0 %v1134, 8
  %v1137 = vpop.permute.xlu0 %1136
  %v1139 = vmul.f32 %v1121, %v1137
  %1141 = vrot.lane.b32.xlu0 %v1139, 116
  %v1142 = vpop.permute.xlu0 %1141
  %s1144 = scalar_lea.vmem %s4, 6
  %1145 = vst.msk [vmem:[%s1144] sm:$0x3] %vm514, %v1142
  %s1146 = scalar_lea.vmem %s0, 32
  %v1147 = vld [vmem:[%s1146] sm:$0xff]
  %1148 = vmatpush.bf16.msra.mxu0 %v210
  %1149 = vmatpush.bf16.msra.mxu0 %v206
  %1150 = vmatpush.bf16.msra.mxu0 %v202
  %1151 = vmatpush.bf16.msra.mxu0 %v198
  %1152 = vmatpush.bf16.msra.mxu0 %v194
  %1153 = vmatpush.bf16.msra.mxu0 %v190
  %1154 = vmatpush.bf16.msra.mxu0 %v186
  %1155 = vmatpush.bf16.msra.mxu0 %v182
  %1156 = vmatmul.bf16.gmra.mxu0 %v1072
  %v1157 = vpop.f32.mrf.mxu0
  %v1158 = vadd.f32 0.0, %v1157
  %v1159 = vpop.f32.mrf.mxu0
  %1160 = vdwg.mxu0
  %1161 = vmatpush.bf16.msra.mxu0 %v211
  %1162 = vmatpush.bf16.msra.mxu0 %v207
  %1163 = vmatpush.bf16.msra.mxu0 %v203
  %1164 = vmatpush.bf16.msra.mxu0 %v199
  %1165 = vmatpush.bf16.msra.mxu0 %v195
  %1166 = vmatpush.bf16.msra.mxu0 %v191
  %1167 = vmatpush.bf16.msra.mxu0 %v187
  %1168 = vmatpush.bf16.msra.mxu0 %v183
  %1169 = vmatmul.bf16.gmra.mxu0 %v1072
  %v1170 = vpop.f32.mrf.mxu0
  %v1171 = vadd.f32 0.0, %v1170
  %v1172 = vpop.f32.mrf.mxu0
  %1173 = vdwg.mxu0
  %1174 = vmatpush.bf16.msra.mxu0 %v212
  %1175 = vmatpush.bf16.msra.mxu0 %v208
  %1176 = vmatpush.bf16.msra.mxu0 %v204
  %1177 = vmatpush.bf16.msra.mxu0 %v200
  %1178 = vmatpush.bf16.msra.mxu0 %v196
  %1179 = vmatpush.bf16.msra.mxu0 %v192
  %1180 = vmatpush.bf16.msra.mxu0 %v188
  %1181 = vmatpush.bf16.msra.mxu0 %v184
  %1182 = vmatmul.bf16.gmra.mxu0 %v1072
  %v1183 = vpop.f32.mrf.mxu0
  %v1184 = vadd.f32 0.0, %v1183
  %v1185 = vpop.f32.mrf.mxu0
  %1186 = vdwg.mxu0
  %1187 = vmatpush.bf16.msra.mxu0 %v213
  %1188 = vmatpush.bf16.msra.mxu0 %v209
  %1189 = vmatpush.bf16.msra.mxu0 %v205
  %1190 = vmatpush.bf16.msra.mxu0 %v201
  %1191 = vmatpush.bf16.msra.mxu0 %v197
  %1192 = vmatpush.bf16.msra.mxu0 %v193
  %1193 = vmatpush.bf16.msra.mxu0 %v189
  %1194 = vmatpush.bf16.msra.mxu0 %v185
  %1195 = vmatmul.bf16.gmra.mxu0 %v1072
  %v1196 = vpop.f32.mrf.mxu0
  %v1197 = vadd.f32 0.0, %v1196
  %v1198 = vpop.f32.mrf.mxu0
  %1199 = vdwg.mxu0
  %v1204 = vrot.slane %v1171, 6
  %v1205 = vrot.slane %v1184, 4
  %v1206 = vrot.slane %v1197, 2
  %v1207 = vsel %vm305, %v1158, %v1204
  %v1208 = vsel %vm307, %v1205, %v1206
  %v1209 = vsel %vm309, %v1207, %v1208
  %v1211 = vadd.f32 %v1147, %v1209
  %v1212 = vxor.u32 %v1211, 2147483648
  %v1213 = vmul.f32 %v1212, 1.442695
  %v1214 = vpow.pop %v1213
  %v1215 = vadd.f32 %v1214, 1.0
  %v1216 = vrcp.pop %v1215
  %v1217 = vmul.f32 %v1215, %v1216
  %v1218 = vsub.f32 1.0, %v1217
  %v1219 = vmul.f32 %v1216, %v1218
  %v1220 = vadd.f32 %v1216, %v1219
  %vm1221 = vweird.f32 %v1215
  %vm1222 = vweird.f32 %v1216
  %vm1223 = vmor %vm1221, %vm1222
  %v1224 = vsel %vm1223, %v1216, %v1220
  %v1225 = vand.u32 2147483647, %v1215
  %vm1226 = vcmp.eq.f32.partialorder %v1225, 8.507059e+37
  %v1227 = vand.u32 %v1215, 2147483648
  %v1228 = vor.u32 1.1754944e-38, %v1227
  %v1229 = vsel %vm1226, %v1228, %v1224
  %v1230 = vmul.f32 1.0, %v1229
  %v1232 = vrot.slane %v1211, 2
  %v1234 = vxor.u32 %v1232, 2147483648
  %v1235 = vmul.f32 %v1234, 1.442695
  %v1236 = vpow.pop %v1235
  %v1237 = vadd.f32 %v1236, 1.0
  %v1238 = vrcp.pop %v1237
  %v1239 = vmul.f32 %v1237, %v1238
  %v1240 = vsub.f32 1.0, %v1239
  %v1241 = vmul.f32 %v1238, %v1240
  %v1242 = vadd.f32 %v1238, %v1241
  %vm1243 = vweird.f32 %v1237
  %vm1244 = vweird.f32 %v1238
  %vm1245 = vmor %vm1243, %vm1244
  %v1246 = vsel %vm1245, %v1238, %v1242
  %v1247 = vand.u32 2147483647, %v1237
  %vm1248 = vcmp.eq.f32.partialorder %v1247, 8.507059e+37
  %v1249 = vand.u32 %v1237, 2147483648
  %v1250 = vor.u32 1.1754944e-38, %v1249
  %v1251 = vsel %vm1248, %v1250, %v1246
  %v1252 = vmul.f32 1.0, %v1251
  %v1253 = vrot.slane %v1211, 4
  %v1255 = vtanh.pop %v1253
  %v1256 = vrot.slane %v1211, 6
  %v1258 = vxor.u32 %v1256, 2147483648
  %v1259 = vmul.f32 %v1258, 1.442695
  %v1260 = vpow.pop %v1259
  %v1261 = vadd.f32 %v1260, 1.0
  %v1262 = vrcp.pop %v1261
  %v1263 = vmul.f32 %v1261, %v1262
  %v1264 = vsub.f32 1.0, %v1263
  %v1265 = vmul.f32 %v1262, %v1264
  %v1266 = vadd.f32 %v1262, %v1265
  %vm1267 = vweird.f32 %v1261
  %vm1268 = vweird.f32 %v1262
  %vm1269 = vmor %vm1267, %vm1268
  %v1270 = vsel %vm1269, %v1262, %v1266
  %v1271 = vand.u32 2147483647, %v1261
  %vm1272 = vcmp.eq.f32.partialorder %v1271, 8.507059e+37
  %v1273 = vand.u32 %v1261, 2147483648
  %v1274 = vor.u32 1.1754944e-38, %v1273
  %v1275 = vsel %vm1272, %v1274, %v1270
  %v1276 = vmul.f32 1.0, %v1275
  %v1277 = vmul.f32 %v1252, %v1069
  %v1278 = vmul.f32 %v1230, %v1255
  %v1279 = vadd.f32 %v1277, %v1278
  %v1280 = vtanh.pop %v1279
  %v1281 = vmul.f32 %v1276, %v1280
  %v1282 = vpack.c.bf16 %v1281, %v1281
  %v1283 = vpack.c.bf16 %v1142, %v1142
  %v1285 = vsel %vm436, %v1283, 0
  %1287 = vmatpush.bf16.msra.mxu0 %v426
  %1288 = vmatpush.bf16.msra.mxu0 %v425
  %1289 = vmatpush.bf16.msra.mxu0 %v424
  %1290 = vmatpush.bf16.msra.mxu0 %v423
  %1291 = vmatpush.bf16.msra.mxu0 %v422
  %1292 = vmatpush.bf16.msra.mxu0 %v421
  %1293 = vmatpush.bf16.msra.mxu0 %v420
  %1294 = vmatpush.bf16.msra.mxu0 %v419
  %1295 = vmatmul.bf16.gmra.mxu0 %v1282
  %v1296 = vpop.f32.mrf.mxu0
  %v1297 = vadd.f32 %v78, %v1296
  %v1298 = vpop.f32.mrf.mxu0
  %1299 = vdwg.mxu0
  %1300 = vmatpush.bf16.msra.mxu0 0
  %1301 = vmatpush.bf16.msra.mxu0 0
  %1302 = vmatpush.bf16.msra.mxu0 0
  %1303 = vmatpush.bf16.msra.mxu0 0
  %1304 = vmatpush.bf16.msra.mxu0 0
  %1305 = vmatpush.bf16.msra.mxu0 0
  %1306 = vmatpush.bf16.msra.mxu0 0
  %1307 = vmatpush.bf16.msra.mxu0 %v441
  %1308 = vmatmul.bf16.gmra.mxu0 %v1285
  %v1309 = vpop.f32.mrf.mxu0
  %v1310 = vadd.f32 %v1297, %v1309
  %v1311 = vpop.f32.mrf.mxu0
  %1312 = vdwg.mxu0
  %v1313 = vxor.u32 %v1310, 2147483648
  %v1314 = vmul.f32 %v1313, 1.442695
  %v1315 = vpow.pop %v1314
  %v1316 = vadd.f32 %v1315, 1.0
  %v1317 = vrcp.pop %v1316
  %v1318 = vmul.f32 %v1316, %v1317
  %v1319 = vsub.f32 1.0, %v1318
  %v1320 = vmul.f32 %v1317, %v1319
  %v1321 = vadd.f32 %v1317, %v1320
  %vm1322 = vweird.f32 %v1316
  %vm1323 = vweird.f32 %v1317
  %vm1324 = vmor %vm1322, %vm1323
  %v1325 = vsel %vm1324, %v1317, %v1321
  %v1326 = vand.u32 2147483647, %v1316
  %vm1327 = vcmp.eq.f32.partialorder %v1326, 8.507059e+37
  %v1328 = vand.u32 %v1316, 2147483648
  %v1329 = vor.u32 1.1754944e-38, %v1328
  %v1330 = vsel %vm1327, %v1329, %v1325
  %v1331 = vmul.f32 1.0, %v1330
  %v1332 = vtanh.pop %v1310
  %v1333 = vmul.f32 %v1331, %v1133
  %1335 = vrot.lane.b32.xlu0 %v1332, 120
  %v1336 = vpop.permute.xlu0 %1335
  %v1338 = vmul.f32 %v1331, %v1336
  %1340 = vrot.lane.b32.xlu0 %v1338, 4
  %v1341 = vpop.permute.xlu0 %1340
  %v1343 = vadd.f32 %v1333, %v1341
  %v1344 = vtanh.pop %v1343
  %1346 = vrot.lane.b32.xlu0 %v1344, 8
  %v1347 = vpop.permute.xlu0 %1346
  %v1349 = vmul.f32 %v1331, %v1347
  %1351 = vrot.lane.b32.xlu0 %v1349, 116
  %v1352 = vpop.permute.xlu0 %1351
  %s1354 = scalar_lea.vmem %s4, 8
  %1355 = vst.msk [vmem:[%s1354] sm:$0x3] %vm514, %v1352
  %s1356 = scalar_lea.vmem %s0, 40
  %v1357 = vld [vmem:[%s1356] sm:$0xff]
  %1358 = vmatpush.bf16.msra.mxu0 %v210
  %1359 = vmatpush.bf16.msra.mxu0 %v206
  %1360 = vmatpush.bf16.msra.mxu0 %v202
  %1361 = vmatpush.bf16.msra.mxu0 %v198
  %1362 = vmatpush.bf16.msra.mxu0 %v194
  %1363 = vmatpush.bf16.msra.mxu0 %v190
  %1364 = vmatpush.bf16.msra.mxu0 %v186
  %1365 = vmatpush.bf16.msra.mxu0 %v182
  %1366 = vmatmul.bf16.gmra.mxu0 %v1282
  %v1367 = vpop.f32.mrf.mxu0
  %v1368 = vadd.f32 0.0, %v1367
  %v1369 = vpop.f32.mrf.mxu0
  %1370 = vdwg.mxu0
  %1371 = vmatpush.bf16.msra.mxu0 %v211
  %1372 = vmatpush.bf16.msra.mxu0 %v207
  %1373 = vmatpush.bf16.msra.mxu0 %v203
  %1374 = vmatpush.bf16.msra.mxu0 %v199
  %1375 = vmatpush.bf16.msra.mxu0 %v195
  %1376 = vmatpush.bf16.msra.mxu0 %v191
  %1377 = vmatpush.bf16.msra.mxu0 %v187
  %1378 = vmatpush.bf16.msra.mxu0 %v183
  %1379 = vmatmul.bf16.gmra.mxu0 %v1282
  %v1380 = vpop.f32.mrf.mxu0
  %v1381 = vadd.f32 0.0, %v1380
  %v1382 = vpop.f32.mrf.mxu0
  %1383 = vdwg.mxu0
  %1384 = vmatpush.bf16.msra.mxu0 %v212
  %1385 = vmatpush.bf16.msra.mxu0 %v208
  %1386 = vmatpush.bf16.msra.mxu0 %v204
  %1387 = vmatpush.bf16.msra.mxu0 %v200
  %1388 = vmatpush.bf16.msra.mxu0 %v196
  %1389 = vmatpush.bf16.msra.mxu0 %v192
  %1390 = vmatpush.bf16.msra.mxu0 %v188
  %1391 = vmatpush.bf16.msra.mxu0 %v184
  %1392 = vmatmul.bf16.gmra.mxu0 %v1282
  %v1393 = vpop.f32.mrf.mxu0
  %v1394 = vadd.f32 0.0, %v1393
  %v1395 = vpop.f32.mrf.mxu0
  %1396 = vdwg.mxu0
  %1397 = vmatpush.bf16.msra.mxu0 %v213
  %1398 = vmatpush.bf16.msra.mxu0 %v209
  %1399 = vmatpush.bf16.msra.mxu0 %v205
  %1400 = vmatpush.bf16.msra.mxu0 %v201
  %1401 = vmatpush.bf16.msra.mxu0 %v197
  %1402 = vmatpush.bf16.msra.mxu0 %v193
  %1403 = vmatpush.bf16.msra.mxu0 %v189
  %1404 = vmatpush.bf16.msra.mxu0 %v185
  %1405 = vmatmul.bf16.gmra.mxu0 %v1282
  %v1406 = vpop.f32.mrf.mxu0
  %v1407 = vadd.f32 0.0, %v1406
  %v1408 = vpop.f32.mrf.mxu0
  %1409 = vdwg.mxu0
  %v1414 = vrot.slane %v1381, 6
  %v1415 = vrot.slane %v1394, 4
  %v1416 = vrot.slane %v1407, 2
  %v1417 = vsel %vm305, %v1368, %v1414
  %v1418 = vsel %vm307, %v1415, %v1416
  %v1419 = vsel %vm309, %v1417, %v1418
  %v1421 = vadd.f32 %v1357, %v1419
  %v1422 = vxor.u32 %v1421, 2147483648
  %v1423 = vmul.f32 %v1422, 1.442695
  %v1424 = vpow.pop %v1423
  %v1425 = vadd.f32 %v1424, 1.0
  %v1426 = vrcp.pop %v1425
  %v1427 = vmul.f32 %v1425, %v1426
  %v1428 = vsub.f32 1.0, %v1427
  %v1429 = vmul.f32 %v1426, %v1428
  %v1430 = vadd.f32 %v1426, %v1429
  %vm1431 = vweird.f32 %v1425
  %vm1432 = vweird.f32 %v1426
  %vm1433 = vmor %vm1431, %vm1432
  %v1434 = vsel %vm1433, %v1426, %v1430
  %v1435 = vand.u32 2147483647, %v1425
  %vm1436 = vcmp.eq.f32.partialorder %v1435, 8.507059e+37
  %v1437 = vand.u32 %v1425, 2147483648
  %v1438 = vor.u32 1.1754944e-38, %v1437
  %v1439 = vsel %vm1436, %v1438, %v1434
  %v1440 = vmul.f32 1.0, %v1439
  %v1442 = vrot.slane %v1421, 2
  %v1444 = vxor.u32 %v1442, 2147483648
  %v1445 = vmul.f32 %v1444, 1.442695
  %v1446 = vpow.pop %v1445
  %v1447 = vadd.f32 %v1446, 1.0
  %v1448 = vrcp.pop %v1447
  %v1449 = vmul.f32 %v1447, %v1448
  %v1450 = vsub.f32 1.0, %v1449
  %v1451 = vmul.f32 %v1448, %v1450
  %v1452 = vadd.f32 %v1448, %v1451
  %vm1453 = vweird.f32 %v1447
  %vm1454 = vweird.f32 %v1448
  %vm1455 = vmor %vm1453, %vm1454
  %v1456 = vsel %vm1455, %v1448, %v1452
  %v1457 = vand.u32 2147483647, %v1447
  %vm1458 = vcmp.eq.f32.partialorder %v1457, 8.507059e+37
  %v1459 = vand.u32 %v1447, 2147483648
  %v1460 = vor.u32 1.1754944e-38, %v1459
  %v1461 = vsel %vm1458, %v1460, %v1456
  %v1462 = vmul.f32 1.0, %v1461
  %v1463 = vrot.slane %v1421, 4
  %v1465 = vtanh.pop %v1463
  %v1466 = vrot.slane %v1421, 6
  %v1468 = vxor.u32 %v1466, 2147483648
  %v1469 = vmul.f32 %v1468, 1.442695
  %v1470 = vpow.pop %v1469
  %v1471 = vadd.f32 %v1470, 1.0
  %v1472 = vrcp.pop %v1471
  %v1473 = vmul.f32 %v1471, %v1472
  %v1474 = vsub.f32 1.0, %v1473
  %v1475 = vmul.f32 %v1472, %v1474
  %v1476 = vadd.f32 %v1472, %v1475
  %vm1477 = vweird.f32 %v1471
  %vm1478 = vweird.f32 %v1472
  %vm1479 = vmor %vm1477, %vm1478
  %v1480 = vsel %vm1479, %v1472, %v1476
  %v1481 = vand.u32 2147483647, %v1471
  %vm1482 = vcmp.eq.f32.partialorder %v1481, 8.507059e+37
  %v1483 = vand.u32 %v1471, 2147483648
  %v1484 = vor.u32 1.1754944e-38, %v1483
  %v1485 = vsel %vm1482, %v1484, %v1480
  %v1486 = vmul.f32 1.0, %v1485
  %v1487 = vmul.f32 %v1462, %v1279
  %v1488 = vmul.f32 %v1440, %v1465
  %v1489 = vadd.f32 %v1487, %v1488
  %v1490 = vtanh.pop %v1489
  %v1491 = vmul.f32 %v1486, %v1490
  %v1492 = vpack.c.bf16 %v1491, %v1491
  %v1493 = vpack.c.bf16 %v1352, %v1352
  %v1495 = vsel %vm436, %v1493, 0
  %1497 = vmatpush.bf16.msra.mxu0 %v426
  %1498 = vmatpush.bf16.msra.mxu0 %v425
  %1499 = vmatpush.bf16.msra.mxu0 %v424
  %1500 = vmatpush.bf16.msra.mxu0 %v423
  %1501 = vmatpush.bf16.msra.mxu0 %v422
  %1502 = vmatpush.bf16.msra.mxu0 %v421
  %1503 = vmatpush.bf16.msra.mxu0 %v420
  %1504 = vmatpush.bf16.msra.mxu0 %v419
  %1505 = vmatmul.bf16.gmra.mxu0 %v1492
  %v1506 = vpop.f32.mrf.mxu0
  %v1507 = vadd.f32 %v78, %v1506
  %v1508 = vpop.f32.mrf.mxu0
  %1509 = vdwg.mxu0
  %1510 = vmatpush.bf16.msra.mxu0 0
  %1511 = vmatpush.bf16.msra.mxu0 0
  %1512 = vmatpush.bf16.msra.mxu0 0
  %1513 = vmatpush.bf16.msra.mxu0 0
  %1514 = vmatpush.bf16.msra.mxu0 0
  %1515 = vmatpush.bf16.msra.mxu0 0
  %1516 = vmatpush.bf16.msra.mxu0 0
  %1517 = vmatpush.bf16.msra.mxu0 %v441
  %1518 = vmatmul.bf16.gmra.mxu0 %v1495
  %v1519 = vpop.f32.mrf.mxu0
  %v1520 = vadd.f32 %v1507, %v1519
  %v1521 = vpop.f32.mrf.mxu0
  %1522 = vdwg.mxu0
  %v1523 = vxor.u32 %v1520, 2147483648
  %v1524 = vmul.f32 %v1523, 1.442695
  %v1525 = vpow.pop %v1524
  %v1526 = vadd.f32 %v1525, 1.0
  %v1527 = vrcp.pop %v1526
  %v1528 = vmul.f32 %v1526, %v1527
  %v1529 = vsub.f32 1.0, %v1528
  %v1530 = vmul.f32 %v1527, %v1529
  %v1531 = vadd.f32 %v1527, %v1530
  %vm1532 = vweird.f32 %v1526
  %vm1533 = vweird.f32 %v1527
  %vm1534 = vmor %vm1532, %vm1533
  %v1535 = vsel %vm1534, %v1527, %v1531
  %v1536 = vand.u32 2147483647, %v1526
  %vm1537 = vcmp.eq.f32.partialorder %v1536, 8.507059e+37
  %v1538 = vand.u32 %v1526, 2147483648
  %v1539 = vor.u32 1.1754944e-38, %v1538
  %v1540 = vsel %vm1537, %v1539, %v1535
  %v1541 = vmul.f32 1.0, %v1540
  %v1542 = vtanh.pop %v1520
  %v1543 = vmul.f32 %v1541, %v1343
  %1545 = vrot.lane.b32.xlu0 %v1542, 120
  %v1546 = vpop.permute.xlu0 %1545
  %v1548 = vmul.f32 %v1541, %v1546
  %1550 = vrot.lane.b32.xlu0 %v1548, 4
  %v1551 = vpop.permute.xlu0 %1550
  %v1553 = vadd.f32 %v1543, %v1551
  %v1554 = vtanh.pop %v1553
  %1556 = vrot.lane.b32.xlu0 %v1554, 8
  %v1557 = vpop.permute.xlu0 %1556
  %v1559 = vmul.f32 %v1541, %v1557
  %1561 = vrot.lane.b32.xlu0 %v1559, 116
  %v1562 = vpop.permute.xlu0 %1561
  %s1564 = scalar_lea.vmem %s4, 10
  %1565 = vst.msk [vmem:[%s1564] sm:$0x3] %vm514, %v1562
  %s1566 = scalar_lea.vmem %s0, 48
  %v1567 = vld [vmem:[%s1566] sm:$0xff]
  %1568 = vmatpush.bf16.msra.mxu0 %v210
  %1569 = vmatpush.bf16.msra.mxu0 %v206
  %1570 = vmatpush.bf16.msra.mxu0 %v202
  %1571 = vmatpush.bf16.msra.mxu0 %v198
  %1572 = vmatpush.bf16.msra.mxu0 %v194
  %1573 = vmatpush.bf16.msra.mxu0 %v190
  %1574 = vmatpush.bf16.msra.mxu0 %v186
  %1575 = vmatpush.bf16.msra.mxu0 %v182
  %1576 = vmatmul.bf16.gmra.mxu0 %v1492
  %v1577 = vpop.f32.mrf.mxu0
  %v1578 = vadd.f32 0.0, %v1577
  %v1579 = vpop.f32.mrf.mxu0
  %1580 = vdwg.mxu0
  %1581 = vmatpush.bf16.msra.mxu0 %v211
  %1582 = vmatpush.bf16.msra.mxu0 %v207
  %1583 = vmatpush.bf16.msra.mxu0 %v203
  %1584 = vmatpush.bf16.msra.mxu0 %v199
  %1585 = vmatpush.bf16.msra.mxu0 %v195
  %1586 = vmatpush.bf16.msra.mxu0 %v191
  %1587 = vmatpush.bf16.msra.mxu0 %v187
  %1588 = vmatpush.bf16.msra.mxu0 %v183
  %1589 = vmatmul.bf16.gmra.mxu0 %v1492
  %v1590 = vpop.f32.mrf.mxu0
  %v1591 = vadd.f32 0.0, %v1590
  %v1592 = vpop.f32.mrf.mxu0
  %1593 = vdwg.mxu0
  %1594 = vmatpush.bf16.msra.mxu0 %v212
  %1595 = vmatpush.bf16.msra.mxu0 %v208
  %1596 = vmatpush.bf16.msra.mxu0 %v204
  %1597 = vmatpush.bf16.msra.mxu0 %v200
  %1598 = vmatpush.bf16.msra.mxu0 %v196
  %1599 = vmatpush.bf16.msra.mxu0 %v192
  %1600 = vmatpush.bf16.msra.mxu0 %v188
  %1601 = vmatpush.bf16.msra.mxu0 %v184
  %1602 = vmatmul.bf16.gmra.mxu0 %v1492
  %v1603 = vpop.f32.mrf.mxu0
  %v1604 = vadd.f32 0.0, %v1603
  %v1605 = vpop.f32.mrf.mxu0
  %1606 = vdwg.mxu0
  %1607 = vmatpush.bf16.msra.mxu0 %v213
  %1608 = vmatpush.bf16.msra.mxu0 %v209
  %1609 = vmatpush.bf16.msra.mxu0 %v205
  %1610 = vmatpush.bf16.msra.mxu0 %v201
  %1611 = vmatpush.bf16.msra.mxu0 %v197
  %1612 = vmatpush.bf16.msra.mxu0 %v193
  %1613 = vmatpush.bf16.msra.mxu0 %v189
  %1614 = vmatpush.bf16.msra.mxu0 %v185
  %1615 = vmatmul.bf16.gmra.mxu0 %v1492
  %v1616 = vpop.f32.mrf.mxu0
  %v1617 = vadd.f32 0.0, %v1616
  %v1618 = vpop.f32.mrf.mxu0
  %1619 = vdwg.mxu0
  %v1624 = vrot.slane %v1591, 6
  %v1625 = vrot.slane %v1604, 4
  %v1626 = vrot.slane %v1617, 2
  %v1627 = vsel %vm305, %v1578, %v1624
  %v1628 = vsel %vm307, %v1625, %v1626
  %v1629 = vsel %vm309, %v1627, %v1628
  %v1631 = vadd.f32 %v1567, %v1629
  %v1632 = vxor.u32 %v1631, 2147483648
  %v1633 = vmul.f32 %v1632, 1.442695
  %v1634 = vpow.pop %v1633
  %v1635 = vadd.f32 %v1634, 1.0
  %v1636 = vrcp.pop %v1635
  %v1637 = vmul.f32 %v1635, %v1636
  %v1638 = vsub.f32 1.0, %v1637
  %v1639 = vmul.f32 %v1636, %v1638
  %v1640 = vadd.f32 %v1636, %v1639
  %vm1641 = vweird.f32 %v1635
  %vm1642 = vweird.f32 %v1636
  %vm1643 = vmor %vm1641, %vm1642
  %v1644 = vsel %vm1643, %v1636, %v1640
  %v1645 = vand.u32 2147483647, %v1635
  %vm1646 = vcmp.eq.f32.partialorder %v1645, 8.507059e+37
  %v1647 = vand.u32 %v1635, 2147483648
  %v1648 = vor.u32 1.1754944e-38, %v1647
  %v1649 = vsel %vm1646, %v1648, %v1644
  %v1650 = vmul.f32 1.0, %v1649
  %v1652 = vrot.slane %v1631, 2
  %v1654 = vxor.u32 %v1652, 2147483648
  %v1655 = vmul.f32 %v1654, 1.442695
  %v1656 = vpow.pop %v1655
  %v1657 = vadd.f32 %v1656, 1.0
  %v1658 = vrcp.pop %v1657
  %v1659 = vmul.f32 %v1657, %v1658
  %v1660 = vsub.f32 1.0, %v1659
  %v1661 = vmul.f32 %v1658, %v1660
  %v1662 = vadd.f32 %v1658, %v1661
  %vm1663 = vweird.f32 %v1657
  %vm1664 = vweird.f32 %v1658
  %vm1665 = vmor %vm1663, %vm1664
  %v1666 = vsel %vm1665, %v1658, %v1662
  %v1667 = vand.u32 2147483647, %v1657
  %vm1668 = vcmp.eq.f32.partialorder %v1667, 8.507059e+37
  %v1669 = vand.u32 %v1657, 2147483648
  %v1670 = vor.u32 1.1754944e-38, %v1669
  %v1671 = vsel %vm1668, %v1670, %v1666
  %v1672 = vmul.f32 1.0, %v1671
  %v1673 = vrot.slane %v1631, 4
  %v1675 = vtanh.pop %v1673
  %v1676 = vrot.slane %v1631, 6
  %v1678 = vxor.u32 %v1676, 2147483648
  %v1679 = vmul.f32 %v1678, 1.442695
  %v1680 = vpow.pop %v1679
  %v1681 = vadd.f32 %v1680, 1.0
  %v1682 = vrcp.pop %v1681
  %v1683 = vmul.f32 %v1681, %v1682
  %v1684 = vsub.f32 1.0, %v1683
  %v1685 = vmul.f32 %v1682, %v1684
  %v1686 = vadd.f32 %v1682, %v1685
  %vm1687 = vweird.f32 %v1681
  %vm1688 = vweird.f32 %v1682
  %vm1689 = vmor %vm1687, %vm1688
  %v1690 = vsel %vm1689, %v1682, %v1686
  %v1691 = vand.u32 2147483647, %v1681
  %vm1692 = vcmp.eq.f32.partialorder %v1691, 8.507059e+37
  %v1693 = vand.u32 %v1681, 2147483648
  %v1694 = vor.u32 1.1754944e-38, %v1693
  %v1695 = vsel %vm1692, %v1694, %v1690
  %v1696 = vmul.f32 1.0, %v1695
  %v1697 = vmul.f32 %v1672, %v1489
  %v1698 = vmul.f32 %v1650, %v1675
  %v1699 = vadd.f32 %v1697, %v1698
  %v1700 = vtanh.pop %v1699
  %v1701 = vmul.f32 %v1696, %v1700
  %v1702 = vpack.c.bf16 %v1701, %v1701
  %v1703 = vpack.c.bf16 %v1562, %v1562
  %v1705 = vsel %vm436, %v1703, 0
  %1707 = vmatpush.bf16.msra.mxu0 %v426
  %1708 = vmatpush.bf16.msra.mxu0 %v425
  %1709 = vmatpush.bf16.msra.mxu0 %v424
  %1710 = vmatpush.bf16.msra.mxu0 %v423
  %1711 = vmatpush.bf16.msra.mxu0 %v422
  %1712 = vmatpush.bf16.msra.mxu0 %v421
  %1713 = vmatpush.bf16.msra.mxu0 %v420
  %1714 = vmatpush.bf16.msra.mxu0 %v419
  %1715 = vmatmul.bf16.gmra.mxu0 %v1702
  %v1716 = vpop.f32.mrf.mxu0
  %v1717 = vadd.f32 %v78, %v1716
  %v1718 = vpop.f32.mrf.mxu0
  %1719 = vdwg.mxu0
  %1720 = vmatpush.bf16.msra.mxu0 0
  %1721 = vmatpush.bf16.msra.mxu0 0
  %1722 = vmatpush.bf16.msra.mxu0 0
  %1723 = vmatpush.bf16.msra.mxu0 0
  %1724 = vmatpush.bf16.msra.mxu0 0
  %1725 = vmatpush.bf16.msra.mxu0 0
  %1726 = vmatpush.bf16.msra.mxu0 0
  %1727 = vmatpush.bf16.msra.mxu0 %v441
  %1728 = vmatmul.bf16.gmra.mxu0 %v1705
  %v1729 = vpop.f32.mrf.mxu0
  %v1730 = vadd.f32 %v1717, %v1729
  %v1731 = vpop.f32.mrf.mxu0
  %1732 = vdwg.mxu0
  %v1733 = vxor.u32 %v1730, 2147483648
  %v1734 = vmul.f32 %v1733, 1.442695
  %v1735 = vpow.pop %v1734
  %v1736 = vadd.f32 %v1735, 1.0
  %v1737 = vrcp.pop %v1736
  %v1738 = vmul.f32 %v1736, %v1737
  %v1739 = vsub.f32 1.0, %v1738
  %v1740 = vmul.f32 %v1737, %v1739
  %v1741 = vadd.f32 %v1737, %v1740
  %vm1742 = vweird.f32 %v1736
  %vm1743 = vweird.f32 %v1737
  %vm1744 = vmor %vm1742, %vm1743
  %v1745 = vsel %vm1744, %v1737, %v1741
  %v1746 = vand.u32 2147483647, %v1736
  %vm1747 = vcmp.eq.f32.partialorder %v1746, 8.507059e+37
  %v1748 = vand.u32 %v1736, 2147483648
  %v1749 = vor.u32 1.1754944e-38, %v1748
  %v1750 = vsel %vm1747, %v1749, %v1745
  %v1751 = vmul.f32 1.0, %v1750
  %v1752 = vtanh.pop %v1730
  %v1753 = vmul.f32 %v1751, %v1553
  %1755 = vrot.lane.b32.xlu0 %v1752, 120
  %v1756 = vpop.permute.xlu0 %1755
  %v1758 = vmul.f32 %v1751, %v1756
  %1760 = vrot.lane.b32.xlu0 %v1758, 4
  %v1761 = vpop.permute.xlu0 %1760
  %v1763 = vadd.f32 %v1753, %v1761
  %v1764 = vtanh.pop %v1763
  %1766 = vrot.lane.b32.xlu0 %v1764, 8
  %v1767 = vpop.permute.xlu0 %1766
  %v1769 = vmul.f32 %v1751, %v1767
  %1771 = vrot.lane.b32.xlu0 %v1769, 116
  %v1772 = vpop.permute.xlu0 %1771
  %s1774 = scalar_lea.vmem %s4, 12
  %1775 = vst.msk [vmem:[%s1774] sm:$0x3] %vm514, %v1772
  %s1776 = scalar_lea.vmem %s0, 56
  %v1777 = vld [vmem:[%s1776] sm:$0xff]
  %1778 = vmatpush.bf16.msra.mxu0 %v210
  %1779 = vmatpush.bf16.msra.mxu0 %v206
  %1780 = vmatpush.bf16.msra.mxu0 %v202
  %1781 = vmatpush.bf16.msra.mxu0 %v198
  %1782 = vmatpush.bf16.msra.mxu0 %v194
  %1783 = vmatpush.bf16.msra.mxu0 %v190
  %1784 = vmatpush.bf16.msra.mxu0 %v186
  %1785 = vmatpush.bf16.msra.mxu0 %v182
  %1786 = vmatmul.bf16.gmra.mxu0 %v1702
  %v1787 = vpop.f32.mrf.mxu0
  %v1788 = vadd.f32 0.0, %v1787
  %v1789 = vpop.f32.mrf.mxu0
  %1790 = vdwg.mxu0
  %1791 = vmatpush.bf16.msra.mxu0 %v211
  %1792 = vmatpush.bf16.msra.mxu0 %v207
  %1793 = vmatpush.bf16.msra.mxu0 %v203
  %1794 = vmatpush.bf16.msra.mxu0 %v199
  %1795 = vmatpush.bf16.msra.mxu0 %v195
  %1796 = vmatpush.bf16.msra.mxu0 %v191
  %1797 = vmatpush.bf16.msra.mxu0 %v187
  %1798 = vmatpush.bf16.msra.mxu0 %v183
  %1799 = vmatmul.bf16.gmra.mxu0 %v1702
  %v1800 = vpop.f32.mrf.mxu0
  %v1801 = vadd.f32 0.0, %v1800
  %v1802 = vpop.f32.mrf.mxu0
  %1803 = vdwg.mxu0
  %1804 = vmatpush.bf16.msra.mxu0 %v212
  %1805 = vmatpush.bf16.msra.mxu0 %v208
  %1806 = vmatpush.bf16.msra.mxu0 %v204
  %1807 = vmatpush.bf16.msra.mxu0 %v200
  %1808 = vmatpush.bf16.msra.mxu0 %v196
  %1809 = vmatpush.bf16.msra.mxu0 %v192
  %1810 = vmatpush.bf16.msra.mxu0 %v188
  %1811 = vmatpush.bf16.msra.mxu0 %v184
  %1812 = vmatmul.bf16.gmra.mxu0 %v1702
  %v1813 = vpop.f32.mrf.mxu0
  %v1814 = vadd.f32 0.0, %v1813
  %v1815 = vpop.f32.mrf.mxu0
  %1816 = vdwg.mxu0
  %1817 = vmatpush.bf16.msra.mxu0 %v213
  %1818 = vmatpush.bf16.msra.mxu0 %v209
  %1819 = vmatpush.bf16.msra.mxu0 %v205
  %1820 = vmatpush.bf16.msra.mxu0 %v201
  %1821 = vmatpush.bf16.msra.mxu0 %v197
  %1822 = vmatpush.bf16.msra.mxu0 %v193
  %1823 = vmatpush.bf16.msra.mxu0 %v189
  %1824 = vmatpush.bf16.msra.mxu0 %v185
  %1825 = vmatmul.bf16.gmra.mxu0 %v1702
  %v1826 = vpop.f32.mrf.mxu0
  %v1827 = vadd.f32 0.0, %v1826
  %v1828 = vpop.f32.mrf.mxu0
  %1829 = vdwg.mxu0
  %v1834 = vrot.slane %v1801, 6
  %v1835 = vrot.slane %v1814, 4
  %v1836 = vrot.slane %v1827, 2
  %v1837 = vsel %vm305, %v1788, %v1834
  %v1838 = vsel %vm307, %v1835, %v1836
  %v1839 = vsel %vm309, %v1837, %v1838
  %v1841 = vadd.f32 %v1777, %v1839
  %v1842 = vxor.u32 %v1841, 2147483648
  %v1843 = vmul.f32 %v1842, 1.442695
  %v1844 = vpow.pop %v1843
  %v1845 = vadd.f32 %v1844, 1.0
  %v1846 = vrcp.pop %v1845
  %v1847 = vmul.f32 %v1845, %v1846
  %v1848 = vsub.f32 1.0, %v1847
  %v1849 = vmul.f32 %v1846, %v1848
  %v1850 = vadd.f32 %v1846, %v1849
  %vm1851 = vweird.f32 %v1845
  %vm1852 = vweird.f32 %v1846
  %vm1853 = vmor %vm1851, %vm1852
  %v1854 = vsel %vm1853, %v1846, %v1850
  %v1855 = vand.u32 2147483647, %v1845
  %vm1856 = vcmp.eq.f32.partialorder %v1855, 8.507059e+37
  %v1857 = vand.u32 %v1845, 2147483648
  %v1858 = vor.u32 1.1754944e-38, %v1857
  %v1859 = vsel %vm1856, %v1858, %v1854
  %v1860 = vmul.f32 1.0, %v1859
  %v1862 = vrot.slane %v1841, 2
  %v1864 = vxor.u32 %v1862, 2147483648
  %v1865 = vmul.f32 %v1864, 1.442695
  %v1866 = vpow.pop %v1865
  %v1867 = vadd.f32 %v1866, 1.0
  %v1868 = vrcp.pop %v1867
  %v1869 = vmul.f32 %v1867, %v1868
  %v1870 = vsub.f32 1.0, %v1869
  %v1871 = vmul.f32 %v1868, %v1870
  %v1872 = vadd.f32 %v1868, %v1871
  %vm1873 = vweird.f32 %v1867
  %vm1874 = vweird.f32 %v1868
  %vm1875 = vmor %vm1873, %vm1874
  %v1876 = vsel %vm1875, %v1868, %v1872
  %v1877 = vand.u32 2147483647, %v1867
  %vm1878 = vcmp.eq.f32.partialorder %v1877, 8.507059e+37
  %v1879 = vand.u32 %v1867, 2147483648
  %v1880 = vor.u32 1.1754944e-38, %v1879
  %v1881 = vsel %vm1878, %v1880, %v1876
  %v1882 = vmul.f32 1.0, %v1881
  %v1883 = vrot.slane %v1841, 4
  %v1885 = vtanh.pop %v1883
  %v1886 = vrot.slane %v1841, 6
  %v1888 = vxor.u32 %v1886, 2147483648
  %v1889 = vmul.f32 %v1888, 1.442695
  %v1890 = vpow.pop %v1889
  %v1891 = vadd.f32 %v1890, 1.0
  %v1892 = vrcp.pop %v1891
  %v1893 = vmul.f32 %v1891, %v1892
  %v1894 = vsub.f32 1.0, %v1893
  %v1895 = vmul.f32 %v1892, %v1894
  %v1896 = vadd.f32 %v1892, %v1895
  %vm1897 = vweird.f32 %v1891
  %vm1898 = vweird.f32 %v1892
  %vm1899 = vmor %vm1897, %vm1898
  %v1900 = vsel %vm1899, %v1892, %v1896
  %v1901 = vand.u32 2147483647, %v1891
  %vm1902 = vcmp.eq.f32.partialorder %v1901, 8.507059e+37
  %v1903 = vand.u32 %v1891, 2147483648
  %v1904 = vor.u32 1.1754944e-38, %v1903
  %v1905 = vsel %vm1902, %v1904, %v1900
  %v1906 = vmul.f32 1.0, %v1905
  %v1907 = vmul.f32 %v1882, %v1699
  %v1908 = vmul.f32 %v1860, %v1885
  %v1909 = vadd.f32 %v1907, %v1908
  %v1910 = vtanh.pop %v1909
  %v1911 = vmul.f32 %v1906, %v1910
  %v1912 = vpack.c.bf16 %v1911, %v1911
  %v1913 = vpack.c.bf16 %v1772, %v1772
  %v1915 = vsel %vm436, %v1913, 0
  %1917 = vmatpush.bf16.msra.mxu0 %v426
  %1918 = vmatpush.bf16.msra.mxu0 %v425
  %1919 = vmatpush.bf16.msra.mxu0 %v424
  %1920 = vmatpush.bf16.msra.mxu0 %v423
  %1921 = vmatpush.bf16.msra.mxu0 %v422
  %1922 = vmatpush.bf16.msra.mxu0 %v421
  %1923 = vmatpush.bf16.msra.mxu0 %v420
  %1924 = vmatpush.bf16.msra.mxu0 %v419
  %1925 = vmatmul.bf16.gmra.mxu0 %v1912
  %v1926 = vpop.f32.mrf.mxu0
  %v1927 = vadd.f32 %v78, %v1926
  %v1928 = vpop.f32.mrf.mxu0
  %1929 = vdwg.mxu0
  %1930 = vmatpush.bf16.msra.mxu0 0
  %1931 = vmatpush.bf16.msra.mxu0 0
  %1932 = vmatpush.bf16.msra.mxu0 0
  %1933 = vmatpush.bf16.msra.mxu0 0
  %1934 = vmatpush.bf16.msra.mxu0 0
  %1935 = vmatpush.bf16.msra.mxu0 0
  %1936 = vmatpush.bf16.msra.mxu0 0
  %1937 = vmatpush.bf16.msra.mxu0 %v441
  %1938 = vmatmul.bf16.gmra.mxu0 %v1915
  %v1939 = vpop.f32.mrf.mxu0
  %v1940 = vadd.f32 %v1927, %v1939
  %v1941 = vpop.f32.mrf.mxu0
  %1942 = vdwg.mxu0
  %v1943 = vxor.u32 %v1940, 2147483648
  %v1944 = vmul.f32 %v1943, 1.442695
  %v1945 = vpow.pop %v1944
  %v1946 = vadd.f32 %v1945, 1.0
  %v1947 = vrcp.pop %v1946
  %v1948 = vmul.f32 %v1946, %v1947
  %v1949 = vsub.f32 1.0, %v1948
  %v1950 = vmul.f32 %v1947, %v1949
  %v1951 = vadd.f32 %v1947, %v1950
  %vm1952 = vweird.f32 %v1946
  %vm1953 = vweird.f32 %v1947
  %vm1954 = vmor %vm1952, %vm1953
  %v1955 = vsel %vm1954, %v1947, %v1951
  %v1956 = vand.u32 2147483647, %v1946
  %vm1957 = vcmp.eq.f32.partialorder %v1956, 8.507059e+37
  %v1958 = vand.u32 %v1946, 2147483648
  %v1959 = vor.u32 1.1754944e-38, %v1958
  %v1960 = vsel %vm1957, %v1959, %v1955
  %v1961 = vmul.f32 1.0, %v1960
  %v1962 = vtanh.pop %v1940
  %v1963 = vmul.f32 %v1961, %v1763
  %1965 = vrot.lane.b32.xlu0 %v1962, 120
  %v1966 = vpop.permute.xlu0 %1965
  %v1968 = vmul.f32 %v1961, %v1966
  %1970 = vrot.lane.b32.xlu0 %v1968, 4
  %v1971 = vpop.permute.xlu0 %1970
  %v1973 = vadd.f32 %v1963, %v1971
  %v1974 = vtanh.pop %v1973
  %1976 = vrot.lane.b32.xlu0 %v1974, 8
  %v1977 = vpop.permute.xlu0 %1976
  %v1979 = vmul.f32 %v1961, %v1977
  %1981 = vrot.lane.b32.xlu0 %v1979, 116
  %v1982 = vpop.permute.xlu0 %1981
  %s1984 = scalar_lea.vmem %s4, 14
  %1985 = vst.msk [vmem:[%s1984] sm:$0x3] %vm514, %v1982
  %s1986 = scalar_lea.vmem %s0, 64
  %v1987 = vld [vmem:[%s1986] sm:$0xff]
  %1988 = vmatpush.bf16.msra.mxu0 %v210
  %1989 = vmatpush.bf16.msra.mxu0 %v206
  %1990 = vmatpush.bf16.msra.mxu0 %v202
  %1991 = vmatpush.bf16.msra.mxu0 %v198
  %1992 = vmatpush.bf16.msra.mxu0 %v194
  %1993 = vmatpush.bf16.msra.mxu0 %v190
  %1994 = vmatpush.bf16.msra.mxu0 %v186
  %1995 = vmatpush.bf16.msra.mxu0 %v182
  %1996 = vmatmul.bf16.gmra.mxu0 %v1912
  %v1997 = vpop.f32.mrf.mxu0
  %v1998 = vadd.f32 0.0, %v1997
  %v1999 = vpop.f32.mrf.mxu0
  %2000 = vdwg.mxu0
  %2001 = vmatpush.bf16.msra.mxu0 %v211
  %2002 = vmatpush.bf16.msra.mxu0 %v207
  %2003 = vmatpush.bf16.msra.mxu0 %v203
  %2004 = vmatpush.bf16.msra.mxu0 %v199
  %2005 = vmatpush.bf16.msra.mxu0 %v195
  %2006 = vmatpush.bf16.msra.mxu0 %v191
  %2007 = vmatpush.bf16.msra.mxu0 %v187
  %2008 = vmatpush.bf16.msra.mxu0 %v183
  %2009 = vmatmul.bf16.gmra.mxu0 %v1912
  %v2010 = vpop.f32.mrf.mxu0
  %v2011 = vadd.f32 0.0, %v2010
  %v2012 = vpop.f32.mrf.mxu0
  %2013 = vdwg.mxu0
  %2014 = vmatpush.bf16.msra.mxu0 %v212
  %2015 = vmatpush.bf16.msra.mxu0 %v208
  %2016 = vmatpush.bf16.msra.mxu0 %v204
  %2017 = vmatpush.bf16.msra.mxu0 %v200
  %2018 = vmatpush.bf16.msra.mxu0 %v196
  %2019 = vmatpush.bf16.msra.mxu0 %v192
  %2020 = vmatpush.bf16.msra.mxu0 %v188
  %2021 = vmatpush.bf16.msra.mxu0 %v184
  %2022 = vmatmul.bf16.gmra.mxu0 %v1912
  %v2023 = vpop.f32.mrf.mxu0
  %v2024 = vadd.f32 0.0, %v2023
  %v2025 = vpop.f32.mrf.mxu0
  %2026 = vdwg.mxu0
  %2027 = vmatpush.bf16.msra.mxu0 %v213
  %2028 = vmatpush.bf16.msra.mxu0 %v209
  %2029 = vmatpush.bf16.msra.mxu0 %v205
  %2030 = vmatpush.bf16.msra.mxu0 %v201
  %2031 = vmatpush.bf16.msra.mxu0 %v197
  %2032 = vmatpush.bf16.msra.mxu0 %v193
  %2033 = vmatpush.bf16.msra.mxu0 %v189
  %2034 = vmatpush.bf16.msra.mxu0 %v185
  %2035 = vmatmul.bf16.gmra.mxu0 %v1912
  %v2036 = vpop.f32.mrf.mxu0
  %v2037 = vadd.f32 0.0, %v2036
  %v2038 = vpop.f32.mrf.mxu0
  %2039 = vdwg.mxu0
  %v2044 = vrot.slane %v2011, 6
  %v2045 = vrot.slane %v2024, 4
  %v2046 = vrot.slane %v2037, 2
  %v2047 = vsel %vm305, %v1998, %v2044
  %v2048 = vsel %vm307, %v2045, %v2046
  %v2049 = vsel %vm309, %v2047, %v2048
  %v2051 = vadd.f32 %v1987, %v2049
  %v2052 = vxor.u32 %v2051, 2147483648
  %v2053 = vmul.f32 %v2052, 1.442695
  %v2054 = vpow.pop %v2053
  %v2055 = vadd.f32 %v2054, 1.0
  %v2056 = vrcp.pop %v2055
  %v2057 = vmul.f32 %v2055, %v2056
  %v2058 = vsub.f32 1.0, %v2057
  %v2059 = vmul.f32 %v2056, %v2058
  %v2060 = vadd.f32 %v2056, %v2059
  %vm2061 = vweird.f32 %v2055
  %vm2062 = vweird.f32 %v2056
  %vm2063 = vmor %vm2061, %vm2062
  %v2064 = vsel %vm2063, %v2056, %v2060
  %v2065 = vand.u32 2147483647, %v2055
  %vm2066 = vcmp.eq.f32.partialorder %v2065, 8.507059e+37
  %v2067 = vand.u32 %v2055, 2147483648
  %v2068 = vor.u32 1.1754944e-38, %v2067
  %v2069 = vsel %vm2066, %v2068, %v2064
  %v2070 = vmul.f32 1.0, %v2069
  %v2072 = vrot.slane %v2051, 2
  %v2074 = vxor.u32 %v2072, 2147483648
  %v2075 = vmul.f32 %v2074, 1.442695
  %v2076 = vpow.pop %v2075
  %v2077 = vadd.f32 %v2076, 1.0
  %v2078 = vrcp.pop %v2077
  %v2079 = vmul.f32 %v2077, %v2078
  %v2080 = vsub.f32 1.0, %v2079
  %v2081 = vmul.f32 %v2078, %v2080
  %v2082 = vadd.f32 %v2078, %v2081
  %vm2083 = vweird.f32 %v2077
  %vm2084 = vweird.f32 %v2078
  %vm2085 = vmor %vm2083, %vm2084
  %v2086 = vsel %vm2085, %v2078, %v2082
  %v2087 = vand.u32 2147483647, %v2077
  %vm2088 = vcmp.eq.f32.partialorder %v2087, 8.507059e+37
  %v2089 = vand.u32 %v2077, 2147483648
  %v2090 = vor.u32 1.1754944e-38, %v2089
  %v2091 = vsel %vm2088, %v2090, %v2086
  %v2092 = vmul.f32 1.0, %v2091
  %v2093 = vrot.slane %v2051, 4
  %v2095 = vtanh.pop %v2093
  %v2096 = vrot.slane %v2051, 6
  %v2098 = vxor.u32 %v2096, 2147483648
  %v2099 = vmul.f32 %v2098, 1.442695
  %v2100 = vpow.pop %v2099
  %v2101 = vadd.f32 %v2100, 1.0
  %v2102 = vrcp.pop %v2101
  %v2103 = vmul.f32 %v2101, %v2102
  %v2104 = vsub.f32 1.0, %v2103
  %v2105 = vmul.f32 %v2102, %v2104
  %v2106 = vadd.f32 %v2102, %v2105
  %vm2107 = vweird.f32 %v2101
  %vm2108 = vweird.f32 %v2102
  %vm2109 = vmor %vm2107, %vm2108
  %v2110 = vsel %vm2109, %v2102, %v2106
  %v2111 = vand.u32 2147483647, %v2101
  %vm2112 = vcmp.eq.f32.partialorder %v2111, 8.507059e+37
  %v2113 = vand.u32 %v2101, 2147483648
  %v2114 = vor.u32 1.1754944e-38, %v2113
  %v2115 = vsel %vm2112, %v2114, %v2110
  %v2116 = vmul.f32 1.0, %v2115
  %v2117 = vmul.f32 %v2092, %v1909
  %v2118 = vmul.f32 %v2070, %v2095
  %v2119 = vadd.f32 %v2117, %v2118
  %v2120 = vtanh.pop %v2119
  %v2121 = vmul.f32 %v2116, %v2120
  %v2122 = vpack.c.bf16 %v2121, %v2121
  %v2123 = vpack.c.bf16 %v1982, %v1982
  %v2125 = vsel %vm436, %v2123, 0
  %2127 = vmatpush.bf16.msra.mxu0 %v426
  %2128 = vmatpush.bf16.msra.mxu0 %v425
  %2129 = vmatpush.bf16.msra.mxu0 %v424
  %2130 = vmatpush.bf16.msra.mxu0 %v423
  %2131 = vmatpush.bf16.msra.mxu0 %v422
  %2132 = vmatpush.bf16.msra.mxu0 %v421
  %2133 = vmatpush.bf16.msra.mxu0 %v420
  %2134 = vmatpush.bf16.msra.mxu0 %v419
  %2135 = vmatmul.bf16.gmra.mxu0 %v2122
  %v2136 = vpop.f32.mrf.mxu0
  %v2137 = vadd.f32 %v78, %v2136
  %v2138 = vpop.f32.mrf.mxu0
  %2139 = vdwg.mxu0
  %2140 = vmatpush.bf16.msra.mxu0 0
  %2141 = vmatpush.bf16.msra.mxu0 0
  %2142 = vmatpush.bf16.msra.mxu0 0
  %2143 = vmatpush.bf16.msra.mxu0 0
  %2144 = vmatpush.bf16.msra.mxu0 0
  %2145 = vmatpush.bf16.msra.mxu0 0
  %2146 = vmatpush.bf16.msra.mxu0 0
  %2147 = vmatpush.bf16.msra.mxu0 %v441
  %2148 = vmatmul.bf16.gmra.mxu0 %v2125
  %v2149 = vpop.f32.mrf.mxu0
  %v2150 = vadd.f32 %v2137, %v2149
  %v2151 = vpop.f32.mrf.mxu0
  %2152 = vdwg.mxu0
  %v2153 = vxor.u32 %v2150, 2147483648
  %v2154 = vmul.f32 %v2153, 1.442695
  %v2155 = vpow.pop %v2154
  %v2156 = vadd.f32 %v2155, 1.0
  %v2157 = vrcp.pop %v2156
  %v2158 = vmul.f32 %v2156, %v2157
  %v2159 = vsub.f32 1.0, %v2158
  %v2160 = vmul.f32 %v2157, %v2159
  %v2161 = vadd.f32 %v2157, %v2160
  %vm2162 = vweird.f32 %v2156
  %vm2163 = vweird.f32 %v2157
  %vm2164 = vmor %vm2162, %vm2163
  %v2165 = vsel %vm2164, %v2157, %v2161
  %v2166 = vand.u32 2147483647, %v2156
  %vm2167 = vcmp.eq.f32.partialorder %v2166, 8.507059e+37
  %v2168 = vand.u32 %v2156, 2147483648
  %v2169 = vor.u32 1.1754944e-38, %v2168
  %v2170 = vsel %vm2167, %v2169, %v2165
  %v2171 = vmul.f32 1.0, %v2170
  %v2172 = vtanh.pop %v2150
  %v2173 = vmul.f32 %v2171, %v1973
  %2175 = vrot.lane.b32.xlu0 %v2172, 120
  %v2176 = vpop.permute.xlu0 %2175
  %v2178 = vmul.f32 %v2171, %v2176
  %2180 = vrot.lane.b32.xlu0 %v2178, 4
  %v2181 = vpop.permute.xlu0 %2180
  %v2183 = vadd.f32 %v2173, %v2181
  %v2184 = vtanh.pop %v2183
  %2186 = vrot.lane.b32.xlu0 %v2184, 8
  %v2187 = vpop.permute.xlu0 %2186
  %v2189 = vmul.f32 %v2171, %v2187
  %2191 = vrot.lane.b32.xlu0 %v2189, 116
  %v2192 = vpop.permute.xlu0 %2191
  %s2194 = scalar_lea.vmem %s4, 16
  %2195 = vst.msk [vmem:[%s2194] sm:$0x3] %vm514, %v2192
  %s2196 = scalar_lea.vmem %s0, 72
  %v2197 = vld [vmem:[%s2196] sm:$0xff]
  %2198 = vmatpush.bf16.msra.mxu0 %v210
  %2199 = vmatpush.bf16.msra.mxu0 %v206
  %2200 = vmatpush.bf16.msra.mxu0 %v202
  %2201 = vmatpush.bf16.msra.mxu0 %v198
  %2202 = vmatpush.bf16.msra.mxu0 %v194
  %2203 = vmatpush.bf16.msra.mxu0 %v190
  %2204 = vmatpush.bf16.msra.mxu0 %v186
  %2205 = vmatpush.bf16.msra.mxu0 %v182
  %2206 = vmatmul.bf16.gmra.mxu0 %v2122
  %v2207 = vpop.f32.mrf.mxu0
  %v2208 = vadd.f32 0.0, %v2207
  %v2209 = vpop.f32.mrf.mxu0
  %2210 = vdwg.mxu0
  %2211 = vmatpush.bf16.msra.mxu0 %v211
  %2212 = vmatpush.bf16.msra.mxu0 %v207
  %2213 = vmatpush.bf16.msra.mxu0 %v203
  %2214 = vmatpush.bf16.msra.mxu0 %v199
  %2215 = vmatpush.bf16.msra.mxu0 %v195
  %2216 = vmatpush.bf16.msra.mxu0 %v191
  %2217 = vmatpush.bf16.msra.mxu0 %v187
  %2218 = vmatpush.bf16.msra.mxu0 %v183
  %2219 = vmatmul.bf16.gmra.mxu0 %v2122
  %v2220 = vpop.f32.mrf.mxu0
  %v2221 = vadd.f32 0.0, %v2220
  %v2222 = vpop.f32.mrf.mxu0
  %2223 = vdwg.mxu0
  %2224 = vmatpush.bf16.msra.mxu0 %v212
  %2225 = vmatpush.bf16.msra.mxu0 %v208
  %2226 = vmatpush.bf16.msra.mxu0 %v204
  %2227 = vmatpush.bf16.msra.mxu0 %v200
  %2228 = vmatpush.bf16.msra.mxu0 %v196
  %2229 = vmatpush.bf16.msra.mxu0 %v192
  %2230 = vmatpush.bf16.msra.mxu0 %v188
  %2231 = vmatpush.bf16.msra.mxu0 %v184
  %2232 = vmatmul.bf16.gmra.mxu0 %v2122
  %v2233 = vpop.f32.mrf.mxu0
  %v2234 = vadd.f32 0.0, %v2233
  %v2235 = vpop.f32.mrf.mxu0
  %2236 = vdwg.mxu0
  %2237 = vmatpush.bf16.msra.mxu0 %v213
  %2238 = vmatpush.bf16.msra.mxu0 %v209
  %2239 = vmatpush.bf16.msra.mxu0 %v205
  %2240 = vmatpush.bf16.msra.mxu0 %v201
  %2241 = vmatpush.bf16.msra.mxu0 %v197
  %2242 = vmatpush.bf16.msra.mxu0 %v193
  %2243 = vmatpush.bf16.msra.mxu0 %v189
  %2244 = vmatpush.bf16.msra.mxu0 %v185
  %2245 = vmatmul.bf16.gmra.mxu0 %v2122
  %v2246 = vpop.f32.mrf.mxu0
  %v2247 = vadd.f32 0.0, %v2246
  %v2248 = vpop.f32.mrf.mxu0
  %2249 = vdwg.mxu0
  %v2254 = vrot.slane %v2221, 6
  %v2255 = vrot.slane %v2234, 4
  %v2256 = vrot.slane %v2247, 2
  %v2257 = vsel %vm305, %v2208, %v2254
  %v2258 = vsel %vm307, %v2255, %v2256
  %v2259 = vsel %vm309, %v2257, %v2258
  %v2261 = vadd.f32 %v2197, %v2259
  %v2262 = vxor.u32 %v2261, 2147483648
  %v2263 = vmul.f32 %v2262, 1.442695
  %v2264 = vpow.pop %v2263
  %v2265 = vadd.f32 %v2264, 1.0
  %v2266 = vrcp.pop %v2265
  %v2267 = vmul.f32 %v2265, %v2266
  %v2268 = vsub.f32 1.0, %v2267
  %v2269 = vmul.f32 %v2266, %v2268
  %v2270 = vadd.f32 %v2266, %v2269
  %vm2271 = vweird.f32 %v2265
  %vm2272 = vweird.f32 %v2266
  %vm2273 = vmor %vm2271, %vm2272
  %v2274 = vsel %vm2273, %v2266, %v2270
  %v2275 = vand.u32 2147483647, %v2265
  %vm2276 = vcmp.eq.f32.partialorder %v2275, 8.507059e+37
  %v2277 = vand.u32 %v2265, 2147483648
  %v2278 = vor.u32 1.1754944e-38, %v2277
  %v2279 = vsel %vm2276, %v2278, %v2274
  %v2280 = vmul.f32 1.0, %v2279
  %v2282 = vrot.slane %v2261, 2
  %v2284 = vxor.u32 %v2282, 2147483648
  %v2285 = vmul.f32 %v2284, 1.442695
  %v2286 = vpow.pop %v2285
  %v2287 = vadd.f32 %v2286, 1.0
  %v2288 = vrcp.pop %v2287
  %v2289 = vmul.f32 %v2287, %v2288
  %v2290 = vsub.f32 1.0, %v2289
  %v2291 = vmul.f32 %v2288, %v2290
  %v2292 = vadd.f32 %v2288, %v2291
  %vm2293 = vweird.f32 %v2287
  %vm2294 = vweird.f32 %v2288
  %vm2295 = vmor %vm2293, %vm2294
  %v2296 = vsel %vm2295, %v2288, %v2292
  %v2297 = vand.u32 2147483647, %v2287
  %vm2298 = vcmp.eq.f32.partialorder %v2297, 8.507059e+37
  %v2299 = vand.u32 %v2287, 2147483648
  %v2300 = vor.u32 1.1754944e-38, %v2299
  %v2301 = vsel %vm2298, %v2300, %v2296
  %v2302 = vmul.f32 1.0, %v2301
  %v2303 = vrot.slane %v2261, 4
  %v2305 = vtanh.pop %v2303
  %v2306 = vrot.slane %v2261, 6
  %v2308 = vxor.u32 %v2306, 2147483648
  %v2309 = vmul.f32 %v2308, 1.442695
  %v2310 = vpow.pop %v2309
  %v2311 = vadd.f32 %v2310, 1.0
  %v2312 = vrcp.pop %v2311
  %v2313 = vmul.f32 %v2311, %v2312
  %v2314 = vsub.f32 1.0, %v2313
  %v2315 = vmul.f32 %v2312, %v2314
  %v2316 = vadd.f32 %v2312, %v2315
  %vm2317 = vweird.f32 %v2311
  %vm2318 = vweird.f32 %v2312
  %vm2319 = vmor %vm2317, %vm2318
  %v2320 = vsel %vm2319, %v2312, %v2316
  %v2321 = vand.u32 2147483647, %v2311
  %vm2322 = vcmp.eq.f32.partialorder %v2321, 8.507059e+37
  %v2323 = vand.u32 %v2311, 2147483648
  %v2324 = vor.u32 1.1754944e-38, %v2323
  %v2325 = vsel %vm2322, %v2324, %v2320
  %v2326 = vmul.f32 1.0, %v2325
  %v2327 = vmul.f32 %v2302, %v2119
  %v2328 = vmul.f32 %v2280, %v2305
  %v2329 = vadd.f32 %v2327, %v2328
  %v2330 = vtanh.pop %v2329
  %v2331 = vmul.f32 %v2326, %v2330
  %v2332 = vpack.c.bf16 %v2331, %v2331
  %v2333 = vpack.c.bf16 %v2192, %v2192
  %v2335 = vsel %vm436, %v2333, 0
  %2337 = vmatpush.bf16.msra.mxu0 %v426
  %2338 = vmatpush.bf16.msra.mxu0 %v425
  %2339 = vmatpush.bf16.msra.mxu0 %v424
  %2340 = vmatpush.bf16.msra.mxu0 %v423
  %2341 = vmatpush.bf16.msra.mxu0 %v422
  %2342 = vmatpush.bf16.msra.mxu0 %v421
  %2343 = vmatpush.bf16.msra.mxu0 %v420
  %2344 = vmatpush.bf16.msra.mxu0 %v419
  %2345 = vmatmul.bf16.gmra.mxu0 %v2332
  %v2346 = vpop.f32.mrf.mxu0
  %v2347 = vadd.f32 %v78, %v2346
  %v2348 = vpop.f32.mrf.mxu0
  %2349 = vdwg.mxu0
  %2350 = vmatpush.bf16.msra.mxu0 0
  %2351 = vmatpush.bf16.msra.mxu0 0
  %2352 = vmatpush.bf16.msra.mxu0 0
  %2353 = vmatpush.bf16.msra.mxu0 0
  %2354 = vmatpush.bf16.msra.mxu0 0
  %2355 = vmatpush.bf16.msra.mxu0 0
  %2356 = vmatpush.bf16.msra.mxu0 0
  %2357 = vmatpush.bf16.msra.mxu0 %v441
  %2358 = vmatmul.bf16.gmra.mxu0 %v2335
  %v2359 = vpop.f32.mrf.mxu0
  %v2360 = vadd.f32 %v2347, %v2359
  %v2361 = vpop.f32.mrf.mxu0
  %2362 = vdwg.mxu0
  %v2363 = vxor.u32 %v2360, 2147483648
  %v2364 = vmul.f32 %v2363, 1.442695
  %v2365 = vpow.pop %v2364
  %v2366 = vadd.f32 %v2365, 1.0
  %v2367 = vrcp.pop %v2366
  %v2368 = vmul.f32 %v2366, %v2367
  %v2369 = vsub.f32 1.0, %v2368
  %v2370 = vmul.f32 %v2367, %v2369
  %v2371 = vadd.f32 %v2367, %v2370
  %vm2372 = vweird.f32 %v2366
  %vm2373 = vweird.f32 %v2367
  %vm2374 = vmor %vm2372, %vm2373
  %v2375 = vsel %vm2374, %v2367, %v2371
  %v2376 = vand.u32 2147483647, %v2366
  %vm2377 = vcmp.eq.f32.partialorder %v2376, 8.507059e+37
  %v2378 = vand.u32 %v2366, 2147483648
  %v2379 = vor.u32 1.1754944e-38, %v2378
  %v2380 = vsel %vm2377, %v2379, %v2375
  %v2381 = vmul.f32 1.0, %v2380
  %v2382 = vtanh.pop %v2360
  %v2383 = vmul.f32 %v2381, %v2183
  %2385 = vrot.lane.b32.xlu0 %v2382, 120
  %v2386 = vpop.permute.xlu0 %2385
  %v2388 = vmul.f32 %v2381, %v2386
  %2390 = vrot.lane.b32.xlu0 %v2388, 4
  %v2391 = vpop.permute.xlu0 %2390
  %v2393 = vadd.f32 %v2383, %v2391
  %v2394 = vtanh.pop %v2393
  %2396 = vrot.lane.b32.xlu0 %v2394, 8
  %v2397 = vpop.permute.xlu0 %2396
  %v2399 = vmul.f32 %v2381, %v2397
  %2401 = vrot.lane.b32.xlu0 %v2399, 116
  %v2402 = vpop.permute.xlu0 %2401
  %s2404 = scalar_lea.vmem %s4, 18
  %2405 = vst.msk [vmem:[%s2404] sm:$0x3] %vm514, %v2402
  %s2406 = scalar_lea.vmem %s0, 80
  %v2407 = vld [vmem:[%s2406] sm:$0xff]
  %2408 = vmatpush.bf16.msra.mxu0 %v210
  %2409 = vmatpush.bf16.msra.mxu0 %v206
  %2410 = vmatpush.bf16.msra.mxu0 %v202
  %2411 = vmatpush.bf16.msra.mxu0 %v198
  %2412 = vmatpush.bf16.msra.mxu0 %v194
  %2413 = vmatpush.bf16.msra.mxu0 %v190
  %2414 = vmatpush.bf16.msra.mxu0 %v186
  %2415 = vmatpush.bf16.msra.mxu0 %v182
  %2416 = vmatmul.bf16.gmra.mxu0 %v2332
  %v2417 = vpop.f32.mrf.mxu0
  %v2418 = vadd.f32 0.0, %v2417
  %v2419 = vpop.f32.mrf.mxu0
  %2420 = vdwg.mxu0
  %2421 = vmatpush.bf16.msra.mxu0 %v211
  %2422 = vmatpush.bf16.msra.mxu0 %v207
  %2423 = vmatpush.bf16.msra.mxu0 %v203
  %2424 = vmatpush.bf16.msra.mxu0 %v199
  %2425 = vmatpush.bf16.msra.mxu0 %v195
  %2426 = vmatpush.bf16.msra.mxu0 %v191
  %2427 = vmatpush.bf16.msra.mxu0 %v187
  %2428 = vmatpush.bf16.msra.mxu0 %v183
  %2429 = vmatmul.bf16.gmra.mxu0 %v2332
  %v2430 = vpop.f32.mrf.mxu0
  %v2431 = vadd.f32 0.0, %v2430
  %v2432 = vpop.f32.mrf.mxu0
  %2433 = vdwg.mxu0
  %2434 = vmatpush.bf16.msra.mxu0 %v212
  %2435 = vmatpush.bf16.msra.mxu0 %v208
  %2436 = vmatpush.bf16.msra.mxu0 %v204
  %2437 = vmatpush.bf16.msra.mxu0 %v200
  %2438 = vmatpush.bf16.msra.mxu0 %v196
  %2439 = vmatpush.bf16.msra.mxu0 %v192
  %2440 = vmatpush.bf16.msra.mxu0 %v188
  %2441 = vmatpush.bf16.msra.mxu0 %v184
  %2442 = vmatmul.bf16.gmra.mxu0 %v2332
  %v2443 = vpop.f32.mrf.mxu0
  %v2444 = vadd.f32 0.0, %v2443
  %v2445 = vpop.f32.mrf.mxu0
  %2446 = vdwg.mxu0
  %2447 = vmatpush.bf16.msra.mxu0 %v213
  %2448 = vmatpush.bf16.msra.mxu0 %v209
  %2449 = vmatpush.bf16.msra.mxu0 %v205
  %2450 = vmatpush.bf16.msra.mxu0 %v201
  %2451 = vmatpush.bf16.msra.mxu0 %v197
  %2452 = vmatpush.bf16.msra.mxu0 %v193
  %2453 = vmatpush.bf16.msra.mxu0 %v189
  %2454 = vmatpush.bf16.msra.mxu0 %v185
  %2455 = vmatmul.bf16.gmra.mxu0 %v2332
  %v2456 = vpop.f32.mrf.mxu0
  %v2457 = vadd.f32 0.0, %v2456
  %v2458 = vpop.f32.mrf.mxu0
  %2459 = vdwg.mxu0
  %v2464 = vrot.slane %v2431, 6
  %v2465 = vrot.slane %v2444, 4
  %v2466 = vrot.slane %v2457, 2
  %v2467 = vsel %vm305, %v2418, %v2464
  %v2468 = vsel %vm307, %v2465, %v2466
  %v2469 = vsel %vm309, %v2467, %v2468
  %v2471 = vadd.f32 %v2407, %v2469
  %v2472 = vxor.u32 %v2471, 2147483648
  %v2473 = vmul.f32 %v2472, 1.442695
  %v2474 = vpow.pop %v2473
  %v2475 = vadd.f32 %v2474, 1.0
  %v2476 = vrcp.pop %v2475
  %v2477 = vmul.f32 %v2475, %v2476
  %v2478 = vsub.f32 1.0, %v2477
  %v2479 = vmul.f32 %v2476, %v2478
  %v2480 = vadd.f32 %v2476, %v2479
  %vm2481 = vweird.f32 %v2475
  %vm2482 = vweird.f32 %v2476
  %vm2483 = vmor %vm2481, %vm2482
  %v2484 = vsel %vm2483, %v2476, %v2480
  %v2485 = vand.u32 2147483647, %v2475
  %vm2486 = vcmp.eq.f32.partialorder %v2485, 8.507059e+37
  %v2487 = vand.u32 %v2475, 2147483648
  %v2488 = vor.u32 1.1754944e-38, %v2487
  %v2489 = vsel %vm2486, %v2488, %v2484
  %v2490 = vmul.f32 1.0, %v2489
  %v2492 = vrot.slane %v2471, 2
  %v2494 = vxor.u32 %v2492, 2147483648
  %v2495 = vmul.f32 %v2494, 1.442695
  %v2496 = vpow.pop %v2495
  %v2497 = vadd.f32 %v2496, 1.0
  %v2498 = vrcp.pop %v2497
  %v2499 = vmul.f32 %v2497, %v2498
  %v2500 = vsub.f32 1.0, %v2499
  %v2501 = vmul.f32 %v2498, %v2500
  %v2502 = vadd.f32 %v2498, %v2501
  %vm2503 = vweird.f32 %v2497
  %vm2504 = vweird.f32 %v2498
  %vm2505 = vmor %vm2503, %vm2504
  %v2506 = vsel %vm2505, %v2498, %v2502
  %v2507 = vand.u32 2147483647, %v2497
  %vm2508 = vcmp.eq.f32.partialorder %v2507, 8.507059e+37
  %v2509 = vand.u32 %v2497, 2147483648
  %v2510 = vor.u32 1.1754944e-38, %v2509
  %v2511 = vsel %vm2508, %v2510, %v2506
  %v2512 = vmul.f32 1.0, %v2511
  %v2513 = vrot.slane %v2471, 4
  %v2515 = vtanh.pop %v2513
  %v2516 = vrot.slane %v2471, 6
  %v2518 = vxor.u32 %v2516, 2147483648
  %v2519 = vmul.f32 %v2518, 1.442695
  %v2520 = vpow.pop %v2519
  %v2521 = vadd.f32 %v2520, 1.0
  %v2522 = vrcp.pop %v2521
  %v2523 = vmul.f32 %v2521, %v2522
  %v2524 = vsub.f32 1.0, %v2523
  %v2525 = vmul.f32 %v2522, %v2524
  %v2526 = vadd.f32 %v2522, %v2525
  %vm2527 = vweird.f32 %v2521
  %vm2528 = vweird.f32 %v2522
  %vm2529 = vmor %vm2527, %vm2528
  %v2530 = vsel %vm2529, %v2522, %v2526
  %v2531 = vand.u32 2147483647, %v2521
  %vm2532 = vcmp.eq.f32.partialorder %v2531, 8.507059e+37
  %v2533 = vand.u32 %v2521, 2147483648
  %v2534 = vor.u32 1.1754944e-38, %v2533
  %v2535 = vsel %vm2532, %v2534, %v2530
  %v2536 = vmul.f32 1.0, %v2535
  %v2537 = vmul.f32 %v2512, %v2329
  %v2538 = vmul.f32 %v2490, %v2515
  %v2539 = vadd.f32 %v2537, %v2538
  %v2540 = vtanh.pop %v2539
  %v2541 = vmul.f32 %v2536, %v2540
  %v2542 = vpack.c.bf16 %v2541, %v2541
  %v2543 = vpack.c.bf16 %v2402, %v2402
  %v2545 = vsel %vm436, %v2543, 0
  %2547 = vmatpush.bf16.msra.mxu0 %v426
  %2548 = vmatpush.bf16.msra.mxu0 %v425
  %2549 = vmatpush.bf16.msra.mxu0 %v424
  %2550 = vmatpush.bf16.msra.mxu0 %v423
  %2551 = vmatpush.bf16.msra.mxu0 %v422
  %2552 = vmatpush.bf16.msra.mxu0 %v421
  %2553 = vmatpush.bf16.msra.mxu0 %v420
  %2554 = vmatpush.bf16.msra.mxu0 %v419
  %2555 = vmatmul.bf16.gmra.mxu0 %v2542
  %v2556 = vpop.f32.mrf.mxu0
  %v2557 = vadd.f32 %v78, %v2556
  %v2558 = vpop.f32.mrf.mxu0
  %2559 = vdwg.mxu0
  %2560 = vmatpush.bf16.msra.mxu0 0
  %2561 = vmatpush.bf16.msra.mxu0 0
  %2562 = vmatpush.bf16.msra.mxu0 0
  %2563 = vmatpush.bf16.msra.mxu0 0
  %2564 = vmatpush.bf16.msra.mxu0 0
  %2565 = vmatpush.bf16.msra.mxu0 0
  %2566 = vmatpush.bf16.msra.mxu0 0
  %2567 = vmatpush.bf16.msra.mxu0 %v441
  %2568 = vmatmul.bf16.gmra.mxu0 %v2545
  %v2569 = vpop.f32.mrf.mxu0
  %v2570 = vadd.f32 %v2557, %v2569
  %v2571 = vpop.f32.mrf.mxu0
  %2572 = vdwg.mxu0
  %v2573 = vxor.u32 %v2570, 2147483648
  %v2574 = vmul.f32 %v2573, 1.442695
  %v2575 = vpow.pop %v2574
  %v2576 = vadd.f32 %v2575, 1.0
  %v2577 = vrcp.pop %v2576
  %v2578 = vmul.f32 %v2576, %v2577
  %v2579 = vsub.f32 1.0, %v2578
  %v2580 = vmul.f32 %v2577, %v2579
  %v2581 = vadd.f32 %v2577, %v2580
  %vm2582 = vweird.f32 %v2576
  %vm2583 = vweird.f32 %v2577
  %vm2584 = vmor %vm2582, %vm2583
  %v2585 = vsel %vm2584, %v2577, %v2581
  %v2586 = vand.u32 2147483647, %v2576
  %vm2587 = vcmp.eq.f32.partialorder %v2586, 8.507059e+37
  %v2588 = vand.u32 %v2576, 2147483648
  %v2589 = vor.u32 1.1754944e-38, %v2588
  %v2590 = vsel %vm2587, %v2589, %v2585
  %v2591 = vmul.f32 1.0, %v2590
  %v2592 = vtanh.pop %v2570
  %v2593 = vmul.f32 %v2591, %v2393
  %2595 = vrot.lane.b32.xlu0 %v2592, 120
  %v2596 = vpop.permute.xlu0 %2595
  %v2598 = vmul.f32 %v2591, %v2596
  %2600 = vrot.lane.b32.xlu0 %v2598, 4
  %v2601 = vpop.permute.xlu0 %2600
  %v2603 = vadd.f32 %v2593, %v2601
  %v2604 = vtanh.pop %v2603
  %2606 = vrot.lane.b32.xlu0 %v2604, 8
  %v2607 = vpop.permute.xlu0 %2606
  %v2609 = vmul.f32 %v2591, %v2607
  %2611 = vrot.lane.b32.xlu0 %v2609, 116
  %v2612 = vpop.permute.xlu0 %2611
  %s2614 = scalar_lea.vmem %s4, 20
  %2615 = vst.msk [vmem:[%s2614] sm:$0x3] %vm514, %v2612
  %s2616 = scalar_lea.vmem %s0, 88
  %v2617 = vld [vmem:[%s2616] sm:$0xff]
  %2618 = vmatpush.bf16.msra.mxu0 %v210
  %2619 = vmatpush.bf16.msra.mxu0 %v206
  %2620 = vmatpush.bf16.msra.mxu0 %v202
  %2621 = vmatpush.bf16.msra.mxu0 %v198
  %2622 = vmatpush.bf16.msra.mxu0 %v194
  %2623 = vmatpush.bf16.msra.mxu0 %v190
  %2624 = vmatpush.bf16.msra.mxu0 %v186
  %2625 = vmatpush.bf16.msra.mxu0 %v182
  %2626 = vmatmul.bf16.gmra.mxu0 %v2542
  %v2627 = vpop.f32.mrf.mxu0
  %v2628 = vadd.f32 0.0, %v2627
  %v2629 = vpop.f32.mrf.mxu0
  %2630 = vdwg.mxu0
  %2631 = vmatpush.bf16.msra.mxu0 %v211
  %2632 = vmatpush.bf16.msra.mxu0 %v207
  %2633 = vmatpush.bf16.msra.mxu0 %v203
  %2634 = vmatpush.bf16.msra.mxu0 %v199
  %2635 = vmatpush.bf16.msra.mxu0 %v195
  %2636 = vmatpush.bf16.msra.mxu0 %v191
  %2637 = vmatpush.bf16.msra.mxu0 %v187
  %2638 = vmatpush.bf16.msra.mxu0 %v183
  %2639 = vmatmul.bf16.gmra.mxu0 %v2542
  %v2640 = vpop.f32.mrf.mxu0
  %v2641 = vadd.f32 0.0, %v2640
  %v2642 = vpop.f32.mrf.mxu0
  %2643 = vdwg.mxu0
  %2644 = vmatpush.bf16.msra.mxu0 %v212
  %2645 = vmatpush.bf16.msra.mxu0 %v208
  %2646 = vmatpush.bf16.msra.mxu0 %v204
  %2647 = vmatpush.bf16.msra.mxu0 %v200
  %2648 = vmatpush.bf16.msra.mxu0 %v196
  %2649 = vmatpush.bf16.msra.mxu0 %v192
  %2650 = vmatpush.bf16.msra.mxu0 %v188
  %2651 = vmatpush.bf16.msra.mxu0 %v184
  %2652 = vmatmul.bf16.gmra.mxu0 %v2542
  %v2653 = vpop.f32.mrf.mxu0
  %v2654 = vadd.f32 0.0, %v2653
  %v2655 = vpop.f32.mrf.mxu0
  %2656 = vdwg.mxu0
  %2657 = vmatpush.bf16.msra.mxu0 %v213
  %2658 = vmatpush.bf16.msra.mxu0 %v209
  %2659 = vmatpush.bf16.msra.mxu0 %v205
  %2660 = vmatpush.bf16.msra.mxu0 %v201
  %2661 = vmatpush.bf16.msra.mxu0 %v197
  %2662 = vmatpush.bf16.msra.mxu0 %v193
  %2663 = vmatpush.bf16.msra.mxu0 %v189
  %2664 = vmatpush.bf16.msra.mxu0 %v185
  %2665 = vmatmul.bf16.gmra.mxu0 %v2542
  %v2666 = vpop.f32.mrf.mxu0
  %v2667 = vadd.f32 0.0, %v2666
  %v2668 = vpop.f32.mrf.mxu0
  %2669 = vdwg.mxu0
  %v2674 = vrot.slane %v2641, 6
  %v2675 = vrot.slane %v2654, 4
  %v2676 = vrot.slane %v2667, 2
  %v2677 = vsel %vm305, %v2628, %v2674
  %v2678 = vsel %vm307, %v2675, %v2676
  %v2679 = vsel %vm309, %v2677, %v2678
  %v2681 = vadd.f32 %v2617, %v2679
  %v2682 = vxor.u32 %v2681, 2147483648
  %v2683 = vmul.f32 %v2682, 1.442695
  %v2684 = vpow.pop %v2683
  %v2685 = vadd.f32 %v2684, 1.0
  %v2686 = vrcp.pop %v2685
  %v2687 = vmul.f32 %v2685, %v2686
  %v2688 = vsub.f32 1.0, %v2687
  %v2689 = vmul.f32 %v2686, %v2688
  %v2690 = vadd.f32 %v2686, %v2689
  %vm2691 = vweird.f32 %v2685
  %vm2692 = vweird.f32 %v2686
  %vm2693 = vmor %vm2691, %vm2692
  %v2694 = vsel %vm2693, %v2686, %v2690
  %v2695 = vand.u32 2147483647, %v2685
  %vm2696 = vcmp.eq.f32.partialorder %v2695, 8.507059e+37
  %v2697 = vand.u32 %v2685, 2147483648
  %v2698 = vor.u32 1.1754944e-38, %v2697
  %v2699 = vsel %vm2696, %v2698, %v2694
  %v2700 = vmul.f32 1.0, %v2699
  %v2702 = vrot.slane %v2681, 2
  %v2704 = vxor.u32 %v2702, 2147483648
  %v2705 = vmul.f32 %v2704, 1.442695
  %v2706 = vpow.pop %v2705
  %v2707 = vadd.f32 %v2706, 1.0
  %v2708 = vrcp.pop %v2707
  %v2709 = vmul.f32 %v2707, %v2708
  %v2710 = vsub.f32 1.0, %v2709
  %v2711 = vmul.f32 %v2708, %v2710
  %v2712 = vadd.f32 %v2708, %v2711
  %vm2713 = vweird.f32 %v2707
  %vm2714 = vweird.f32 %v2708
  %vm2715 = vmor %vm2713, %vm2714
  %v2716 = vsel %vm2715, %v2708, %v2712
  %v2717 = vand.u32 2147483647, %v2707
  %vm2718 = vcmp.eq.f32.partialorder %v2717, 8.507059e+37
  %v2719 = vand.u32 %v2707, 2147483648
  %v2720 = vor.u32 1.1754944e-38, %v2719
  %v2721 = vsel %vm2718, %v2720, %v2716
  %v2722 = vmul.f32 1.0, %v2721
  %v2723 = vrot.slane %v2681, 4
  %v2725 = vtanh.pop %v2723
  %v2726 = vrot.slane %v2681, 6
  %v2728 = vxor.u32 %v2726, 2147483648
  %v2729 = vmul.f32 %v2728, 1.442695
  %v2730 = vpow.pop %v2729
  %v2731 = vadd.f32 %v2730, 1.0
  %v2732 = vrcp.pop %v2731
  %v2733 = vmul.f32 %v2731, %v2732
  %v2734 = vsub.f32 1.0, %v2733
  %v2735 = vmul.f32 %v2732, %v2734
  %v2736 = vadd.f32 %v2732, %v2735
  %vm2737 = vweird.f32 %v2731
  %vm2738 = vweird.f32 %v2732
  %vm2739 = vmor %vm2737, %vm2738
  %v2740 = vsel %vm2739, %v2732, %v2736
  %v2741 = vand.u32 2147483647, %v2731
  %vm2742 = vcmp.eq.f32.partialorder %v2741, 8.507059e+37
  %v2743 = vand.u32 %v2731, 2147483648
  %v2744 = vor.u32 1.1754944e-38, %v2743
  %v2745 = vsel %vm2742, %v2744, %v2740
  %v2746 = vmul.f32 1.0, %v2745
  %v2747 = vmul.f32 %v2722, %v2539
  %v2748 = vmul.f32 %v2700, %v2725
  %v2749 = vadd.f32 %v2747, %v2748
  %v2750 = vtanh.pop %v2749
  %v2751 = vmul.f32 %v2746, %v2750
  %v2752 = vpack.c.bf16 %v2751, %v2751
  %v2753 = vpack.c.bf16 %v2612, %v2612
  %v2755 = vsel %vm436, %v2753, 0
  %2757 = vmatpush.bf16.msra.mxu0 %v426
  %2758 = vmatpush.bf16.msra.mxu0 %v425
  %2759 = vmatpush.bf16.msra.mxu0 %v424
  %2760 = vmatpush.bf16.msra.mxu0 %v423
  %2761 = vmatpush.bf16.msra.mxu0 %v422
  %2762 = vmatpush.bf16.msra.mxu0 %v421
  %2763 = vmatpush.bf16.msra.mxu0 %v420
  %2764 = vmatpush.bf16.msra.mxu0 %v419
  %2765 = vmatmul.bf16.gmra.mxu0 %v2752
  %v2766 = vpop.f32.mrf.mxu0
  %v2767 = vadd.f32 %v78, %v2766
  %v2768 = vpop.f32.mrf.mxu0
  %2769 = vdwg.mxu0
  %2770 = vmatpush.bf16.msra.mxu0 0
  %2771 = vmatpush.bf16.msra.mxu0 0
  %2772 = vmatpush.bf16.msra.mxu0 0
  %2773 = vmatpush.bf16.msra.mxu0 0
  %2774 = vmatpush.bf16.msra.mxu0 0
  %2775 = vmatpush.bf16.msra.mxu0 0
  %2776 = vmatpush.bf16.msra.mxu0 0
  %2777 = vmatpush.bf16.msra.mxu0 %v441
  %2778 = vmatmul.bf16.gmra.mxu0 %v2755
  %v2779 = vpop.f32.mrf.mxu0
  %v2780 = vadd.f32 %v2767, %v2779
  %v2781 = vpop.f32.mrf.mxu0
  %2782 = vdwg.mxu0
  %v2783 = vxor.u32 %v2780, 2147483648
  %v2784 = vmul.f32 %v2783, 1.442695
  %v2785 = vpow.pop %v2784
  %v2786 = vadd.f32 %v2785, 1.0
  %v2787 = vrcp.pop %v2786
  %v2788 = vmul.f32 %v2786, %v2787
  %v2789 = vsub.f32 1.0, %v2788
  %v2790 = vmul.f32 %v2787, %v2789
  %v2791 = vadd.f32 %v2787, %v2790
  %vm2792 = vweird.f32 %v2786
  %vm2793 = vweird.f32 %v2787
  %vm2794 = vmor %vm2792, %vm2793
  %v2795 = vsel %vm2794, %v2787, %v2791
  %v2796 = vand.u32 2147483647, %v2786
  %vm2797 = vcmp.eq.f32.partialorder %v2796, 8.507059e+37
  %v2798 = vand.u32 %v2786, 2147483648
  %v2799 = vor.u32 1.1754944e-38, %v2798
  %v2800 = vsel %vm2797, %v2799, %v2795
  %v2801 = vmul.f32 1.0, %v2800
  %v2802 = vtanh.pop %v2780
  %v2803 = vmul.f32 %v2801, %v2603
  %2805 = vrot.lane.b32.xlu0 %v2802, 120
  %v2806 = vpop.permute.xlu0 %2805
  %v2808 = vmul.f32 %v2801, %v2806
  %2810 = vrot.lane.b32.xlu0 %v2808, 4
  %v2811 = vpop.permute.xlu0 %2810
  %v2813 = vadd.f32 %v2803, %v2811
  %v2814 = vtanh.pop %v2813
  %2816 = vrot.lane.b32.xlu0 %v2814, 8
  %v2817 = vpop.permute.xlu0 %2816
  %v2819 = vmul.f32 %v2801, %v2817
  %2821 = vrot.lane.b32.xlu0 %v2819, 116
  %v2822 = vpop.permute.xlu0 %2821
  %s2824 = scalar_lea.vmem %s4, 22
  %2825 = vst.msk [vmem:[%s2824] sm:$0x3] %vm514, %v2822
  %2826 = vst [vmem:[#allocation2] sm:$0x3] %v2751
  %2827 = vst [vmem:[#allocation3] sm:$0x3] %v2749
  %2828 = vst.msk [vmem:[#allocation4] sm:$0x3] %vm514, %v2822
  %2830 = vrot.lane.b32.xlu0 %v2813, 124
  %v2831 = vpop.permute.xlu0 %2830
  %2833 = vst.msk [vmem:[#allocation5] sm:$0x3] %vm514, %v2831
  // Predicated region
  $region22: #{vit_masked_encoder_with_meta_head_forward.3} parent=0 // pred_check
    _
  $region23: #{vit_masked_encoder_with_meta_head_forward.3} parent=0 // pred_check_branch
    %2835 = sbr.rel (0) target = $region25
  $region24: #{vit_masked_encoder_with_meta_head_forward.3} parent=0 // pred_region
    _
  $region25: #{vit_masked_encoder_with_meta_head_forward.3} parent=0 // pred_fallthru
    _
  // Predicated region
  $region26: #{vit_masked_encoder_with_meta_head_forward.3} parent=0 // pred_check
    _
  $region27: #{vit_masked_encoder_with_meta_head_forward.3} parent=0 // pred_check_branch
    %2837 = sbr.rel (0) target = $region29
  $region28: #{vit_masked_encoder_with_meta_head_forward.3} parent=0 // pred_region
    _
  $region29: #{vit_masked_encoder_with_meta_head_forward.3} parent=0 // pred_fallthru
    _

</llo_original>
